<compile_context>
chip_gen: v6e
topology: v6e:2x2x1
jax: 0.10.0
libtpu: 0.0.40
codegen_flags: <defaults>
</compile_context>

<pallas_src>
import functools

import numpy as np
import jax
import jax.numpy as jnp
from jax.experimental import pallas as pl
from jax.experimental.pallas import tpu as pltpu


# ---------------------------------------------------------------------------
# Parameters (deterministic synthetic init, PyTorch shapes / conventions)
# Linear weights are stored as (in, out) == PyTorch W.T.
# ---------------------------------------------------------------------------
def init_params(key, T, D, h1, h2, h3, cin=1, c1=16, c2=8, k=3):
    def uni(key, shape, fan_in):
        bound = 1.0 / jnp.sqrt(jnp.float32(fan_in))
        return jax.random.uniform(key, shape, jnp.float32, -bound, bound)

    keys = jax.random.split(key, 20)
    flat = c2 * T * D
    p = {}
    # encoder convs: weight (Cout, Cin, 3, 3)
    p["enc_conv1_w"] = uni(keys[0], (c1, cin, k, k), cin * k * k)
    p["enc_conv1_b"] = uni(keys[1], (c1,), cin * k * k)
    p["enc_conv2_w"] = uni(keys[2], (c2, c1, k, k), c1 * k * k)
    p["enc_conv2_b"] = uni(keys[3], (c2,), c1 * k * k)
    # encoder linears
    p["enc_fc1_w"] = uni(keys[4], (flat, h1), flat)
    p["enc_fc1_b"] = uni(keys[5], (h1,), flat)
    p["enc_fc2_w"] = uni(keys[6], (h1, h2), h1)
    p["enc_fc2_b"] = uni(keys[7], (h2,), h1)
    p["enc_fc3_w"] = uni(keys[8], (h2, h3), h2)
    p["enc_fc3_b"] = uni(keys[9], (h3,), h2)
    # decoder linears
    p["dec_fc1_w"] = uni(keys[10], (h3, h2), h3)
    p["dec_fc1_b"] = uni(keys[11], (h2,), h3)
    p["dec_fc2_w"] = uni(keys[12], (h2, h1), h2)
    p["dec_fc2_b"] = uni(keys[13], (h1,), h2)
    p["dec_fc3_w"] = uni(keys[14], (h1, flat), h1)
    p["dec_fc3_b"] = uni(keys[15], (flat,), h1)
    # decoder transposed convs: weight (Cin, Cout, 3, 3)
    p["dec_convt1_w"] = uni(keys[16], (c2, c1, k, k), c2 * k * k)
    p["dec_convt1_b"] = uni(keys[17], (c1,), c2 * k * k)
    p["dec_convt2_w"] = uni(keys[18], (c1, cin, k, k), c1 * k * k)
    p["dec_convt2_b"] = uni(keys[19], (cin,), c1 * k * k)
    return p


# ---------------------------------------------------------------------------
# One-time weight preprocessing (all layout permutations folded in here)
# ---------------------------------------------------------------------------
def preprocess_params(params, B, T, D):
    """Build kernel-ready operands.  Runs once, in plain numpy, at init."""
    p = {k: np.asarray(v, np.float32) for k, v in params.items()}

    def convt_to_conv(w_iokk):
        # ConvTranspose2d(k=3, stride=1, pad=1) == Conv2d with the spatially
        # flipped, channel-swapped kernel.  Precomputed here (not per forward).
        return np.transpose(w_iokk[:, :, ::-1, ::-1], (1, 0, 2, 3)).copy()

    def expand_conv(w_oikk):
        # (Cout, Cin, 3, 3) -> (3, D*Cin, D*Cout): per-kh block-Toeplitz over
        # the D (width) direction.  Zero padding in D is encoded by the
        # missing off-range blocks.
        cout, cin, kh_n, kw_n = w_oikk.shape
        wk = np.zeros((kh_n, D * cin, D * cout), np.float32)
        for kh in range(kh_n):
            for kw in range(kw_n):
                blk = w_oikk[:, :, kh, kw].T  # (Cin, Cout)
                for d in range(D):
                    dp = d + kw - 1
                    if 0 <= dp < D:
                        wk[kh, dp * cin:(dp + 1) * cin, d * cout:(d + 1) * cout] = blk
        return wk

    def conv_bias_row(b):
        # (Cout,) -> (1, D*Cout) with entry [d*Cout + co] = b[co]
        return np.tile(b, D).reshape(1, -1)

    BT = B * T
    # Row-shift matrices for the kh (height) direction; zero rows implement
    # the T-padding and keep batches separated.  kh==1 is the identity and is
    # skipped inside the kernel, but kept here so indices stay 0..2.
    rshift = np.zeros((3, BT, BT), np.float32)
    # Row-select matrices used to fold Flatten/Unflatten into matmuls.
    rsel = np.zeros((T, B, BT), np.float32)
    for b in range(B):
        for t in range(T):
            rsel[t, b, b * T + t] = 1.0
            for kh in range(3):
                tp = t + kh - 1
                if 0 <= tp < T:
                    rshift[kh, b * T + t, b * T + tp] = 1.0
    rselt = np.transpose(rsel, (0, 2, 1)).copy()  # (T, BT, B)

    C2 = p["enc_conv2_w"].shape[0]
    H1 = p["enc_fc1_w"].shape[1]

    # encoder convs
    wk1, b1r = expand_conv(p["enc_conv1_w"]), conv_bias_row(p["enc_conv1_b"])
    wk2, b2r = expand_conv(p["enc_conv2_w"]), conv_bias_row(p["enc_conv2_b"])

    # enc_fc1: fold the PyTorch (c, t, d) flatten order into the weight,
    # re-indexed to the (row = (b,t), col = d*C2 + c) conv layout.
    w1 = p["enc_fc1_w"].reshape(C2, T, D, H1)
    w1p = np.transpose(w1, (1, 2, 0, 3)).reshape(T, D * C2, H1)

    # dec_fc3 + Unflatten: permute output columns to per-t (d, c) blocks.
    w6 = p["dec_fc3_w"].reshape(H1, C2, T, D)
    w6p = np.transpose(w6, (2, 0, 3, 1)).reshape(T, H1, D * C2)
    b6p = np.transpose(p["dec_fc3_b"].reshape(C2, T, D), (1, 2, 0)).reshape(T, 1, D * C2)

    # decoder (transposed) convs, converted to plain convs at init
    wkt1 = expand_conv(convt_to_conv(p["dec_convt1_w"]))
    bt1r = conv_bias_row(p["dec_convt1_b"])
    wkt2 = expand_conv(convt_to_conv(p["dec_convt2_w"]))
    bt2r = conv_bias_row(p["dec_convt2_b"])

    def b16(a):
        return jnp.asarray(a, jnp.bfloat16)

    def f32(a):
        a = np.asarray(a)
        if a.ndim == 1:
            a = a.reshape(1, -1)
        return jnp.asarray(a, jnp.float32)

    return (
        b16(rshift), b16(rsel), b16(rselt),
        b16(wk1), f32(b1r), b16(wk2), f32(b2r),
        b16(w1p), f32(p["enc_fc1_b"]),
        b16(p["enc_fc2_w"]), f32(p["enc_fc2_b"]),
        b16(p["enc_fc3_w"]), f32(p["enc_fc3_b"]),
        b16(p["dec_fc1_w"]), f32(p["dec_fc1_b"]),
        b16(p["dec_fc2_w"]), f32(p["dec_fc2_b"]),
        b16(w6p), jnp.asarray(b6p, jnp.float32),
        b16(wkt1), f32(bt1r), b16(wkt2), f32(bt2r),
    )


# ---------------------------------------------------------------------------
# The single fused Pallas kernel: whole forward pass, VMEM-resident
# ---------------------------------------------------------------------------
def _fused_ae_kernel(
    x_ref, rshift_ref, rsel_ref, rselt_ref,
    wk1_ref, b1_ref, wk2_ref, b2_ref,
    w1p_ref, bfc1_ref, wfc2_ref, bfc2_ref, wfc3_ref, bfc3_ref,
    wdc1_ref, bdc1_ref, wdc2_ref, bdc2_ref,
    w6p_ref, b6p_ref, wkt1_ref, bt1_ref, wkt2_ref, bt2_ref,
    o_ref, *, T,
):
    f32 = jnp.float32
    bf16 = jnp.bfloat16

    def mm(a, b):
        return jnp.dot(a, b, preferred_element_type=f32)

    def relu(v):
        return jnp.maximum(v, 0.0)

    def conv(x_bf, wk_ref, brow_ref):
        # x_bf: (B*T, D*Cin) bf16 -> pre-activation (B*T, D*Cout) f32.
        acc = brow_ref[...]  # (1, D*Cout) f32, broadcasts over rows
        for kh in range(3):
            if kh == 1:
                xs = x_bf                                   # identity shift
            else:
                # 0/1 row-shift matmul: exact in bf16, encodes T padding and
                # batch separation in one shot.
                xs = mm(rshift_ref[kh], x_bf).astype(bf16)
            acc = acc + mm(xs, wk_ref[kh])
        return acc

    x = x_ref[...]  # (B*T, D) bf16

    # ---------------- encoder convs ----------------
    a = relu(conv(x, wk1_ref, b1_ref)).astype(bf16)      # (B*T, D*16)
    a = relu(conv(a, wk2_ref, b2_ref)).astype(bf16)      # (B*T, D*8)

    # ---------------- enc_fc1 (Flatten folded into w1p / rsel) --------------
    h = bfc1_ref[...]                                    # (1, h1) f32
    for t in range(T):
        rows_t = mm(rsel_ref[t], a).astype(bf16)         # (B, D*8), exact pick
        h = h + mm(rows_t, w1p_ref[t])                   # (B, h1)
    h = relu(h).astype(bf16)

    # ---------------- small FC stack ----------------
    h = relu(mm(h, wfc2_ref[...]) + bfc2_ref[...]).astype(bf16)   # (B, h2)
    h = relu(mm(h, wfc3_ref[...]) + bfc3_ref[...]).astype(bf16)   # (B, h3)
    h = relu(mm(h, wdc1_ref[...]) + bdc1_ref[...]).astype(bf16)   # (B, h2)
    h = relu(mm(h, wdc2_ref[...]) + bdc2_ref[...]).astype(bf16)   # (B, h1)

    # ---------------- dec_fc3 + Unflatten folded into w6p / rselT -----------
    bt = x_ref.shape[0]
    dc2 = w6p_ref.shape[2]
    xd = jnp.zeros((bt, dc2), f32)
    for t in range(T):
        z = relu(mm(h, w6p_ref[t]) + b6p_ref[t]).astype(bf16)     # (B, D*8)
        xd = xd + mm(rselt_ref[t], z)                             # rows (b*T+t)
    xd = xd.astype(bf16)

    # ---------------- decoder (transposed) convs ----------------
    a = relu(conv(xd, wkt1_ref, bt1_ref)).astype(bf16)            # (B*T, D*16)
    y = conv(a, wkt2_ref, bt2_ref)                                # (B*T, D)
    y = 1.0 / (1.0 + jnp.exp(-y))                                 # sigmoid, f32
    o_ref[...] = y.astype(o_ref.dtype)


def conv_autoencoder_forward(x, kernel_operands, *, B, T, D):
    """x: (B, T, D) float32 -> (B, T, D) float32, one fused Pallas kernel."""
    x0 = x.reshape(B * T, D).astype(jnp.bfloat16)
    operands = (x0,) + tuple(kernel_operands)
    out = pl.pallas_call(
        functools.partial(_fused_ae_kernel, T=T),
        out_shape=jax.ShapeDtypeStruct((B * T, D), jnp.float32),
        in_specs=[pl.BlockSpec(memory_space=pltpu.MemorySpace.VMEM)] * len(operands),
        out_specs=pl.BlockSpec(memory_space=pltpu.MemorySpace.VMEM),
        compiler_params=pltpu.CompilerParams(vmem_limit_bytes=32 * 1024 * 1024),
    )(*operands)
    return out.reshape(B, T, D)


# ---------------------------------------------------------------------------
# Pure-JAX reference (mirrors the PyTorch module directly) for validation
# ---------------------------------------------------------------------------
def _ref_conv2d(x, w, b):
    # x: (B, Cin, H, W), w: (Cout, Cin, 3, 3), stride 1, pad 1.
    B, Cin, H, W = x.shape
    xp = jnp.pad(x, ((0, 0), (0, 0), (1, 1), (1, 1)))
    out = jnp.zeros((B, w.shape[0], H, W), jnp.float32)
    for kh in range(3):
        for kw in range(3):
            out = out + jnp.einsum("bchw,oc->bohw",
                                   xp[:, :, kh:kh + H, kw:kw + W], w[:, :, kh, kw])
    return out + b[None, :, None, None]


def reference_forward(x, params, T, D):
    B = x.shape[0]
    c2 = params["enc_conv2_w"].shape[0]
    h = x[:, None, :, :]
    h = jax.nn.relu(_ref_conv2d(h, params["enc_conv1_w"], params["enc_conv1_b"]))
    h = jax.nn.relu(_ref_conv2d(h, params["enc_conv2_w"], params["enc_conv2_b"]))
    h = h.reshape(B, -1)
    h = jax.nn.relu(h @ params["enc_fc1_w"] + params["enc_fc1_b"])
    h = jax.nn.relu(h @ params["enc_fc2_w"] + params["enc_fc2_b"])
    h = jax.nn.relu(h @ params["enc_fc3_w"] + params["enc_fc3_b"])
    h = jax.nn.relu(h @ params["dec_fc1_w"] + params["dec_fc1_b"])
    h = jax.nn.relu(h @ params["dec_fc2_w"] + params["dec_fc2_b"])
    h = jax.nn.relu(h @ params["dec_fc3_w"] + params["dec_fc3_b"])
    h = h.reshape(B, c2, T, D)
    wt1 = jnp.transpose(params["dec_convt1_w"][:, :, ::-1, ::-1], (1, 0, 2, 3))
    h = jax.nn.relu(_ref_conv2d(h, wt1, params["dec_convt1_b"]))
    wt2 = jnp.transpose(params["dec_convt2_w"][:, :, ::-1, ::-1], (1, 0, 2, 3))
    h = jax.nn.sigmoid(_ref_conv2d(h, wt2, params["dec_convt2_b"]))
    return h[:, 0, :, :]


if __name__ == "__main__":
    # Small, module-consistent shapes
    B, T, D = 2, 8, 16
    hidden_dim1, hidden_dim2, hidden_dim3 = 32, 16, 8

    key = jax.random.PRNGKey(0)
    kx, kp = jax.random.split(key)
    x = jax.random.normal(kx, (B, T, D), dtype=jnp.float32)
    params = init_params(kp, T, D, hidden_dim1, hidden_dim2, hidden_dim3)
    kops = preprocess_params(params, B=B, T=T, D=D)

    fwd = jax.jit(functools.partial(conv_autoencoder_forward, B=B, T=T, D=D))
    out = jax.block_until_ready(fwd(x, kops))

    ref = jax.block_until_ready(reference_forward(x, params, T, D))

    assert out.shape == (B, T, D), out.shape
    assert out.dtype == jnp.float32
    assert bool(jnp.all(jnp.isfinite(out)))
    assert bool(jnp.all((out >= 0.0) & (out <= 1.0)))
    # bf16-operand / f32-accumulate kernel vs f32 reference
    max_err = float(jnp.max(jnp.abs(out - ref)))
    assert max_err < 6e-2, f"mismatch vs reference: max abs err {max_err}"
    print("KERNEL_OK")
</pallas_src>

<mosaic_0001>
module attributes {stable_mosaic.version = 11 : i64} {
  func.func @_fused_ae_kernel(%arg0: memref<16x16xbf16, #tpu.memory_space<vmem>>, %arg1: memref<3x16x16xbf16, #tpu.memory_space<vmem>>, %arg2: memref<8x2x16xbf16, #tpu.memory_space<vmem>>, %arg3: memref<8x16x2xbf16, #tpu.memory_space<vmem>>, %arg4: memref<3x16x256xbf16, #tpu.memory_space<vmem>>, %arg5: memref<1x256xf32, #tpu.memory_space<vmem>>, %arg6: memref<3x256x128xbf16, #tpu.memory_space<vmem>>, %arg7: memref<1x128xf32, #tpu.memory_space<vmem>>, %arg8: memref<8x128x32xbf16, #tpu.memory_space<vmem>>, %arg9: memref<1x32xf32, #tpu.memory_space<vmem>>, %arg10: memref<32x16xbf16, #tpu.memory_space<vmem>>, %arg11: memref<1x16xf32, #tpu.memory_space<vmem>>, %arg12: memref<16x8xbf16, #tpu.memory_space<vmem>>, %arg13: memref<1x8xf32, #tpu.memory_space<vmem>>, %arg14: memref<8x16xbf16, #tpu.memory_space<vmem>>, %arg15: memref<1x16xf32, #tpu.memory_space<vmem>>, %arg16: memref<16x32xbf16, #tpu.memory_space<vmem>>, %arg17: memref<1x32xf32, #tpu.memory_space<vmem>>, %arg18: memref<8x32x128xbf16, #tpu.memory_space<vmem>>, %arg19: memref<8x1x128xf32, #tpu.memory_space<vmem>>, %arg20: memref<3x128x256xbf16, #tpu.memory_space<vmem>>, %arg21: memref<1x256xf32, #tpu.memory_space<vmem>>, %arg22: memref<3x256x16xbf16, #tpu.memory_space<vmem>>, %arg23: memref<1x16xf32, #tpu.memory_space<vmem>>, %arg24: memref<16x16xf32, #tpu.memory_space<vmem>>) attributes {dimension_semantics = [], scalar_prefetch = 0 : i64, scratch_operands = 0 : i64, tpu.core_type = #tpu.core_type<tc>} {
    %c0 = arith.constant 0 : index
    %c0_0 = arith.constant 0 : index
    %0 = vector.load %arg0[%c0, %c0_0] : memref<16x16xbf16, #tpu.memory_space<vmem>>, vector<16x16xbf16>
    %c0_1 = arith.constant 0 : index
    %c0_2 = arith.constant 0 : index
    %1 = vector.load %arg5[%c0_1, %c0_2] : memref<1x256xf32, #tpu.memory_space<vmem>>, vector<1x256xf32>
    %c0_3 = arith.constant 0 : index
    %c0_4 = arith.constant 0 : index
    %c0_5 = arith.constant 0 : index
    %2 = vector.load %arg1[%c0_3, %c0_4, %c0_5] : memref<3x16x16xbf16, #tpu.memory_space<vmem>>, vector<1x16x16xbf16>
    %3 = vector.shape_cast %2 : vector<1x16x16xbf16> to vector<16x16xbf16>
    %cst = arith.constant dense<0.000000e+00> : vector<16x16xf32>
    %4 = tpu.matmul %3, %0, %cst {dimension_numbers = #tpu.dot_dimension_numbers<[1], [0], [0], [1], [0, 0, 1, 1], [], []>} : vector<16x16xbf16>, vector<16x16xbf16>, vector<16x16xf32> -> vector<16x16xf32>
    %5 = arith.truncf %4 : vector<16x16xf32> to vector<16x16xbf16>
    %c0_6 = arith.constant 0 : index
    %c0_7 = arith.constant 0 : index
    %c0_8 = arith.constant 0 : index
    %6 = vector.load %arg4[%c0_6, %c0_7, %c0_8] : memref<3x16x256xbf16, #tpu.memory_space<vmem>>, vector<1x16x256xbf16>
    %7 = vector.shape_cast %6 : vector<1x16x256xbf16> to vector<16x256xbf16>
    %cst_9 = arith.constant dense<0.000000e+00> : vector<16x256xf32>
    %8 = tpu.matmul %5, %7, %cst_9 {dimension_numbers = #tpu.dot_dimension_numbers<[1], [0], [0], [1], [0, 0, 1, 1], [], []>} : vector<16x16xbf16>, vector<16x256xbf16>, vector<16x256xf32> -> vector<16x256xf32>
    %9 = vector.broadcast %1 : vector<1x256xf32> to vector<16x256xf32>
    %10 = arith.addf %9, %8 : vector<16x256xf32>
    %c1 = arith.constant 1 : index
    %c0_10 = arith.constant 0 : index
    %c0_11 = arith.constant 0 : index
    %11 = vector.load %arg4[%c1, %c0_10, %c0_11] : memref<3x16x256xbf16, #tpu.memory_space<vmem>>, vector<1x16x256xbf16>
    %12 = vector.shape_cast %11 : vector<1x16x256xbf16> to vector<16x256xbf16>
    %cst_12 = arith.constant dense<0.000000e+00> : vector<16x256xf32>
    %13 = tpu.matmul %0, %12, %cst_12 {dimension_numbers = #tpu.dot_dimension_numbers<[1], [0], [0], [1], [0, 0, 1, 1], [], []>} : vector<16x16xbf16>, vector<16x256xbf16>, vector<16x256xf32> -> vector<16x256xf32>
    %14 = arith.addf %10, %13 : vector<16x256xf32>
    %c2 = arith.constant 2 : index
    %c0_13 = arith.constant 0 : index
    %c0_14 = arith.constant 0 : index
    %15 = vector.load %arg1[%c2, %c0_13, %c0_14] : memref<3x16x16xbf16, #tpu.memory_space<vmem>>, vector<1x16x16xbf16>
    %16 = vector.shape_cast %15 : vector<1x16x16xbf16> to vector<16x16xbf16>
    %cst_15 = arith.constant dense<0.000000e+00> : vector<16x16xf32>
    %17 = tpu.matmul %16, %0, %cst_15 {dimension_numbers = #tpu.dot_dimension_numbers<[1], [0], [0], [1], [0, 0, 1, 1], [], []>} : vector<16x16xbf16>, vector<16x16xbf16>, vector<16x16xf32> -> vector<16x16xf32>
    %18 = arith.truncf %17 : vector<16x16xf32> to vector<16x16xbf16>
    %c2_16 = arith.constant 2 : index
    %c0_17 = arith.constant 0 : index
    %c0_18 = arith.constant 0 : index
    %19 = vector.load %arg4[%c2_16, %c0_17, %c0_18] : memref<3x16x256xbf16, #tpu.memory_space<vmem>>, vector<1x16x256xbf16>
    %20 = vector.shape_cast %19 : vector<1x16x256xbf16> to vector<16x256xbf16>
    %cst_19 = arith.constant dense<0.000000e+00> : vector<16x256xf32>
    %21 = tpu.matmul %18, %20, %cst_19 {dimension_numbers = #tpu.dot_dimension_numbers<[1], [0], [0], [1], [0, 0, 1, 1], [], []>} : vector<16x16xbf16>, vector<16x256xbf16>, vector<16x256xf32> -> vector<16x256xf32>
    %22 = arith.addf %14, %21 : vector<16x256xf32>
    %cst_20 = arith.constant 0.000000e+00 : f32
    %23 = vector.broadcast %cst_20 : f32 to vector<16x256xf32>
    %24 = arith.maximumf %22, %23 : vector<16x256xf32>
    %25 = arith.truncf %24 : vector<16x256xf32> to vector<16x256xbf16>
    %c0_21 = arith.constant 0 : index
    %c0_22 = arith.constant 0 : index
    %26 = vector.load %arg7[%c0_21, %c0_22] : memref<1x128xf32, #tpu.memory_space<vmem>>, vector<1x128xf32>
    %c0_23 = arith.constant 0 : index
    %c0_24 = arith.constant 0 : index
    %c0_25 = arith.constant 0 : index
    %27 = vector.load %arg1[%c0_23, %c0_24, %c0_25] : memref<3x16x16xbf16, #tpu.memory_space<vmem>>, vector<1x16x16xbf16>
    %28 = vector.shape_cast %27 : vector<1x16x16xbf16> to vector<16x16xbf16>
    %cst_26 = arith.constant dense<0.000000e+00> : vector<16x256xf32>
    %29 = tpu.matmul %28, %25, %cst_26 {dimension_numbers = #tpu.dot_dimension_numbers<[1], [0], [0], [1], [0, 0, 1, 1], [], []>} : vector<16x16xbf16>, vector<16x256xbf16>, vector<16x256xf32> -> vector<16x256xf32>
    %30 = arith.truncf %29 : vector<16x256xf32> to vector<16x256xbf16>
    %c0_27 = arith.constant 0 : index
    %c0_28 = arith.constant 0 : index
    %c0_29 = arith.constant 0 : index
    %31 = vector.load %arg6[%c0_27, %c0_28, %c0_29] : memref<3x256x128xbf16, #tpu.memory_space<vmem>>, vector<1x256x128xbf16>
    %32 = vector.shape_cast %31 : vector<1x256x128xbf16> to vector<256x128xbf16>
    %cst_30 = arith.constant dense<0.000000e+00> : vector<16x128xf32>
    %33 = tpu.matmul %30, %32, %cst_30 {dimension_numbers = #tpu.dot_dimension_numbers<[1], [0], [0], [1], [0, 0, 1, 1], [], []>} : vector<16x256xbf16>, vector<256x128xbf16>, vector<16x128xf32> -> vector<16x128xf32>
    %34 = vector.broadcast %26 : vector<1x128xf32> to vector<16x128xf32>
    %35 = arith.addf %34, %33 : vector<16x128xf32>
    %c1_31 = arith.constant 1 : index
    %c0_32 = arith.constant 0 : index
    %c0_33 = arith.constant 0 : index
    %36 = vector.load %arg6[%c1_31, %c0_32, %c0_33] : memref<3x256x128xbf16, #tpu.memory_space<vmem>>, vector<1x256x128xbf16>
    %37 = vector.shape_cast %36 : vector<1x256x128xbf16> to vector<256x128xbf16>
    %cst_34 = arith.constant dense<0.000000e+00> : vector<16x128xf32>
    %38 = tpu.matmul %25, %37, %cst_34 {dimension_numbers = #tpu.dot_dimension_numbers<[1], [0], [0], [1], [0, 0, 1, 1], [], []>} : vector<16x256xbf16>, vector<256x128xbf16>, vector<16x128xf32> -> vector<16x128xf32>
    %39 = arith.addf %35, %38 : vector<16x128xf32>
    %c2_35 = arith.constant 2 : index
    %c0_36 = arith.constant 0 : index
    %c0_37 = arith.constant 0 : index
    %40 = vector.load %arg1[%c2_35, %c0_36, %c0_37] : memref<3x16x16xbf16, #tpu.memory_space<vmem>>, vector<1x16x16xbf16>
    %41 = vector.shape_cast %40 : vector<1x16x16xbf16> to vector<16x16xbf16>
    %cst_38 = arith.constant dense<0.000000e+00> : vector<16x256xf32>
    %42 = tpu.matmul %41, %25, %cst_38 {dimension_numbers = #tpu.dot_dimension_numbers<[1], [0], [0], [1], [0, 0, 1, 1], [], []>} : vector<16x16xbf16>, vector<16x256xbf16>, vector<16x256xf32> -> vector<16x256xf32>
    %43 = arith.truncf %42 : vector<16x256xf32> to vector<16x256xbf16>
    %c2_39 = arith.constant 2 : index
    %c0_40 = arith.constant 0 : index
    %c0_41 = arith.constant 0 : index
    %44 = vector.load %arg6[%c2_39, %c0_40, %c0_41] : memref<3x256x128xbf16, #tpu.memory_space<vmem>>, vector<1x256x128xbf16>
    %45 = vector.shape_cast %44 : vector<1x256x128xbf16> to vector<256x128xbf16>
    %cst_42 = arith.constant dense<0.000000e+00> : vector<16x128xf32>
    %46 = tpu.matmul %43, %45, %cst_42 {dimension_numbers = #tpu.dot_dimension_numbers<[1], [0], [0], [1], [0, 0, 1, 1], [], []>} : vector<16x256xbf16>, vector<256x128xbf16>, vector<16x128xf32> -> vector<16x128xf32>
    %47 = arith.addf %39, %46 : vector<16x128xf32>
    %cst_43 = arith.constant 0.000000e+00 : f32
    %48 = vector.broadcast %cst_43 : f32 to vector<16x128xf32>
    %49 = arith.maximumf %47, %48 : vector<16x128xf32>
    %50 = arith.truncf %49 : vector<16x128xf32> to vector<16x128xbf16>
    %c0_44 = arith.constant 0 : index
    %c0_45 = arith.constant 0 : index
    %51 = vector.load %arg9[%c0_44, %c0_45] : memref<1x32xf32, #tpu.memory_space<vmem>>, vector<1x32xf32>
    %c0_46 = arith.constant 0 : index
    %c0_47 = arith.constant 0 : index
    %c0_48 = arith.constant 0 : index
    %52 = vector.load %arg2[%c0_46, %c0_47, %c0_48] : memref<8x2x16xbf16, #tpu.memory_space<vmem>>, vector<1x2x16xbf16>
    %53 = vector.shape_cast %52 : vector<1x2x16xbf16> to vector<2x16xbf16>
    %cst_49 = arith.constant dense<0.000000e+00> : vector<2x128xf32>
    %54 = tpu.matmul %53, %50, %cst_49 {dimension_numbers = #tpu.dot_dimension_numbers<[1], [0], [0], [1], [0, 0, 1, 1], [], []>} : vector<2x16xbf16>, vector<16x128xbf16>, vector<2x128xf32> -> vector<2x128xf32>
    %55 = arith.truncf %54 : vector<2x128xf32> to vector<2x128xbf16>
    %c0_50 = arith.constant 0 : index
    %c0_51 = arith.constant 0 : index
    %c0_52 = arith.constant 0 : index
    %56 = vector.load %arg8[%c0_50, %c0_51, %c0_52] : memref<8x128x32xbf16, #tpu.memory_space<vmem>>, vector<1x128x32xbf16>
    %57 = vector.shape_cast %56 : vector<1x128x32xbf16> to vector<128x32xbf16>
    %cst_53 = arith.constant dense<0.000000e+00> : vector<2x32xf32>
    %58 = tpu.matmul %55, %57, %cst_53 {dimension_numbers = #tpu.dot_dimension_numbers<[1], [0], [0], [1], [0, 0, 1, 1], [], []>} : vector<2x128xbf16>, vector<128x32xbf16>, vector<2x32xf32> -> vector<2x32xf32>
    %59 = vector.broadcast %51 : vector<1x32xf32> to vector<2x32xf32>
    %60 = arith.addf %59, %58 : vector<2x32xf32>
    %c1_54 = arith.constant 1 : index
    %c0_55 = arith.constant 0 : index
    %c0_56 = arith.constant 0 : index
    %61 = vector.load %arg2[%c1_54, %c0_55, %c0_56] : memref<8x2x16xbf16, #tpu.memory_space<vmem>>, vector<1x2x16xbf16>
    %62 = vector.shape_cast %61 : vector<1x2x16xbf16> to vector<2x16xbf16>
    %cst_57 = arith.constant dense<0.000000e+00> : vector<2x128xf32>
    %63 = tpu.matmul %62, %50, %cst_57 {dimension_numbers = #tpu.dot_dimension_numbers<[1], [0], [0], [1], [0, 0, 1, 1], [], []>} : vector<2x16xbf16>, vector<16x128xbf16>, vector<2x128xf32> -> vector<2x128xf32>
    %64 = arith.truncf %63 : vector<2x128xf32> to vector<2x128xbf16>
    %c1_58 = arith.constant 1 : index
    %c0_59 = arith.constant 0 : index
    %c0_60 = arith.constant 0 : index
    %65 = vector.load %arg8[%c1_58, %c0_59, %c0_60] : memref<8x128x32xbf16, #tpu.memory_space<vmem>>, vector<1x128x32xbf16>
    %66 = vector.shape_cast %65 : vector<1x128x32xbf16> to vector<128x32xbf16>
    %cst_61 = arith.constant dense<0.000000e+00> : vector<2x32xf32>
    %67 = tpu.matmul %64, %66, %cst_61 {dimension_numbers = #tpu.dot_dimension_numbers<[1], [0], [0], [1], [0, 0, 1, 1], [], []>} : vector<2x128xbf16>, vector<128x32xbf16>, vector<2x32xf32> -> vector<2x32xf32>
    %68 = arith.addf %60, %67 : vector<2x32xf32>
    %c2_62 = arith.constant 2 : index
    %c0_63 = arith.constant 0 : index
    %c0_64 = arith.constant 0 : index
    %69 = vector.load %arg2[%c2_62, %c0_63, %c0_64] : memref<8x2x16xbf16, #tpu.memory_space<vmem>>, vector<1x2x16xbf16>
    %70 = vector.shape_cast %69 : vector<1x2x16xbf16> to vector<2x16xbf16>
    %cst_65 = arith.constant dense<0.000000e+00> : vector<2x128xf32>
    %71 = tpu.matmul %70, %50, %cst_65 {dimension_numbers = #tpu.dot_dimension_numbers<[1], [0], [0], [1], [0, 0, 1, 1], [], []>} : vector<2x16xbf16>, vector<16x128xbf16>, vector<2x128xf32> -> vector<2x128xf32>
    %72 = arith.truncf %71 : vector<2x128xf32> to vector<2x128xbf16>
    %c2_66 = arith.constant 2 : index
    %c0_67 = arith.constant 0 : index
    %c0_68 = arith.constant 0 : index
    %73 = vector.load %arg8[%c2_66, %c0_67, %c0_68] : memref<8x128x32xbf16, #tpu.memory_space<vmem>>, vector<1x128x32xbf16>
    %74 = vector.shape_cast %73 : vector<1x128x32xbf16> to vector<128x32xbf16>
    %cst_69 = arith.constant dense<0.000000e+00> : vector<2x32xf32>
    %75 = tpu.matmul %72, %74, %cst_69 {dimension_numbers = #tpu.dot_dimension_numbers<[1], [0], [0], [1], [0, 0, 1, 1], [], []>} : vector<2x128xbf16>, vector<128x32xbf16>, vector<2x32xf32> -> vector<2x32xf32>
    %76 = arith.addf %68, %75 : vector<2x32xf32>
    %c3 = arith.constant 3 : index
    %c0_70 = arith.constant 0 : index
    %c0_71 = arith.constant 0 : index
    %77 = vector.load %arg2[%c3, %c0_70, %c0_71] : memref<8x2x16xbf16, #tpu.memory_space<vmem>>, vector<1x2x16xbf16>
    %78 = vector.shape_cast %77 : vector<1x2x16xbf16> to vector<2x16xbf16>
    %cst_72 = arith.constant dense<0.000000e+00> : vector<2x128xf32>
    %79 = tpu.matmul %78, %50, %cst_72 {dimension_numbers = #tpu.dot_dimension_numbers<[1], [0], [0], [1], [0, 0, 1, 1], [], []>} : vector<2x16xbf16>, vector<16x128xbf16>, vector<2x128xf32> -> vector<2x128xf32>
    %80 = arith.truncf %79 : vector<2x128xf32> to vector<2x128xbf16>
    %c3_73 = arith.constant 3 : index
    %c0_74 = arith.constant 0 : index
    %c0_75 = arith.constant 0 : index
    %81 = vector.load %arg8[%c3_73, %c0_74, %c0_75] : memref<8x128x32xbf16, #tpu.memory_space<vmem>>, vector<1x128x32xbf16>
    %82 = vector.shape_cast %81 : vector<1x128x32xbf16> to vector<128x32xbf16>
    %cst_76 = arith.constant dense<0.000000e+00> : vector<2x32xf32>
    %83 = tpu.matmul %80, %82, %cst_76 {dimension_numbers = #tpu.dot_dimension_numbers<[1], [0], [0], [1], [0, 0, 1, 1], [], []>} : vector<2x128xbf16>, vector<128x32xbf16>, vector<2x32xf32> -> vector<2x32xf32>
    %84 = arith.addf %76, %83 : vector<2x32xf32>
    %c4 = arith.constant 4 : index
    %c0_77 = arith.constant 0 : index
    %c0_78 = arith.constant 0 : index
    %85 = vector.load %arg2[%c4, %c0_77, %c0_78] : memref<8x2x16xbf16, #tpu.memory_space<vmem>>, vector<1x2x16xbf16>
    %86 = vector.shape_cast %85 : vector<1x2x16xbf16> to vector<2x16xbf16>
    %cst_79 = arith.constant dense<0.000000e+00> : vector<2x128xf32>
    %87 = tpu.matmul %86, %50, %cst_79 {dimension_numbers = #tpu.dot_dimension_numbers<[1], [0], [0], [1], [0, 0, 1, 1], [], []>} : vector<2x16xbf16>, vector<16x128xbf16>, vector<2x128xf32> -> vector<2x128xf32>
    %88 = arith.truncf %87 : vector<2x128xf32> to vector<2x128xbf16>
    %c4_80 = arith.constant 4 : index
    %c0_81 = arith.constant 0 : index
    %c0_82 = arith.constant 0 : index
    %89 = vector.load %arg8[%c4_80, %c0_81, %c0_82] : memref<8x128x32xbf16, #tpu.memory_space<vmem>>, vector<1x128x32xbf16>
    %90 = vector.shape_cast %89 : vector<1x128x32xbf16> to vector<128x32xbf16>
    %cst_83 = arith.constant dense<0.000000e+00> : vector<2x32xf32>
    %91 = tpu.matmul %88, %90, %cst_83 {dimension_numbers = #tpu.dot_dimension_numbers<[1], [0], [0], [1], [0, 0, 1, 1], [], []>} : vector<2x128xbf16>, vector<128x32xbf16>, vector<2x32xf32> -> vector<2x32xf32>
    %92 = arith.addf %84, %91 : vector<2x32xf32>
    %c5 = arith.constant 5 : index
    %c0_84 = arith.constant 0 : index
    %c0_85 = arith.constant 0 : index
    %93 = vector.load %arg2[%c5, %c0_84, %c0_85] : memref<8x2x16xbf16, #tpu.memory_space<vmem>>, vector<1x2x16xbf16>
    %94 = vector.shape_cast %93 : vector<1x2x16xbf16> to vector<2x16xbf16>
    %cst_86 = arith.constant dense<0.000000e+00> : vector<2x128xf32>
    %95 = tpu.matmul %94, %50, %cst_86 {dimension_numbers = #tpu.dot_dimension_numbers<[1], [0], [0], [1], [0, 0, 1, 1], [], []>} : vector<2x16xbf16>, vector<16x128xbf16>, vector<2x128xf32> -> vector<2x128xf32>
    %96 = arith.truncf %95 : vector<2x128xf32> to vector<2x128xbf16>
    %c5_87 = arith.constant 5 : index
    %c0_88 = arith.constant 0 : index
    %c0_89 = arith.constant 0 : index
    %97 = vector.load %arg8[%c5_87, %c0_88, %c0_89] : memref<8x128x32xbf16, #tpu.memory_space<vmem>>, vector<1x128x32xbf16>
    %98 = vector.shape_cast %97 : vector<1x128x32xbf16> to vector<128x32xbf16>
    %cst_90 = arith.constant dense<0.000000e+00> : vector<2x32xf32>
    %99 = tpu.matmul %96, %98, %cst_90 {dimension_numbers = #tpu.dot_dimension_numbers<[1], [0], [0], [1], [0, 0, 1, 1], [], []>} : vector<2x128xbf16>, vector<128x32xbf16>, vector<2x32xf32> -> vector<2x32xf32>
    %100 = arith.addf %92, %99 : vector<2x32xf32>
    %c6 = arith.constant 6 : index
    %c0_91 = arith.constant 0 : index
    %c0_92 = arith.constant 0 : index
    %101 = vector.load %arg2[%c6, %c0_91, %c0_92] : memref<8x2x16xbf16, #tpu.memory_space<vmem>>, vector<1x2x16xbf16>
    %102 = vector.shape_cast %101 : vector<1x2x16xbf16> to vector<2x16xbf16>
    %cst_93 = arith.constant dense<0.000000e+00> : vector<2x128xf32>
    %103 = tpu.matmul %102, %50, %cst_93 {dimension_numbers = #tpu.dot_dimension_numbers<[1], [0], [0], [1], [0, 0, 1, 1], [], []>} : vector<2x16xbf16>, vector<16x128xbf16>, vector<2x128xf32> -> vector<2x128xf32>
    %104 = arith.truncf %103 : vector<2x128xf32> to vector<2x128xbf16>
    %c6_94 = arith.constant 6 : index
    %c0_95 = arith.constant 0 : index
    %c0_96 = arith.constant 0 : index
    %105 = vector.load %arg8[%c6_94, %c0_95, %c0_96] : memref<8x128x32xbf16, #tpu.memory_space<vmem>>, vector<1x128x32xbf16>
    %106 = vector.shape_cast %105 : vector<1x128x32xbf16> to vector<128x32xbf16>
    %cst_97 = arith.constant dense<0.000000e+00> : vector<2x32xf32>
    %107 = tpu.matmul %104, %106, %cst_97 {dimension_numbers = #tpu.dot_dimension_numbers<[1], [0], [0], [1], [0, 0, 1, 1], [], []>} : vector<2x128xbf16>, vector<128x32xbf16>, vector<2x32xf32> -> vector<2x32xf32>
    %108 = arith.addf %100, %107 : vector<2x32xf32>
    %c7 = arith.constant 7 : index
    %c0_98 = arith.constant 0 : index
    %c0_99 = arith.constant 0 : index
    %109 = vector.load %arg2[%c7, %c0_98, %c0_99] : memref<8x2x16xbf16, #tpu.memory_space<vmem>>, vector<1x2x16xbf16>
    %110 = vector.shape_cast %109 : vector<1x2x16xbf16> to vector<2x16xbf16>
    %cst_100 = arith.constant dense<0.000000e+00> : vector<2x128xf32>
    %111 = tpu.matmul %110, %50, %cst_100 {dimension_numbers = #tpu.dot_dimension_numbers<[1], [0], [0], [1], [0, 0, 1, 1], [], []>} : vector<2x16xbf16>, vector<16x128xbf16>, vector<2x128xf32> -> vector<2x128xf32>
    %112 = arith.truncf %111 : vector<2x128xf32> to vector<2x128xbf16>
    %c7_101 = arith.constant 7 : index
    %c0_102 = arith.constant 0 : index
    %c0_103 = arith.constant 0 : index
    %113 = vector.load %arg8[%c7_101, %c0_102, %c0_103] : memref<8x128x32xbf16, #tpu.memory_space<vmem>>, vector<1x128x32xbf16>
    %114 = vector.shape_cast %113 : vector<1x128x32xbf16> to vector<128x32xbf16>
    %cst_104 = arith.constant dense<0.000000e+00> : vector<2x32xf32>
    %115 = tpu.matmul %112, %114, %cst_104 {dimension_numbers = #tpu.dot_dimension_numbers<[1], [0], [0], [1], [0, 0, 1, 1], [], []>} : vector<2x128xbf16>, vector<128x32xbf16>, vector<2x32xf32> -> vector<2x32xf32>
    %116 = arith.addf %108, %115 : vector<2x32xf32>
    %cst_105 = arith.constant 0.000000e+00 : f32
    %117 = vector.broadcast %cst_105 : f32 to vector<2x32xf32>
    %118 = arith.maximumf %116, %117 : vector<2x32xf32>
    %119 = arith.truncf %118 : vector<2x32xf32> to vector<2x32xbf16>
    %c0_106 = arith.constant 0 : index
    %c0_107 = arith.constant 0 : index
    %120 = vector.load %arg10[%c0_106, %c0_107] : memref<32x16xbf16, #tpu.memory_space<vmem>>, vector<32x16xbf16>
    %cst_108 = arith.constant dense<0.000000e+00> : vector<2x16xf32>
    %121 = tpu.matmul %119, %120, %cst_108 {dimension_numbers = #tpu.dot_dimension_numbers<[1], [0], [0], [1], [0, 0, 1, 1], [], []>} : vector<2x32xbf16>, vector<32x16xbf16>, vector<2x16xf32> -> vector<2x16xf32>
    %c0_109 = arith.constant 0 : index
    %c0_110 = arith.constant 0 : index
    %122 = vector.load %arg11[%c0_109, %c0_110] : memref<1x16xf32, #tpu.memory_space<vmem>>, vector<1x16xf32>
    %123 = vector.broadcast %122 : vector<1x16xf32> to vector<2x16xf32>
    %124 = arith.addf %121, %123 : vector<2x16xf32>
    %cst_111 = arith.constant 0.000000e+00 : f32
    %125 = vector.broadcast %cst_111 : f32 to vector<2x16xf32>
    %126 = arith.maximumf %124, %125 : vector<2x16xf32>
    %127 = arith.truncf %126 : vector<2x16xf32> to vector<2x16xbf16>
    %c0_112 = arith.constant 0 : index
    %c0_113 = arith.constant 0 : index
    %128 = vector.load %arg12[%c0_112, %c0_113] : memref<16x8xbf16, #tpu.memory_space<vmem>>, vector<16x8xbf16>
    %cst_114 = arith.constant dense<0.000000e+00> : vector<2x8xf32>
    %129 = tpu.matmul %127, %128, %cst_114 {dimension_numbers = #tpu.dot_dimension_numbers<[1], [0], [0], [1], [0, 0, 1, 1], [], []>} : vector<2x16xbf16>, vector<16x8xbf16>, vector<2x8xf32> -> vector<2x8xf32>
    %c0_115 = arith.constant 0 : index
    %c0_116 = arith.constant 0 : index
    %130 = vector.load %arg13[%c0_115, %c0_116] : memref<1x8xf32, #tpu.memory_space<vmem>>, vector<1x8xf32>
    %131 = vector.broadcast %130 : vector<1x8xf32> to vector<2x8xf32>
    %132 = arith.addf %129, %131 : vector<2x8xf32>
    %cst_117 = arith.constant 0.000000e+00 : f32
    %133 = vector.broadcast %cst_117 : f32 to vector<2x8xf32>
    %134 = arith.maximumf %132, %133 : vector<2x8xf32>
    %135 = arith.truncf %134 : vector<2x8xf32> to vector<2x8xbf16>
    %c0_118 = arith.constant 0 : index
    %c0_119 = arith.constant 0 : index
    %136 = vector.load %arg14[%c0_118, %c0_119] : memref<8x16xbf16, #tpu.memory_space<vmem>>, vector<8x16xbf16>
    %cst_120 = arith.constant dense<0.000000e+00> : vector<2x16xf32>
    %137 = tpu.matmul %135, %136, %cst_120 {dimension_numbers = #tpu.dot_dimension_numbers<[1], [0], [0], [1], [0, 0, 1, 1], [], []>} : vector<2x8xbf16>, vector<8x16xbf16>, vector<2x16xf32> -> vector<2x16xf32>
    %c0_121 = arith.constant 0 : index
    %c0_122 = arith.constant 0 : index
    %138 = vector.load %arg15[%c0_121, %c0_122] : memref<1x16xf32, #tpu.memory_space<vmem>>, vector<1x16xf32>
    %139 = vector.broadcast %138 : vector<1x16xf32> to vector<2x16xf32>
    %140 = arith.addf %137, %139 : vector<2x16xf32>
    %cst_123 = arith.constant 0.000000e+00 : f32
    %141 = vector.broadcast %cst_123 : f32 to vector<2x16xf32>
    %142 = arith.maximumf %140, %141 : vector<2x16xf32>
    %143 = arith.truncf %142 : vector<2x16xf32> to vector<2x16xbf16>
    %c0_124 = arith.constant 0 : index
    %c0_125 = arith.constant 0 : index
    %144 = vector.load %arg16[%c0_124, %c0_125] : memref<16x32xbf16, #tpu.memory_space<vmem>>, vector<16x32xbf16>
    %cst_126 = arith.constant dense<0.000000e+00> : vector<2x32xf32>
    %145 = tpu.matmul %143, %144, %cst_126 {dimension_numbers = #tpu.dot_dimension_numbers<[1], [0], [0], [1], [0, 0, 1, 1], [], []>} : vector<2x16xbf16>, vector<16x32xbf16>, vector<2x32xf32> -> vector<2x32xf32>
    %c0_127 = arith.constant 0 : index
    %c0_128 = arith.constant 0 : index
    %146 = vector.load %arg17[%c0_127, %c0_128] : memref<1x32xf32, #tpu.memory_space<vmem>>, vector<1x32xf32>
    %147 = vector.broadcast %146 : vector<1x32xf32> to vector<2x32xf32>
    %148 = arith.addf %145, %147 : vector<2x32xf32>
    %cst_129 = arith.constant 0.000000e+00 : f32
    %149 = vector.broadcast %cst_129 : f32 to vector<2x32xf32>
    %150 = arith.maximumf %148, %149 : vector<2x32xf32>
    %151 = arith.truncf %150 : vector<2x32xf32> to vector<2x32xbf16>
    %cst_130 = arith.constant 0.000000e+00 : f32
    %152 = vector.broadcast %cst_130 : f32 to vector<16x128xf32>
    %c0_131 = arith.constant 0 : index
    %c0_132 = arith.constant 0 : index
    %c0_133 = arith.constant 0 : index
    %153 = vector.load %arg18[%c0_131, %c0_132, %c0_133] : memref<8x32x128xbf16, #tpu.memory_space<vmem>>, vector<1x32x128xbf16>
    %154 = vector.shape_cast %153 : vector<1x32x128xbf16> to vector<32x128xbf16>
    %cst_134 = arith.constant dense<0.000000e+00> : vector<2x128xf32>
    %155 = tpu.matmul %151, %154, %cst_134 {dimension_numbers = #tpu.dot_dimension_numbers<[1], [0], [0], [1], [0, 0, 1, 1], [], []>} : vector<2x32xbf16>, vector<32x128xbf16>, vector<2x128xf32> -> vector<2x128xf32>
    %c0_135 = arith.constant 0 : index
    %c0_136 = arith.constant 0 : index
    %c0_137 = arith.constant 0 : index
    %156 = vector.load %arg19[%c0_135, %c0_136, %c0_137] : memref<8x1x128xf32, #tpu.memory_space<vmem>>, vector<1x1x128xf32>
    %157 = vector.shape_cast %156 : vector<1x1x128xf32> to vector<1x128xf32>
    %158 = vector.broadcast %157 : vector<1x128xf32> to vector<2x128xf32>
    %159 = arith.addf %155, %158 : vector<2x128xf32>
    %cst_138 = arith.constant 0.000000e+00 : f32
    %160 = vector.broadcast %cst_138 : f32 to vector<2x128xf32>
    %161 = arith.maximumf %159, %160 : vector<2x128xf32>
    %162 = arith.truncf %161 : vector<2x128xf32> to vector<2x128xbf16>
    %c0_139 = arith.constant 0 : index
    %c0_140 = arith.constant 0 : index
    %c0_141 = arith.constant 0 : index
    %163 = vector.load %arg3[%c0_139, %c0_140, %c0_141] : memref<8x16x2xbf16, #tpu.memory_space<vmem>>, vector<1x16x2xbf16>
    %164 = vector.shape_cast %163 : vector<1x16x2xbf16> to vector<16x2xbf16>
    %cst_142 = arith.constant dense<0.000000e+00> : vector<16x128xf32>
    %165 = tpu.matmul %164, %162, %cst_142 {dimension_numbers = #tpu.dot_dimension_numbers<[1], [0], [0], [1], [0, 0, 1, 1], [], []>} : vector<16x2xbf16>, vector<2x128xbf16>, vector<16x128xf32> -> vector<16x128xf32>
    %166 = arith.addf %152, %165 : vector<16x128xf32>
    %c1_143 = arith.constant 1 : index
    %c0_144 = arith.constant 0 : index
    %c0_145 = arith.constant 0 : index
    %167 = vector.load %arg18[%c1_143, %c0_144, %c0_145] : memref<8x32x128xbf16, #tpu.memory_space<vmem>>, vector<1x32x128xbf16>
    %168 = vector.shape_cast %167 : vector<1x32x128xbf16> to vector<32x128xbf16>
    %cst_146 = arith.constant dense<0.000000e+00> : vector<2x128xf32>
    %169 = tpu.matmul %151, %168, %cst_146 {dimension_numbers = #tpu.dot_dimension_numbers<[1], [0], [0], [1], [0, 0, 1, 1], [], []>} : vector<2x32xbf16>, vector<32x128xbf16>, vector<2x128xf32> -> vector<2x128xf32>
    %c1_147 = arith.constant 1 : index
    %c0_148 = arith.constant 0 : index
    %c0_149 = arith.constant 0 : index
    %170 = vector.load %arg19[%c1_147, %c0_148, %c0_149] : memref<8x1x128xf32, #tpu.memory_space<vmem>>, vector<1x1x128xf32>
    %171 = vector.shape_cast %170 : vector<1x1x128xf32> to vector<1x128xf32>
    %172 = vector.broadcast %171 : vector<1x128xf32> to vector<2x128xf32>
    %173 = arith.addf %169, %172 : vector<2x128xf32>
    %cst_150 = arith.constant 0.000000e+00 : f32
    %174 = vector.broadcast %cst_150 : f32 to vector<2x128xf32>
    %175 = arith.maximumf %173, %174 : vector<2x128xf32>
    %176 = arith.truncf %175 : vector<2x128xf32> to vector<2x128xbf16>
    %c1_151 = arith.constant 1 : index
    %c0_152 = arith.constant 0 : index
    %c0_153 = arith.constant 0 : index
    %177 = vector.load %arg3[%c1_151, %c0_152, %c0_153] : memref<8x16x2xbf16, #tpu.memory_space<vmem>>, vector<1x16x2xbf16>
    %178 = vector.shape_cast %177 : vector<1x16x2xbf16> to vector<16x2xbf16>
    %cst_154 = arith.constant dense<0.000000e+00> : vector<16x128xf32>
    %179 = tpu.matmul %178, %176, %cst_154 {dimension_numbers = #tpu.dot_dimension_numbers<[1], [0], [0], [1], [0, 0, 1, 1], [], []>} : vector<16x2xbf16>, vector<2x128xbf16>, vector<16x128xf32> -> vector<16x128xf32>
    %180 = arith.addf %166, %179 : vector<16x128xf32>
    %c2_155 = arith.constant 2 : index
    %c0_156 = arith.constant 0 : index
    %c0_157 = arith.constant 0 : index
    %181 = vector.load %arg18[%c2_155, %c0_156, %c0_157] : memref<8x32x128xbf16, #tpu.memory_space<vmem>>, vector<1x32x128xbf16>
    %182 = vector.shape_cast %181 : vector<1x32x128xbf16> to vector<32x128xbf16>
    %cst_158 = arith.constant dense<0.000000e+00> : vector<2x128xf32>
    %183 = tpu.matmul %151, %182, %cst_158 {dimension_numbers = #tpu.dot_dimension_numbers<[1], [0], [0], [1], [0, 0, 1, 1], [], []>} : vector<2x32xbf16>, vector<32x128xbf16>, vector<2x128xf32> -> vector<2x128xf32>
    %c2_159 = arith.constant 2 : index
    %c0_160 = arith.constant 0 : index
    %c0_161 = arith.constant 0 : index
    %184 = vector.load %arg19[%c2_159, %c0_160, %c0_161] : memref<8x1x128xf32, #tpu.memory_space<vmem>>, vector<1x1x128xf32>
    %185 = vector.shape_cast %184 : vector<1x1x128xf32> to vector<1x128xf32>
    %186 = vector.broadcast %185 : vector<1x128xf32> to vector<2x128xf32>
    %187 = arith.addf %183, %186 : vector<2x128xf32>
    %cst_162 = arith.constant 0.000000e+00 : f32
    %188 = vector.broadcast %cst_162 : f32 to vector<2x128xf32>
    %189 = arith.maximumf %187, %188 : vector<2x128xf32>
    %190 = arith.truncf %189 : vector<2x128xf32> to vector<2x128xbf16>
    %c2_163 = arith.constant 2 : index
    %c0_164 = arith.constant 0 : index
    %c0_165 = arith.constant 0 : index
    %191 = vector.load %arg3[%c2_163, %c0_164, %c0_165] : memref<8x16x2xbf16, #tpu.memory_space<vmem>>, vector<1x16x2xbf16>
    %192 = vector.shape_cast %191 : vector<1x16x2xbf16> to vector<16x2xbf16>
    %cst_166 = arith.constant dense<0.000000e+00> : vector<16x128xf32>
    %193 = tpu.matmul %192, %190, %cst_166 {dimension_numbers = #tpu.dot_dimension_numbers<[1], [0], [0], [1], [0, 0, 1, 1], [], []>} : vector<16x2xbf16>, vector<2x128xbf16>, vector<16x128xf32> -> vector<16x128xf32>
    %194 = arith.addf %180, %193 : vector<16x128xf32>
    %c3_167 = arith.constant 3 : index
    %c0_168 = arith.constant 0 : index
    %c0_169 = arith.constant 0 : index
    %195 = vector.load %arg18[%c3_167, %c0_168, %c0_169] : memref<8x32x128xbf16, #tpu.memory_space<vmem>>, vector<1x32x128xbf16>
    %196 = vector.shape_cast %195 : vector<1x32x128xbf16> to vector<32x128xbf16>
    %cst_170 = arith.constant dense<0.000000e+00> : vector<2x128xf32>
    %197 = tpu.matmul %151, %196, %cst_170 {dimension_numbers = #tpu.dot_dimension_numbers<[1], [0], [0], [1], [0, 0, 1, 1], [], []>} : vector<2x32xbf16>, vector<32x128xbf16>, vector<2x128xf32> -> vector<2x128xf32>
    %c3_171 = arith.constant 3 : index
    %c0_172 = arith.constant 0 : index
    %c0_173 = arith.constant 0 : index
    %198 = vector.load %arg19[%c3_171, %c0_172, %c0_173] : memref<8x1x128xf32, #tpu.memory_space<vmem>>, vector<1x1x128xf32>
    %199 = vector.shape_cast %198 : vector<1x1x128xf32> to vector<1x128xf32>
    %200 = vector.broadcast %199 : vector<1x128xf32> to vector<2x128xf32>
    %201 = arith.addf %197, %200 : vector<2x128xf32>
    %cst_174 = arith.constant 0.000000e+00 : f32
    %202 = vector.broadcast %cst_174 : f32 to vector<2x128xf32>
    %203 = arith.maximumf %201, %202 : vector<2x128xf32>
    %204 = arith.truncf %203 : vector<2x128xf32> to vector<2x128xbf16>
    %c3_175 = arith.constant 3 : index
    %c0_176 = arith.constant 0 : index
    %c0_177 = arith.constant 0 : index
    %205 = vector.load %arg3[%c3_175, %c0_176, %c0_177] : memref<8x16x2xbf16, #tpu.memory_space<vmem>>, vector<1x16x2xbf16>
    %206 = vector.shape_cast %205 : vector<1x16x2xbf16> to vector<16x2xbf16>
    %cst_178 = arith.constant dense<0.000000e+00> : vector<16x128xf32>
    %207 = tpu.matmul %206, %204, %cst_178 {dimension_numbers = #tpu.dot_dimension_numbers<[1], [0], [0], [1], [0, 0, 1, 1], [], []>} : vector<16x2xbf16>, vector<2x128xbf16>, vector<16x128xf32> -> vector<16x128xf32>
    %208 = arith.addf %194, %207 : vector<16x128xf32>
    %c4_179 = arith.constant 4 : index
    %c0_180 = arith.constant 0 : index
    %c0_181 = arith.constant 0 : index
    %209 = vector.load %arg18[%c4_179, %c0_180, %c0_181] : memref<8x32x128xbf16, #tpu.memory_space<vmem>>, vector<1x32x128xbf16>
    %210 = vector.shape_cast %209 : vector<1x32x128xbf16> to vector<32x128xbf16>
    %cst_182 = arith.constant dense<0.000000e+00> : vector<2x128xf32>
    %211 = tpu.matmul %151, %210, %cst_182 {dimension_numbers = #tpu.dot_dimension_numbers<[1], [0], [0], [1], [0, 0, 1, 1], [], []>} : vector<2x32xbf16>, vector<32x128xbf16>, vector<2x128xf32> -> vector<2x128xf32>
    %c4_183 = arith.constant 4 : index
    %c0_184 = arith.constant 0 : index
    %c0_185 = arith.constant 0 : index
    %212 = vector.load %arg19[%c4_183, %c0_184, %c0_185] : memref<8x1x128xf32, #tpu.memory_space<vmem>>, vector<1x1x128xf32>
    %213 = vector.shape_cast %212 : vector<1x1x128xf32> to vector<1x128xf32>
    %214 = vector.broadcast %213 : vector<1x128xf32> to vector<2x128xf32>
    %215 = arith.addf %211, %214 : vector<2x128xf32>
    %cst_186 = arith.constant 0.000000e+00 : f32
    %216 = vector.broadcast %cst_186 : f32 to vector<2x128xf32>
    %217 = arith.maximumf %215, %216 : vector<2x128xf32>
    %218 = arith.truncf %217 : vector<2x128xf32> to vector<2x128xbf16>
    %c4_187 = arith.constant 4 : index
    %c0_188 = arith.constant 0 : index
    %c0_189 = arith.constant 0 : index
    %219 = vector.load %arg3[%c4_187, %c0_188, %c0_189] : memref<8x16x2xbf16, #tpu.memory_space<vmem>>, vector<1x16x2xbf16>
    %220 = vector.shape_cast %219 : vector<1x16x2xbf16> to vector<16x2xbf16>
    %cst_190 = arith.constant dense<0.000000e+00> : vector<16x128xf32>
    %221 = tpu.matmul %220, %218, %cst_190 {dimension_numbers = #tpu.dot_dimension_numbers<[1], [0], [0], [1], [0, 0, 1, 1], [], []>} : vector<16x2xbf16>, vector<2x128xbf16>, vector<16x128xf32> -> vector<16x128xf32>
    %222 = arith.addf %208, %221 : vector<16x128xf32>
    %c5_191 = arith.constant 5 : index
    %c0_192 = arith.constant 0 : index
    %c0_193 = arith.constant 0 : index
    %223 = vector.load %arg18[%c5_191, %c0_192, %c0_193] : memref<8x32x128xbf16, #tpu.memory_space<vmem>>, vector<1x32x128xbf16>
    %224 = vector.shape_cast %223 : vector<1x32x128xbf16> to vector<32x128xbf16>
    %cst_194 = arith.constant dense<0.000000e+00> : vector<2x128xf32>
    %225 = tpu.matmul %151, %224, %cst_194 {dimension_numbers = #tpu.dot_dimension_numbers<[1], [0], [0], [1], [0, 0, 1, 1], [], []>} : vector<2x32xbf16>, vector<32x128xbf16>, vector<2x128xf32> -> vector<2x128xf32>
    %c5_195 = arith.constant 5 : index
    %c0_196 = arith.constant 0 : index
    %c0_197 = arith.constant 0 : index
    %226 = vector.load %arg19[%c5_195, %c0_196, %c0_197] : memref<8x1x128xf32, #tpu.memory_space<vmem>>, vector<1x1x128xf32>
    %227 = vector.shape_cast %226 : vector<1x1x128xf32> to vector<1x128xf32>
    %228 = vector.broadcast %227 : vector<1x128xf32> to vector<2x128xf32>
    %229 = arith.addf %225, %228 : vector<2x128xf32>
    %cst_198 = arith.constant 0.000000e+00 : f32
    %230 = vector.broadcast %cst_198 : f32 to vector<2x128xf32>
    %231 = arith.maximumf %229, %230 : vector<2x128xf32>
    %232 = arith.truncf %231 : vector<2x128xf32> to vector<2x128xbf16>
    %c5_199 = arith.constant 5 : index
    %c0_200 = arith.constant 0 : index
    %c0_201 = arith.constant 0 : index
    %233 = vector.load %arg3[%c5_199, %c0_200, %c0_201] : memref<8x16x2xbf16, #tpu.memory_space<vmem>>, vector<1x16x2xbf16>
    %234 = vector.shape_cast %233 : vector<1x16x2xbf16> to vector<16x2xbf16>
    %cst_202 = arith.constant dense<0.000000e+00> : vector<16x128xf32>
    %235 = tpu.matmul %234, %232, %cst_202 {dimension_numbers = #tpu.dot_dimension_numbers<[1], [0], [0], [1], [0, 0, 1, 1], [], []>} : vector<16x2xbf16>, vector<2x128xbf16>, vector<16x128xf32> -> vector<16x128xf32>
    %236 = arith.addf %222, %235 : vector<16x128xf32>
    %c6_203 = arith.constant 6 : index
    %c0_204 = arith.constant 0 : index
    %c0_205 = arith.constant 0 : index
    %237 = vector.load %arg18[%c6_203, %c0_204, %c0_205] : memref<8x32x128xbf16, #tpu.memory_space<vmem>>, vector<1x32x128xbf16>
    %238 = vector.shape_cast %237 : vector<1x32x128xbf16> to vector<32x128xbf16>
    %cst_206 = arith.constant dense<0.000000e+00> : vector<2x128xf32>
    %239 = tpu.matmul %151, %238, %cst_206 {dimension_numbers = #tpu.dot_dimension_numbers<[1], [0], [0], [1], [0, 0, 1, 1], [], []>} : vector<2x32xbf16>, vector<32x128xbf16>, vector<2x128xf32> -> vector<2x128xf32>
    %c6_207 = arith.constant 6 : index
    %c0_208 = arith.constant 0 : index
    %c0_209 = arith.constant 0 : index
    %240 = vector.load %arg19[%c6_207, %c0_208, %c0_209] : memref<8x1x128xf32, #tpu.memory_space<vmem>>, vector<1x1x128xf32>
    %241 = vector.shape_cast %240 : vector<1x1x128xf32> to vector<1x128xf32>
    %242 = vector.broadcast %241 : vector<1x128xf32> to vector<2x128xf32>
    %243 = arith.addf %239, %242 : vector<2x128xf32>
    %cst_210 = arith.constant 0.000000e+00 : f32
    %244 = vector.broadcast %cst_210 : f32 to vector<2x128xf32>
    %245 = arith.maximumf %243, %244 : vector<2x128xf32>
    %246 = arith.truncf %245 : vector<2x128xf32> to vector<2x128xbf16>
    %c6_211 = arith.constant 6 : index
    %c0_212 = arith.constant 0 : index
    %c0_213 = arith.constant 0 : index
    %247 = vector.load %arg3[%c6_211, %c0_212, %c0_213] : memref<8x16x2xbf16, #tpu.memory_space<vmem>>, vector<1x16x2xbf16>
    %248 = vector.shape_cast %247 : vector<1x16x2xbf16> to vector<16x2xbf16>
    %cst_214 = arith.constant dense<0.000000e+00> : vector<16x128xf32>
    %249 = tpu.matmul %248, %246, %cst_214 {dimension_numbers = #tpu.dot_dimension_numbers<[1], [0], [0], [1], [0, 0, 1, 1], [], []>} : vector<16x2xbf16>, vector<2x128xbf16>, vector<16x128xf32> -> vector<16x128xf32>
    %250 = arith.addf %236, %249 : vector<16x128xf32>
    %c7_215 = arith.constant 7 : index
    %c0_216 = arith.constant 0 : index
    %c0_217 = arith.constant 0 : index
    %251 = vector.load %arg18[%c7_215, %c0_216, %c0_217] : memref<8x32x128xbf16, #tpu.memory_space<vmem>>, vector<1x32x128xbf16>
    %252 = vector.shape_cast %251 : vector<1x32x128xbf16> to vector<32x128xbf16>
    %cst_218 = arith.constant dense<0.000000e+00> : vector<2x128xf32>
    %253 = tpu.matmul %151, %252, %cst_218 {dimension_numbers = #tpu.dot_dimension_numbers<[1], [0], [0], [1], [0, 0, 1, 1], [], []>} : vector<2x32xbf16>, vector<32x128xbf16>, vector<2x128xf32> -> vector<2x128xf32>
    %c7_219 = arith.constant 7 : index
    %c0_220 = arith.constant 0 : index
    %c0_221 = arith.constant 0 : index
    %254 = vector.load %arg19[%c7_219, %c0_220, %c0_221] : memref<8x1x128xf32, #tpu.memory_space<vmem>>, vector<1x1x128xf32>
    %255 = vector.shape_cast %254 : vector<1x1x128xf32> to vector<1x128xf32>
    %256 = vector.broadcast %255 : vector<1x128xf32> to vector<2x128xf32>
    %257 = arith.addf %253, %256 : vector<2x128xf32>
    %cst_222 = arith.constant 0.000000e+00 : f32
    %258 = vector.broadcast %cst_222 : f32 to vector<2x128xf32>
    %259 = arith.maximumf %257, %258 : vector<2x128xf32>
    %260 = arith.truncf %259 : vector<2x128xf32> to vector<2x128xbf16>
    %c7_223 = arith.constant 7 : index
    %c0_224 = arith.constant 0 : index
    %c0_225 = arith.constant 0 : index
    %261 = vector.load %arg3[%c7_223, %c0_224, %c0_225] : memref<8x16x2xbf16, #tpu.memory_space<vmem>>, vector<1x16x2xbf16>
    %262 = vector.shape_cast %261 : vector<1x16x2xbf16> to vector<16x2xbf16>
    %cst_226 = arith.constant dense<0.000000e+00> : vector<16x128xf32>
    %263 = tpu.matmul %262, %260, %cst_226 {dimension_numbers = #tpu.dot_dimension_numbers<[1], [0], [0], [1], [0, 0, 1, 1], [], []>} : vector<16x2xbf16>, vector<2x128xbf16>, vector<16x128xf32> -> vector<16x128xf32>
    %264 = arith.addf %250, %263 : vector<16x128xf32>
    %265 = arith.truncf %264 : vector<16x128xf32> to vector<16x128xbf16>
    %c0_227 = arith.constant 0 : index
    %c0_228 = arith.constant 0 : index
    %266 = vector.load %arg21[%c0_227, %c0_228] : memref<1x256xf32, #tpu.memory_space<vmem>>, vector<1x256xf32>
    %c0_229 = arith.constant 0 : index
    %c0_230 = arith.constant 0 : index
    %c0_231 = arith.constant 0 : index
    %267 = vector.load %arg1[%c0_229, %c0_230, %c0_231] : memref<3x16x16xbf16, #tpu.memory_space<vmem>>, vector<1x16x16xbf16>
    %268 = vector.shape_cast %267 : vector<1x16x16xbf16> to vector<16x16xbf16>
    %cst_232 = arith.constant dense<0.000000e+00> : vector<16x128xf32>
    %269 = tpu.matmul %268, %265, %cst_232 {dimension_numbers = #tpu.dot_dimension_numbers<[1], [0], [0], [1], [0, 0, 1, 1], [], []>} : vector<16x16xbf16>, vector<16x128xbf16>, vector<16x128xf32> -> vector<16x128xf32>
    %270 = arith.truncf %269 : vector<16x128xf32> to vector<16x128xbf16>
    %c0_233 = arith.constant 0 : index
    %c0_234 = arith.constant 0 : index
    %c0_235 = arith.constant 0 : index
    %271 = vector.load %arg20[%c0_233, %c0_234, %c0_235] : memref<3x128x256xbf16, #tpu.memory_space<vmem>>, vector<1x128x256xbf16>
    %272 = vector.shape_cast %271 : vector<1x128x256xbf16> to vector<128x256xbf16>
    %cst_236 = arith.constant dense<0.000000e+00> : vector<16x256xf32>
    %273 = tpu.matmul %270, %272, %cst_236 {dimension_numbers = #tpu.dot_dimension_numbers<[1], [0], [0], [1], [0, 0, 1, 1], [], []>} : vector<16x128xbf16>, vector<128x256xbf16>, vector<16x256xf32> -> vector<16x256xf32>
    %274 = vector.broadcast %266 : vector<1x256xf32> to vector<16x256xf32>
    %275 = arith.addf %274, %273 : vector<16x256xf32>
    %c1_237 = arith.constant 1 : index
    %c0_238 = arith.constant 0 : index
    %c0_239 = arith.constant 0 : index
    %276 = vector.load %arg20[%c1_237, %c0_238, %c0_239] : memref<3x128x256xbf16, #tpu.memory_space<vmem>>, vector<1x128x256xbf16>
    %277 = vector.shape_cast %276 : vector<1x128x256xbf16> to vector<128x256xbf16>
    %cst_240 = arith.constant dense<0.000000e+00> : vector<16x256xf32>
    %278 = tpu.matmul %265, %277, %cst_240 {dimension_numbers = #tpu.dot_dimension_numbers<[1], [0], [0], [1], [0, 0, 1, 1], [], []>} : vector<16x128xbf16>, vector<128x256xbf16>, vector<16x256xf32> -> vector<16x256xf32>
    %279 = arith.addf %275, %278 : vector<16x256xf32>
    %c2_241 = arith.constant 2 : index
    %c0_242 = arith.constant 0 : index
    %c0_243 = arith.constant 0 : index
    %280 = vector.load %arg1[%c2_241, %c0_242, %c0_243] : memref<3x16x16xbf16, #tpu.memory_space<vmem>>, vector<1x16x16xbf16>
    %281 = vector.shape_cast %280 : vector<1x16x16xbf16> to vector<16x16xbf16>
    %cst_244 = arith.constant dense<0.000000e+00> : vector<16x128xf32>
    %282 = tpu.matmul %281, %265, %cst_244 {dimension_numbers = #tpu.dot_dimension_numbers<[1], [0], [0], [1], [0, 0, 1, 1], [], []>} : vector<16x16xbf16>, vector<16x128xbf16>, vector<16x128xf32> -> vector<16x128xf32>
    %283 = arith.truncf %282 : vector<16x128xf32> to vector<16x128xbf16>
    %c2_245 = arith.constant 2 : index
    %c0_246 = arith.constant 0 : index
    %c0_247 = arith.constant 0 : index
    %284 = vector.load %arg20[%c2_245, %c0_246, %c0_247] : memref<3x128x256xbf16, #tpu.memory_space<vmem>>, vector<1x128x256xbf16>
    %285 = vector.shape_cast %284 : vector<1x128x256xbf16> to vector<128x256xbf16>
    %cst_248 = arith.constant dense<0.000000e+00> : vector<16x256xf32>
    %286 = tpu.matmul %283, %285, %cst_248 {dimension_numbers = #tpu.dot_dimension_numbers<[1], [0], [0], [1], [0, 0, 1, 1], [], []>} : vector<16x128xbf16>, vector<128x256xbf16>, vector<16x256xf32> -> vector<16x256xf32>
    %287 = arith.addf %279, %286 : vector<16x256xf32>
    %cst_249 = arith.constant 0.000000e+00 : f32
    %288 = vector.broadcast %cst_249 : f32 to vector<16x256xf32>
    %289 = arith.maximumf %287, %288 : vector<16x256xf32>
    %290 = arith.truncf %289 : vector<16x256xf32> to vector<16x256xbf16>
    %c0_250 = arith.constant 0 : index
    %c0_251 = arith.constant 0 : index
    %291 = vector.load %arg23[%c0_250, %c0_251] : memref<1x16xf32, #tpu.memory_space<vmem>>, vector<1x16xf32>
    %c0_252 = arith.constant 0 : index
    %c0_253 = arith.constant 0 : index
    %c0_254 = arith.constant 0 : index
    %292 = vector.load %arg1[%c0_252, %c0_253, %c0_254] : memref<3x16x16xbf16, #tpu.memory_space<vmem>>, vector<1x16x16xbf16>
    %293 = vector.shape_cast %292 : vector<1x16x16xbf16> to vector<16x16xbf16>
    %cst_255 = arith.constant dense<0.000000e+00> : vector<16x256xf32>
    %294 = tpu.matmul %293, %290, %cst_255 {dimension_numbers = #tpu.dot_dimension_numbers<[1], [0], [0], [1], [0, 0, 1, 1], [], []>} : vector<16x16xbf16>, vector<16x256xbf16>, vector<16x256xf32> -> vector<16x256xf32>
    %295 = arith.truncf %294 : vector<16x256xf32> to vector<16x256xbf16>
    %c0_256 = arith.constant 0 : index
    %c0_257 = arith.constant 0 : index
    %c0_258 = arith.constant 0 : index
    %296 = vector.load %arg22[%c0_256, %c0_257, %c0_258] : memref<3x256x16xbf16, #tpu.memory_space<vmem>>, vector<1x256x16xbf16>
    %297 = vector.shape_cast %296 : vector<1x256x16xbf16> to vector<256x16xbf16>
    %cst_259 = arith.constant dense<0.000000e+00> : vector<16x16xf32>
    %298 = tpu.matmul %295, %297, %cst_259 {dimension_numbers = #tpu.dot_dimension_numbers<[1], [0], [0], [1], [0, 0, 1, 1], [], []>} : vector<16x256xbf16>, vector<256x16xbf16>, vector<16x16xf32> -> vector<16x16xf32>
    %299 = vector.broadcast %291 : vector<1x16xf32> to vector<16x16xf32>
    %300 = arith.addf %299, %298 : vector<16x16xf32>
    %c1_260 = arith.constant 1 : index
    %c0_261 = arith.constant 0 : index
    %c0_262 = arith.constant 0 : index
    %301 = vector.load %arg22[%c1_260, %c0_261, %c0_262] : memref<3x256x16xbf16, #tpu.memory_space<vmem>>, vector<1x256x16xbf16>
    %302 = vector.shape_cast %301 : vector<1x256x16xbf16> to vector<256x16xbf16>
    %cst_263 = arith.constant dense<0.000000e+00> : vector<16x16xf32>
    %303 = tpu.matmul %290, %302, %cst_263 {dimension_numbers = #tpu.dot_dimension_numbers<[1], [0], [0], [1], [0, 0, 1, 1], [], []>} : vector<16x256xbf16>, vector<256x16xbf16>, vector<16x16xf32> -> vector<16x16xf32>
    %304 = arith.addf %300, %303 : vector<16x16xf32>
    %c2_264 = arith.constant 2 : index
    %c0_265 = arith.constant 0 : index
    %c0_266 = arith.constant 0 : index
    %305 = vector.load %arg1[%c2_264, %c0_265, %c0_266] : memref<3x16x16xbf16, #tpu.memory_space<vmem>>, vector<1x16x16xbf16>
    %306 = vector.shape_cast %305 : vector<1x16x16xbf16> to vector<16x16xbf16>
    %cst_267 = arith.constant dense<0.000000e+00> : vector<16x256xf32>
    %307 = tpu.matmul %306, %290, %cst_267 {dimension_numbers = #tpu.dot_dimension_numbers<[1], [0], [0], [1], [0, 0, 1, 1], [], []>} : vector<16x16xbf16>, vector<16x256xbf16>, vector<16x256xf32> -> vector<16x256xf32>
    %308 = arith.truncf %307 : vector<16x256xf32> to vector<16x256xbf16>
    %c2_268 = arith.constant 2 : index
    %c0_269 = arith.constant 0 : index
    %c0_270 = arith.constant 0 : index
    %309 = vector.load %arg22[%c2_268, %c0_269, %c0_270] : memref<3x256x16xbf16, #tpu.memory_space<vmem>>, vector<1x256x16xbf16>
    %310 = vector.shape_cast %309 : vector<1x256x16xbf16> to vector<256x16xbf16>
    %cst_271 = arith.constant dense<0.000000e+00> : vector<16x16xf32>
    %311 = tpu.matmul %308, %310, %cst_271 {dimension_numbers = #tpu.dot_dimension_numbers<[1], [0], [0], [1], [0, 0, 1, 1], [], []>} : vector<16x256xbf16>, vector<256x16xbf16>, vector<16x16xf32> -> vector<16x16xf32>
    %312 = arith.addf %304, %311 : vector<16x16xf32>
    %cst_272 = arith.constant 0.000000e+00 : f32
    %313 = vector.broadcast %cst_272 : f32 to vector<16x16xf32>
    %314 = arith.subf %313, %312 : vector<16x16xf32>
    %315 = math.exp %314 : vector<16x16xf32>
    %cst_273 = arith.constant 1.000000e+00 : f32
    %316 = vector.broadcast %cst_273 : f32 to vector<16x16xf32>
    %317 = arith.addf %316, %315 : vector<16x16xf32>
    %cst_274 = arith.constant 1.000000e+00 : f32
    %318 = vector.broadcast %cst_274 : f32 to vector<16x16xf32>
    %319 = arith.divf %318, %317 : vector<16x16xf32>
    %c0_275 = arith.constant 0 : index
    %c0_276 = arith.constant 0 : index
    %320 = vector.load %arg24[%c0_275, %c0_276] : memref<16x16xf32, #tpu.memory_space<vmem>>, vector<16x16xf32>
    tpu.vector_store %arg24[%c0_275, %c0_276], %319 {strides = array<i32>} : memref<16x16xf32, #tpu.memory_space<vmem>>, vector<16x16xf32>,
    return
  }
}

</mosaic_0001>

<llo_original>
// kernel: conv_autoencoder_forward.1
$region0: #{conv_autoencoder_forward.1}
  #allocation0 [shape = 'u32[]', space=smem, size = 0x4, offset = 0x4, fixed_abs, tag = 'smem constant byte address 0x4 - core index']
  #allocation1 [shape = 'u32[144,128]{1,0:T(1,128)}', space=vmem, size = 0x12000, scoped, tag = 'internal scratch']
  %s0 = inlined_call_operand.vmem [shape: bf16[16,16], index: 0, kind: input, shape index: {}]
  %s1 = inlined_call_operand.vmem [shape: bf16[3,16,16], index: 1, kind: input, shape index: {}]
  %s2 = inlined_call_operand.vmem [shape: bf16[8,2,16], index: 2, kind: input, shape index: {}]
  %s3 = inlined_call_operand.vmem [shape: bf16[8,16,2], index: 3, kind: input, shape index: {}]
  %s4 = inlined_call_operand.vmem [shape: bf16[3,16,256], index: 4, kind: input, shape index: {}]
  %s5 = inlined_call_operand.vmem [shape: f32[1,256], index: 5, kind: input, shape index: {}]
  %s6 = inlined_call_operand.vmem [shape: bf16[3,256,128], index: 6, kind: input, shape index: {}]
  %s7 = inlined_call_operand.vmem [shape: f32[1,128], index: 7, kind: input, shape index: {}]
  %s8 = inlined_call_operand.vmem [shape: bf16[8,128,32], index: 8, kind: input, shape index: {}]
  %s9 = inlined_call_operand.vmem [shape: f32[1,32], index: 9, kind: input, shape index: {}]
  %s10 = inlined_call_operand.vmem [shape: bf16[32,16], index: 10, kind: input, shape index: {}]
  %s11 = inlined_call_operand.vmem [shape: f32[1,16], index: 11, kind: input, shape index: {}]
  %s12 = inlined_call_operand.vmem [shape: bf16[16,8], index: 12, kind: input, shape index: {}]
  %s13 = inlined_call_operand.vmem [shape: f32[1,8], index: 13, kind: input, shape index: {}]
  %s14 = inlined_call_operand.vmem [shape: bf16[8,16], index: 14, kind: input, shape index: {}]
  %s15 = inlined_call_operand.vmem [shape: f32[1,16], index: 15, kind: input, shape index: {}]
  %s16 = inlined_call_operand.vmem [shape: bf16[16,32], index: 16, kind: input, shape index: {}]
  %s17 = inlined_call_operand.vmem [shape: f32[1,32], index: 17, kind: input, shape index: {}]
  %s18 = inlined_call_operand.vmem [shape: bf16[8,32,128], index: 18, kind: input, shape index: {}]
  %s19 = inlined_call_operand.vmem [shape: f32[8,1,128], index: 19, kind: input, shape index: {}]
  %s20 = inlined_call_operand.vmem [shape: bf16[3,128,256], index: 20, kind: input, shape index: {}]
  %s21 = inlined_call_operand.vmem [shape: f32[1,256], index: 21, kind: input, shape index: {}]
  %s22 = inlined_call_operand.vmem [shape: bf16[3,256,16], index: 22, kind: input, shape index: {}]
  %s23 = inlined_call_operand.vmem [shape: f32[1,16], index: 23, kind: input, shape index: {}]
  %s24 = inlined_call_operand.hbm [shape: f32[16,16], index: 24, kind: output, shape index: {}]
  %s25 = sld [smem:[#allocation0]]
  $region106: #{conv_autoencoder_forward.1} parent=0
    _
  %s27 = ssub.s32 1, %s25
  %s28 = scalar_select 0, %s27, %s25
  $region1: #{conv_autoencoder_forward.1} parent=0
    #allocation2 [shape = 'u8[8192]{0}', space=vmem, size = 0x2000, scoped, tag = 'output window, operand 0, single buffered']
    #allocation3 [shape = 's32[1]{0}', space=sflag, size = 0x4, scoped, tag = 'scoped memory for conv_autoencoder_forward.1']
    %29 = vsyncpa [#allocation3], 0
    // Predicated region
    $region2: #{conv_autoencoder_forward.1} parent=1 // pred_check
      _
    $region3: #{conv_autoencoder_forward.1} parent=1 // pred_check_branch
      %31 = sbr.rel (0) target = $region5
    $region4: #{conv_autoencoder_forward.1} parent=1 // pred_region
      _
    $region5: #{conv_autoencoder_forward.1} parent=1 // pred_fallthru
      _
    // Predicated region
    $region6: #{conv_autoencoder_forward.1} parent=1 // pred_check
      _
    $region7: #{conv_autoencoder_forward.1} parent=1 // pred_check_branch
      %33 = sbr.rel (0) target = $region9
    $region8: #{conv_autoencoder_forward.1} parent=1 // pred_region
      _
    $region9: #{conv_autoencoder_forward.1} parent=1 // pred_fallthru
      _
    // Predicated region
    $region10: #{conv_autoencoder_forward.1} parent=1 // pred_check
      _
    $region11: #{conv_autoencoder_forward.1} parent=1 // pred_check_branch
      %35 = sbr.rel (0) target = $region13
    $region12: #{conv_autoencoder_forward.1} parent=1 // pred_region
      _
    $region13: #{conv_autoencoder_forward.1} parent=1 // pred_fallthru
      _
    // Predicated region
    $region14: #{conv_autoencoder_forward.1} parent=1 // pred_check
      _
    $region15: #{conv_autoencoder_forward.1} parent=1 // pred_check_branch
      %37 = sbr.rel (0) target = $region17
    $region16: #{conv_autoencoder_forward.1} parent=1 // pred_region
      _
    $region17: #{conv_autoencoder_forward.1} parent=1 // pred_fallthru
      _
    // Predicated region
    $region18: #{conv_autoencoder_forward.1} parent=1 // pred_check
      _
    $region19: #{conv_autoencoder_forward.1} parent=1 // pred_check_branch
      %39 = sbr.rel (0) target = $region21
    $region20: #{conv_autoencoder_forward.1} parent=1 // pred_region
      _
    $region21: #{conv_autoencoder_forward.1} parent=1 // pred_fallthru
      _
    // Predicated region
    $region22: #{conv_autoencoder_forward.1} parent=1 // pred_check
      _
    $region23: #{conv_autoencoder_forward.1} parent=1 // pred_check_branch
      %41 = sbr.rel (0) target = $region25
    $region24: #{conv_autoencoder_forward.1} parent=1 // pred_region
      _
    $region25: #{conv_autoencoder_forward.1} parent=1 // pred_fallthru
      _
    // Predicated region
    $region26: #{conv_autoencoder_forward.1} parent=1 // pred_check
      _
    $region27: #{conv_autoencoder_forward.1} parent=1 // pred_check_branch
      %43 = sbr.rel (0) target = $region29
    $region28: #{conv_autoencoder_forward.1} parent=1 // pred_region
      _
    $region29: #{conv_autoencoder_forward.1} parent=1 // pred_fallthru
      _
    // Predicated region
    $region30: #{conv_autoencoder_forward.1} parent=1 // pred_check
      _
    $region31: #{conv_autoencoder_forward.1} parent=1 // pred_check_branch
      %45 = sbr.rel (0) target = $region33
    $region32: #{conv_autoencoder_forward.1} parent=1 // pred_region
      _
    $region33: #{conv_autoencoder_forward.1} parent=1 // pred_fallthru
      _
    // Predicated region
    $region34: #{conv_autoencoder_forward.1} parent=1 // pred_check
      _
    $region35: #{conv_autoencoder_forward.1} parent=1 // pred_check_branch
      %47 = sbr.rel (0) target = $region37
    $region36: #{conv_autoencoder_forward.1} parent=1 // pred_region
      _
    $region37: #{conv_autoencoder_forward.1} parent=1 // pred_fallthru
      _
    // Predicated region
    $region38: #{conv_autoencoder_forward.1} parent=1 // pred_check
      _
    $region39: #{conv_autoencoder_forward.1} parent=1 // pred_check_branch
      %49 = sbr.rel (0) target = $region41
    $region40: #{conv_autoencoder_forward.1} parent=1 // pred_region
      _
    $region41: #{conv_autoencoder_forward.1} parent=1 // pred_fallthru
      _
    // Predicated region
    $region42: #{conv_autoencoder_forward.1} parent=1 // pred_check
      _
    $region43: #{conv_autoencoder_forward.1} parent=1 // pred_check_branch
      %51 = sbr.rel (0) target = $region45
    $region44: #{conv_autoencoder_forward.1} parent=1 // pred_region
      _
    $region45: #{conv_autoencoder_forward.1} parent=1 // pred_fallthru
      _
    // Predicated region
    $region46: #{conv_autoencoder_forward.1} parent=1 // pred_check
      _
    $region47: #{conv_autoencoder_forward.1} parent=1 // pred_check_branch
      %53 = sbr.rel (0) target = $region49
    $region48: #{conv_autoencoder_forward.1} parent=1 // pred_region
      _
    $region49: #{conv_autoencoder_forward.1} parent=1 // pred_fallthru
      _
    // Predicated region
    $region50: #{conv_autoencoder_forward.1} parent=1 // pred_check
      _
    $region51: #{conv_autoencoder_forward.1} parent=1 // pred_check_branch
      %55 = sbr.rel (0) target = $region53
    $region52: #{conv_autoencoder_forward.1} parent=1 // pred_region
      _
    $region53: #{conv_autoencoder_forward.1} parent=1 // pred_fallthru
      _
    // Predicated region
    $region54: #{conv_autoencoder_forward.1} parent=1 // pred_check
      _
    $region55: #{conv_autoencoder_forward.1} parent=1 // pred_check_branch
      %57 = sbr.rel (0) target = $region57
    $region56: #{conv_autoencoder_forward.1} parent=1 // pred_region
      _
    $region57: #{conv_autoencoder_forward.1} parent=1 // pred_fallthru
      _
    // Predicated region
    $region58: #{conv_autoencoder_forward.1} parent=1 // pred_check
      _
    $region59: #{conv_autoencoder_forward.1} parent=1 // pred_check_branch
      %59 = sbr.rel (0) target = $region61
    $region60: #{conv_autoencoder_forward.1} parent=1 // pred_region
      _
    $region61: #{conv_autoencoder_forward.1} parent=1 // pred_fallthru
      _
    // Predicated region
    $region62: #{conv_autoencoder_forward.1} parent=1 // pred_check
      _
    $region63: #{conv_autoencoder_forward.1} parent=1 // pred_check_branch
      %61 = sbr.rel (0) target = $region65
    $region64: #{conv_autoencoder_forward.1} parent=1 // pred_region
      _
    $region65: #{conv_autoencoder_forward.1} parent=1 // pred_fallthru
      _
    // Predicated region
    $region66: #{conv_autoencoder_forward.1} parent=1 // pred_check
      _
    $region67: #{conv_autoencoder_forward.1} parent=1 // pred_check_branch
      %63 = sbr.rel (0) target = $region69
    $region68: #{conv_autoencoder_forward.1} parent=1 // pred_region
      _
    $region69: #{conv_autoencoder_forward.1} parent=1 // pred_fallthru
      _
    // Predicated region
    $region70: #{conv_autoencoder_forward.1} parent=1 // pred_check
      _
    $region71: #{conv_autoencoder_forward.1} parent=1 // pred_check_branch
      %65 = sbr.rel (0) target = $region73
    $region72: #{conv_autoencoder_forward.1} parent=1 // pred_region
      _
    $region73: #{conv_autoencoder_forward.1} parent=1 // pred_fallthru
      _
    // Predicated region
    $region74: #{conv_autoencoder_forward.1} parent=1 // pred_check
      _
    $region75: #{conv_autoencoder_forward.1} parent=1 // pred_check_branch
      %67 = sbr.rel (0) target = $region77
    $region76: #{conv_autoencoder_forward.1} parent=1 // pred_region
      _
    $region77: #{conv_autoencoder_forward.1} parent=1 // pred_fallthru
      _
    // Predicated region
    $region78: #{conv_autoencoder_forward.1} parent=1 // pred_check
      _
    $region79: #{conv_autoencoder_forward.1} parent=1 // pred_check_branch
      %69 = sbr.rel (0) target = $region81
    $region80: #{conv_autoencoder_forward.1} parent=1 // pred_region
      _
    $region81: #{conv_autoencoder_forward.1} parent=1 // pred_fallthru
      _
    // Predicated region
    $region82: #{conv_autoencoder_forward.1} parent=1 // pred_check
      _
    $region83: #{conv_autoencoder_forward.1} parent=1 // pred_check_branch
      %71 = sbr.rel (0) target = $region85
    $region84: #{conv_autoencoder_forward.1} parent=1 // pred_region
      _
    $region85: #{conv_autoencoder_forward.1} parent=1 // pred_fallthru
      _
    // Predicated region
    $region86: #{conv_autoencoder_forward.1} parent=1 // pred_check
      _
    $region87: #{conv_autoencoder_forward.1} parent=1 // pred_check_branch
      %73 = sbr.rel (0) target = $region89
    $region88: #{conv_autoencoder_forward.1} parent=1 // pred_region
      _
    $region89: #{conv_autoencoder_forward.1} parent=1 // pred_fallthru
      _
    // Predicated region
    $region90: #{conv_autoencoder_forward.1} parent=1 // pred_check
      _
    $region91: #{conv_autoencoder_forward.1} parent=1 // pred_check_branch
      %75 = sbr.rel (0) target = $region93
    $region92: #{conv_autoencoder_forward.1} parent=1 // pred_region
      _
    $region93: #{conv_autoencoder_forward.1} parent=1 // pred_fallthru
      _
    // Predicated region
    $region94: #{conv_autoencoder_forward.1} parent=1 // pred_check
      _
    $region95: #{conv_autoencoder_forward.1} parent=1 // pred_check_branch
      %77 = sbr.rel (0) target = $region97
    $region96: #{conv_autoencoder_forward.1} parent=1 // pred_region
      _
    $region97: #{conv_autoencoder_forward.1} parent=1 // pred_fallthru
      _
    %v79 = vld [vmem:[%s0] sm:$0xf]
    %v80 = vld [vmem:[%s0 + $0x4] sm:$0xf]
    %v81 = vld [vmem:[%s5] sm:$0x3]
    %v82 = vld [vmem:[%s1] sm:$0xf]
    %v83 = vld [vmem:[%s1 + $0x4] sm:$0xf]
    %v86 = vunpack.c.l.b16 %v82
    %v87 = vunpack.c.l.b16 %v83
    %v88 = vpack.c.b16 %v87, %v86
    %v91 = vunpack.c.l.b16 %v79
    %v92 = vunpack.c.l.b16 %v80
    %v93 = vpack.c.b16 %v92, %v91
    %vm95 = vcmask 130048
    %v97 = vsel %vm95, %v88, 0
    %99 = vmatprep.subr.bf16.mxu0 0
    %100 = vmatpush1.bf16.msra.mxu0 0
    %101 = vmatprep.subr.bf16.mxu0 0
    %102 = vmatpush1.bf16.msra.mxu0 0
    %103 = vmatprep.subr.bf16.mxu0 0
    %104 = vmatpush1.bf16.msra.mxu0 0
    %105 = vmatprep.subr.bf16.mxu0 0
    %106 = vmatpush1.bf16.msra.mxu0 0
    %107 = vmatprep.subr.bf16.mxu0 0
    %108 = vmatpush1.bf16.msra.mxu0 0
    %109 = vmatprep.subr.bf16.mxu0 0
    %110 = vmatpush1.bf16.msra.mxu0 0
    %111 = vmatprep.subr.bf16.mxu0 0
    %112 = vmatpush1.bf16.msra.mxu0 0
    %113 = vmatprep.subr.bf16.mxu0 0
    %114 = vmatpush1.bf16.msra.mxu0 %v93
    %115 = vmatprep.subr.bf16.mxu0 0
    %116 = vmatpush2.bf16.msra.mxu0 0
    %117 = vmatprep.subr.bf16.mxu0 0
    %118 = vmatpush2.bf16.msra.mxu0 0
    %119 = vmatprep.subr.bf16.mxu0 0
    %120 = vmatpush2.bf16.msra.mxu0 0
    %121 = vmatprep.subr.bf16.mxu0 0
    %122 = vmatpush2.bf16.msra.mxu0 0
    %123 = vmatprep.subr.bf16.mxu0 0
    %124 = vmatpush2.bf16.msra.mxu0 0
    %125 = vmatprep.subr.bf16.mxu0 0
    %126 = vmatpush2.bf16.msra.mxu0 0
    %127 = vmatprep.subr.bf16.mxu0 0
    %128 = vmatpush2.bf16.msra.mxu0 0
    %129 = vmatprep.subr.bf16.mxu0 0
    %130 = vmatpush2.bf16.msra.mxu0 0
    %131 = vmatprep.mubr.bf16.mxu0 0
    %132 = vmatmul.mubr.bf16.gmra.mxu0 %v97
    %v133 = vpop.f32.mrf.mxu0
    %v134 = vadd.f32 0.0, %v133
    %v135 = vpop.f32.mrf.mxu0
    %v136 = vpop.f32.mrf.mxu0
    %v137 = vadd.f32 0.0, %v136
    %v138 = vpop.f32.mrf.mxu0
    %139 = vdwg.mxu0
    %v140 = vpack.c.bf16 %v137, %v134
    %v141 = vld [vmem:[%s4] sm:$0xff]
    %v142 = vld [vmem:[%s4 + $0x8] sm:$0xff]
    %v145 = vunpack.c.l.b16 %v141
    %v146 = vunpack.c.h.b16 %v141
    %v147 = vunpack.c.l.b16 %v142
    %v148 = vunpack.c.h.b16 %v142
    %v149 = vpack.c.b16 %v147, %v145
    %v150 = vpack.c.b16 %v148, %v146
    %v154 = vsel %vm95, %v140, 0
    %156 = vmatprep.subr.bf16.mxu0 0
    %157 = vmatpush1.bf16.msra.mxu0 0
    %158 = vmatprep.subr.bf16.mxu0 0
    %159 = vmatpush1.bf16.msra.mxu0 0
    %160 = vmatprep.subr.bf16.mxu0 0
    %161 = vmatpush1.bf16.msra.mxu0 0
    %162 = vmatprep.subr.bf16.mxu0 0
    %163 = vmatpush1.bf16.msra.mxu0 0
    %164 = vmatprep.subr.bf16.mxu0 0
    %165 = vmatpush1.bf16.msra.mxu0 0
    %166 = vmatprep.subr.bf16.mxu0 0
    %167 = vmatpush1.bf16.msra.mxu0 0
    %168 = vmatprep.subr.bf16.mxu0 0
    %169 = vmatpush1.bf16.msra.mxu0 0
    %170 = vmatprep.subr.bf16.mxu0 %v150
    %171 = vmatpush1.bf16.msra.mxu0 %v149
    %172 = vmatprep.subr.bf16.mxu0 0
    %173 = vmatpush2.bf16.msra.mxu0 0
    %174 = vmatprep.subr.bf16.mxu0 0
    %175 = vmatpush2.bf16.msra.mxu0 0
    %176 = vmatprep.subr.bf16.mxu0 0
    %177 = vmatpush2.bf16.msra.mxu0 0
    %178 = vmatprep.subr.bf16.mxu0 0
    %179 = vmatpush2.bf16.msra.mxu0 0
    %180 = vmatprep.subr.bf16.mxu0 0
    %181 = vmatpush2.bf16.msra.mxu0 0
    %182 = vmatprep.subr.bf16.mxu0 0
    %183 = vmatpush2.bf16.msra.mxu0 0
    %184 = vmatprep.subr.bf16.mxu0 0
    %185 = vmatpush2.bf16.msra.mxu0 0
    %186 = vmatprep.subr.bf16.mxu0 0
    %187 = vmatpush2.bf16.msra.mxu0 0
    %188 = vmatprep.mubr.bf16.mxu0 0
    %189 = vmatmul.mubr.bf16.gmra.mxu0 %v154
    %v190 = vpop.f32.mrf.mxu0
    %v191 = vadd.f32 0.0, %v190
    %v192 = vpop.f32.mrf.mxu0
    %v193 = vadd.f32 0.0, %v192
    %v194 = vpop.f32.mrf.mxu0
    %v195 = vadd.f32 0.0, %v194
    %v196 = vpop.f32.mrf.mxu0
    %v197 = vadd.f32 0.0, %v196
    %198 = vdwg.mxu0
    %v200 = vlaneseq
    %v201 = vshrl.u32 %v200, 7
    %v202 = vsub.s32 0, %v201
    %v203 = vrot.slane %v81, %v202
    %v204 = vlaneseq
    %v205 = vshrl.u32 %v204, 7
    %v206 = vsub.s32 1, %v205
    %v207 = vrot.slane %v81, %v206
    %v210 = vadd.f32 %v203, %v191
    %v211 = vadd.f32 %v207, %v193
    %v212 = vadd.f32 %v203, %v195
    %v213 = vadd.f32 %v207, %v197
    %s214 = scalar_lea.vmem %s4, 16
    %v215 = vld [vmem:[%s214] sm:$0xff]
    %v216 = vld [vmem:[%s214 + $0x8] sm:$0xff]
    %v219 = vunpack.c.l.b16 %v215
    %v220 = vunpack.c.h.b16 %v215
    %v221 = vunpack.c.l.b16 %v216
    %v222 = vunpack.c.h.b16 %v216
    %v223 = vpack.c.b16 %v221, %v219
    %v224 = vpack.c.b16 %v222, %v220
    %v228 = vsel %vm95, %v93, 0
    %230 = vmatprep.subr.bf16.mxu0 0
    %231 = vmatpush1.bf16.msra.mxu0 0
    %232 = vmatprep.subr.bf16.mxu0 0
    %233 = vmatpush1.bf16.msra.mxu0 0
    %234 = vmatprep.subr.bf16.mxu0 0
    %235 = vmatpush1.bf16.msra.mxu0 0
    %236 = vmatprep.subr.bf16.mxu0 0
    %237 = vmatpush1.bf16.msra.mxu0 0
    %238 = vmatprep.subr.bf16.mxu0 0
    %239 = vmatpush1.bf16.msra.mxu0 0
    %240 = vmatprep.subr.bf16.mxu0 0
    %241 = vmatpush1.bf16.msra.mxu0 0
    %242 = vmatprep.subr.bf16.mxu0 0
    %243 = vmatpush1.bf16.msra.mxu0 0
    %244 = vmatprep.subr.bf16.mxu0 %v224
    %245 = vmatpush1.bf16.msra.mxu0 %v223
    %246 = vmatprep.subr.bf16.mxu0 0
    %247 = vmatpush2.bf16.msra.mxu0 0
    %248 = vmatprep.subr.bf16.mxu0 0
    %249 = vmatpush2.bf16.msra.mxu0 0
    %250 = vmatprep.subr.bf16.mxu0 0
    %251 = vmatpush2.bf16.msra.mxu0 0
    %252 = vmatprep.subr.bf16.mxu0 0
    %253 = vmatpush2.bf16.msra.mxu0 0
    %254 = vmatprep.subr.bf16.mxu0 0
    %255 = vmatpush2.bf16.msra.mxu0 0
    %256 = vmatprep.subr.bf16.mxu0 0
    %257 = vmatpush2.bf16.msra.mxu0 0
    %258 = vmatprep.subr.bf16.mxu0 0
    %259 = vmatpush2.bf16.msra.mxu0 0
    %260 = vmatprep.subr.bf16.mxu0 0
    %261 = vmatpush2.bf16.msra.mxu0 0
    %262 = vmatprep.mubr.bf16.mxu0 0
    %263 = vmatmul.mubr.bf16.gmra.mxu0 %v228
    %v264 = vpop.f32.mrf.mxu0
    %v265 = vadd.f32 0.0, %v264
    %v266 = vpop.f32.mrf.mxu0
    %v267 = vadd.f32 0.0, %v266
    %v268 = vpop.f32.mrf.mxu0
    %v269 = vadd.f32 0.0, %v268
    %v270 = vpop.f32.mrf.mxu0
    %v271 = vadd.f32 0.0, %v270
    %272 = vdwg.mxu0
    %v273 = vadd.f32 %v210, %v265
    %v274 = vadd.f32 %v211, %v267
    %v275 = vadd.f32 %v212, %v269
    %v276 = vadd.f32 %v213, %v271
    %s277 = scalar_lea.vmem %s1, 16
    %v278 = vld [vmem:[%s277] sm:$0xf]
    %v279 = vld [vmem:[%s277 + $0x4] sm:$0xf]
    %v282 = vunpack.c.l.b16 %v278
    %v283 = vunpack.c.l.b16 %v279
    %v284 = vpack.c.b16 %v283, %v282
    %v286 = vsel %vm95, %v284, 0
    %288 = vmatprep.subr.bf16.mxu0 0
    %289 = vmatpush1.bf16.msra.mxu0 0
    %290 = vmatprep.subr.bf16.mxu0 0
    %291 = vmatpush1.bf16.msra.mxu0 0
    %292 = vmatprep.subr.bf16.mxu0 0
    %293 = vmatpush1.bf16.msra.mxu0 0
    %294 = vmatprep.subr.bf16.mxu0 0
    %295 = vmatpush1.bf16.msra.mxu0 0
    %296 = vmatprep.subr.bf16.mxu0 0
    %297 = vmatpush1.bf16.msra.mxu0 0
    %298 = vmatprep.subr.bf16.mxu0 0
    %299 = vmatpush1.bf16.msra.mxu0 0
    %300 = vmatprep.subr.bf16.mxu0 0
    %301 = vmatpush1.bf16.msra.mxu0 0
    %302 = vmatprep.subr.bf16.mxu0 0
    %303 = vmatpush1.bf16.msra.mxu0 %v93
    %304 = vmatprep.subr.bf16.mxu0 0
    %305 = vmatpush2.bf16.msra.mxu0 0
    %306 = vmatprep.subr.bf16.mxu0 0
    %307 = vmatpush2.bf16.msra.mxu0 0
    %308 = vmatprep.subr.bf16.mxu0 0
    %309 = vmatpush2.bf16.msra.mxu0 0
    %310 = vmatprep.subr.bf16.mxu0 0
    %311 = vmatpush2.bf16.msra.mxu0 0
    %312 = vmatprep.subr.bf16.mxu0 0
    %313 = vmatpush2.bf16.msra.mxu0 0
    %314 = vmatprep.subr.bf16.mxu0 0
    %315 = vmatpush2.bf16.msra.mxu0 0
    %316 = vmatprep.subr.bf16.mxu0 0
    %317 = vmatpush2.bf16.msra.mxu0 0
    %318 = vmatprep.subr.bf16.mxu0 0
    %319 = vmatpush2.bf16.msra.mxu0 0
    %320 = vmatprep.mubr.bf16.mxu0 0
    %321 = vmatmul.mubr.bf16.gmra.mxu0 %v286
    %v322 = vpop.f32.mrf.mxu0
    %v323 = vadd.f32 0.0, %v322
    %v324 = vpop.f32.mrf.mxu0
    %v325 = vpop.f32.mrf.mxu0
    %v326 = vadd.f32 0.0, %v325
    %v327 = vpop.f32.mrf.mxu0
    %328 = vdwg.mxu0
    %v329 = vpack.c.bf16 %v326, %v323
    %s330 = scalar_lea.vmem %s4, 32
    %v331 = vld [vmem:[%s330] sm:$0xff]
    %v332 = vld [vmem:[%s330 + $0x8] sm:$0xff]
    %v335 = vunpack.c.l.b16 %v331
    %v336 = vunpack.c.h.b16 %v331
    %v337 = vunpack.c.l.b16 %v332
    %v338 = vunpack.c.h.b16 %v332
    %v339 = vpack.c.b16 %v337, %v335
    %v340 = vpack.c.b16 %v338, %v336
    %v344 = vsel %vm95, %v329, 0
    %346 = vmatprep.subr.bf16.mxu0 0
    %347 = vmatpush1.bf16.msra.mxu0 0
    %348 = vmatprep.subr.bf16.mxu0 0
    %349 = vmatpush1.bf16.msra.mxu0 0
    %350 = vmatprep.subr.bf16.mxu0 0
    %351 = vmatpush1.bf16.msra.mxu0 0
    %352 = vmatprep.subr.bf16.mxu0 0
    %353 = vmatpush1.bf16.msra.mxu0 0
    %354 = vmatprep.subr.bf16.mxu0 0
    %355 = vmatpush1.bf16.msra.mxu0 0
    %356 = vmatprep.subr.bf16.mxu0 0
    %357 = vmatpush1.bf16.msra.mxu0 0
    %358 = vmatprep.subr.bf16.mxu0 0
    %359 = vmatpush1.bf16.msra.mxu0 0
    %360 = vmatprep.subr.bf16.mxu0 %v340
    %361 = vmatpush1.bf16.msra.mxu0 %v339
    %362 = vmatprep.subr.bf16.mxu0 0
    %363 = vmatpush2.bf16.msra.mxu0 0
    %364 = vmatprep.subr.bf16.mxu0 0
    %365 = vmatpush2.bf16.msra.mxu0 0
    %366 = vmatprep.subr.bf16.mxu0 0
    %367 = vmatpush2.bf16.msra.mxu0 0
    %368 = vmatprep.subr.bf16.mxu0 0
    %369 = vmatpush2.bf16.msra.mxu0 0
    %370 = vmatprep.subr.bf16.mxu0 0
    %371 = vmatpush2.bf16.msra.mxu0 0
    %372 = vmatprep.subr.bf16.mxu0 0
    %373 = vmatpush2.bf16.msra.mxu0 0
    %374 = vmatprep.subr.bf16.mxu0 0
    %375 = vmatpush2.bf16.msra.mxu0 0
    %376 = vmatprep.subr.bf16.mxu0 0
    %377 = vmatpush2.bf16.msra.mxu0 0
    %378 = vmatprep.mubr.bf16.mxu0 0
    %379 = vmatmul.mubr.bf16.gmra.mxu0 %v344
    %v380 = vpop.f32.mrf.mxu0
    %v381 = vadd.f32 0.0, %v380
    %v382 = vpop.f32.mrf.mxu0
    %v383 = vadd.f32 0.0, %v382
    %v384 = vpop.f32.mrf.mxu0
    %v385 = vadd.f32 0.0, %v384
    %v386 = vpop.f32.mrf.mxu0
    %v387 = vadd.f32 0.0, %v386
    %388 = vdwg.mxu0
    %v389 = vadd.f32 %v273, %v381
    %v390 = vadd.f32 %v274, %v383
    %v391 = vadd.f32 %v275, %v385
    %v392 = vadd.f32 %v276, %v387
    %v393 = vmax.f32 %v389, 0.0
    %v394 = vmax.f32 %v390, 0.0
    %v395 = vmax.f32 %v391, 0.0
    %v396 = vmax.f32 %v392, 0.0
    %v397 = vpack.c.bf16 %v395, %v393
    %v398 = vpack.c.bf16 %v396, %v394
    %v399 = vld [vmem:[%s7] sm:$0x1]
    %400 = vmatprep.subr.bf16.mxu0 0
    %401 = vmatpush1.bf16.msra.mxu0 0
    %402 = vmatprep.subr.bf16.mxu0 0
    %403 = vmatpush1.bf16.msra.mxu0 0
    %404 = vmatprep.subr.bf16.mxu0 0
    %405 = vmatpush1.bf16.msra.mxu0 0
    %406 = vmatprep.subr.bf16.mxu0 0
    %407 = vmatpush1.bf16.msra.mxu0 0
    %408 = vmatprep.subr.bf16.mxu0 0
    %409 = vmatpush1.bf16.msra.mxu0 0
    %410 = vmatprep.subr.bf16.mxu0 0
    %411 = vmatpush1.bf16.msra.mxu0 0
    %412 = vmatprep.subr.bf16.mxu0 0
    %413 = vmatpush1.bf16.msra.mxu0 0
    %414 = vmatprep.subr.bf16.mxu0 %v398
    %415 = vmatpush1.bf16.msra.mxu0 %v397
    %416 = vmatprep.subr.bf16.mxu0 0
    %417 = vmatpush2.bf16.msra.mxu0 0
    %418 = vmatprep.subr.bf16.mxu0 0
    %419 = vmatpush2.bf16.msra.mxu0 0
    %420 = vmatprep.subr.bf16.mxu0 0
    %421 = vmatpush2.bf16.msra.mxu0 0
    %422 = vmatprep.subr.bf16.mxu0 0
    %423 = vmatpush2.bf16.msra.mxu0 0
    %424 = vmatprep.subr.bf16.mxu0 0
    %425 = vmatpush2.bf16.msra.mxu0 0
    %426 = vmatprep.subr.bf16.mxu0 0
    %427 = vmatpush2.bf16.msra.mxu0 0
    %428 = vmatprep.subr.bf16.mxu0 0
    %429 = vmatpush2.bf16.msra.mxu0 0
    %430 = vmatprep.subr.bf16.mxu0 0
    %431 = vmatpush2.bf16.msra.mxu0 0
    %432 = vmatprep.mubr.bf16.mxu0 0
    %433 = vmatmul.mubr.bf16.gmra.mxu0 %v97
    %v434 = vpop.f32.mrf.mxu0
    %v435 = vadd.f32 0.0, %v434
    %v436 = vpop.f32.mrf.mxu0
    %v437 = vadd.f32 0.0, %v436
    %v438 = vpop.f32.mrf.mxu0
    %v439 = vadd.f32 0.0, %v438
    %v440 = vpop.f32.mrf.mxu0
    %v441 = vadd.f32 0.0, %v440
    %442 = vdwg.mxu0
    %v443 = vpack.c.bf16 %v439, %v435
    %v444 = vpack.c.bf16 %v441, %v437
    %v445 = vld [vmem:[%s6] sm:$0xf]
    %v446 = vld [vmem:[%s6 + $0x4] sm:$0xf]
    %v447 = vld [vmem:[%s6 + $0x8] sm:$0xf]
    %v448 = vld [vmem:[%s6 + $0xc] sm:$0xf]
    %v449 = vld [vmem:[%s6 + $0x10] sm:$0xf]
    %v450 = vld [vmem:[%s6 + $0x14] sm:$0xf]
    %v451 = vld [vmem:[%s6 + $0x18] sm:$0xf]
    %v452 = vld [vmem:[%s6 + $0x1c] sm:$0xf]
    %v453 = vld [vmem:[%s6 + $0x20] sm:$0xf]
    %v454 = vld [vmem:[%s6 + $0x24] sm:$0xf]
    %v455 = vld [vmem:[%s6 + $0x28] sm:$0xf]
    %v456 = vld [vmem:[%s6 + $0x2c] sm:$0xf]
    %v457 = vld [vmem:[%s6 + $0x30] sm:$0xf]
    %v458 = vld [vmem:[%s6 + $0x34] sm:$0xf]
    %v459 = vld [vmem:[%s6 + $0x38] sm:$0xf]
    %v460 = vld [vmem:[%s6 + $0x3c] sm:$0xf]
    %v461 = vld [vmem:[%s6 + $0x40] sm:$0xf]
    %v462 = vld [vmem:[%s6 + $0x44] sm:$0xf]
    %v463 = vld [vmem:[%s6 + $0x48] sm:$0xf]
    %v464 = vld [vmem:[%s6 + $0x4c] sm:$0xf]
    %v465 = vld [vmem:[%s6 + $0x50] sm:$0xf]
    %v466 = vld [vmem:[%s6 + $0x54] sm:$0xf]
    %v467 = vld [vmem:[%s6 + $0x58] sm:$0xf]
    %v468 = vld [vmem:[%s6 + $0x5c] sm:$0xf]
    %v469 = vld [vmem:[%s6 + $0x60] sm:$0xf]
    %v470 = vld [vmem:[%s6 + $0x64] sm:$0xf]
    %v471 = vld [vmem:[%s6 + $0x68] sm:$0xf]
    %v472 = vld [vmem:[%s6 + $0x6c] sm:$0xf]
    %v473 = vld [vmem:[%s6 + $0x70] sm:$0xf]
    %v474 = vld [vmem:[%s6 + $0x74] sm:$0xf]
    %v475 = vld [vmem:[%s6 + $0x78] sm:$0xf]
    %v476 = vld [vmem:[%s6 + $0x7c] sm:$0xf]
    %v509 = vunpack.c.l.b16 %v445
    %v510 = vunpack.c.l.b16 %v446
    %v511 = vunpack.c.l.b16 %v447
    %v512 = vunpack.c.l.b16 %v448
    %v513 = vunpack.c.l.b16 %v449
    %v514 = vunpack.c.l.b16 %v450
    %v515 = vunpack.c.l.b16 %v451
    %v516 = vunpack.c.l.b16 %v452
    %v517 = vunpack.c.l.b16 %v453
    %v518 = vunpack.c.l.b16 %v454
    %v519 = vunpack.c.l.b16 %v455
    %v520 = vunpack.c.l.b16 %v456
    %v521 = vunpack.c.l.b16 %v457
    %v522 = vunpack.c.l.b16 %v458
    %v523 = vunpack.c.l.b16 %v459
    %v524 = vunpack.c.l.b16 %v460
    %v525 = vunpack.c.l.b16 %v461
    %v526 = vunpack.c.l.b16 %v462
    %v527 = vunpack.c.l.b16 %v463
    %v528 = vunpack.c.l.b16 %v464
    %v529 = vunpack.c.l.b16 %v465
    %v530 = vunpack.c.l.b16 %v466
    %v531 = vunpack.c.l.b16 %v467
    %v532 = vunpack.c.l.b16 %v468
    %v533 = vunpack.c.l.b16 %v469
    %v534 = vunpack.c.l.b16 %v470
    %v535 = vunpack.c.l.b16 %v471
    %v536 = vunpack.c.l.b16 %v472
    %v537 = vunpack.c.l.b16 %v473
    %v538 = vunpack.c.l.b16 %v474
    %v539 = vunpack.c.l.b16 %v475
    %v540 = vunpack.c.l.b16 %v476
    %v541 = vpack.c.b16 %v510, %v509
    %v542 = vpack.c.b16 %v512, %v511
    %v543 = vpack.c.b16 %v514, %v513
    %v544 = vpack.c.b16 %v516, %v515
    %v545 = vpack.c.b16 %v518, %v517
    %v546 = vpack.c.b16 %v520, %v519
    %v547 = vpack.c.b16 %v522, %v521
    %v548 = vpack.c.b16 %v524, %v523
    %v549 = vpack.c.b16 %v526, %v525
    %v550 = vpack.c.b16 %v528, %v527
    %v551 = vpack.c.b16 %v530, %v529
    %v552 = vpack.c.b16 %v532, %v531
    %v553 = vpack.c.b16 %v534, %v533
    %v554 = vpack.c.b16 %v536, %v535
    %v555 = vpack.c.b16 %v538, %v537
    %v556 = vpack.c.b16 %v540, %v539
    %573 = vmatprep.subr.bf16.mxu0 0
    %574 = vmatpush1.bf16.msra.mxu0 %v548
    %575 = vmatprep.subr.bf16.mxu0 0
    %576 = vmatpush1.bf16.msra.mxu0 %v547
    %577 = vmatprep.subr.bf16.mxu0 0
    %578 = vmatpush1.bf16.msra.mxu0 %v546
    %579 = vmatprep.subr.bf16.mxu0 0
    %580 = vmatpush1.bf16.msra.mxu0 %v545
    %581 = vmatprep.subr.bf16.mxu0 0
    %582 = vmatpush1.bf16.msra.mxu0 %v544
    %583 = vmatprep.subr.bf16.mxu0 0
    %584 = vmatpush1.bf16.msra.mxu0 %v543
    %585 = vmatprep.subr.bf16.mxu0 0
    %586 = vmatpush1.bf16.msra.mxu0 %v542
    %587 = vmatprep.subr.bf16.mxu0 0
    %588 = vmatpush1.bf16.msra.mxu0 %v541
    %589 = vmatprep.subr.bf16.mxu0 0
    %590 = vmatpush2.bf16.msra.mxu0 %v556
    %591 = vmatprep.subr.bf16.mxu0 0
    %592 = vmatpush2.bf16.msra.mxu0 %v555
    %593 = vmatprep.subr.bf16.mxu0 0
    %594 = vmatpush2.bf16.msra.mxu0 %v554
    %595 = vmatprep.subr.bf16.mxu0 0
    %596 = vmatpush2.bf16.msra.mxu0 %v553
    %597 = vmatprep.subr.bf16.mxu0 0
    %598 = vmatpush2.bf16.msra.mxu0 %v552
    %599 = vmatprep.subr.bf16.mxu0 0
    %600 = vmatpush2.bf16.msra.mxu0 %v551
    %601 = vmatprep.subr.bf16.mxu0 0
    %602 = vmatpush2.bf16.msra.mxu0 %v550
    %603 = vmatprep.subr.bf16.mxu0 0
    %604 = vmatpush2.bf16.msra.mxu0 %v549
    %605 = vmatprep.mubr.bf16.mxu0 %v444
    %606 = vmatmul.mubr.bf16.gmra.mxu0 %v443
    %v607 = vpop.f32.mrf.mxu0
    %v608 = vadd.f32 0.0, %v607
    %v609 = vpop.f32.mrf.mxu0
    %v610 = vpop.f32.mrf.mxu0
    %v611 = vadd.f32 0.0, %v610
    %v612 = vpop.f32.mrf.mxu0
    %613 = vdwg.mxu0
    %v615 = vlaneseq
    %v616 = vshrl.u32 %v615, 7
    %v617 = vsub.s32 0, %v616
    %v618 = vrot.slane %v399, %v617
    %v620 = vadd.f32 %v618, %v608
    %v621 = vadd.f32 %v618, %v611
    %s622 = scalar_lea.vmem %s6, 128
    %v623 = vld [vmem:[%s622] sm:$0xf]
    %v624 = vld [vmem:[%s622 + $0x4] sm:$0xf]
    %v625 = vld [vmem:[%s622 + $0x8] sm:$0xf]
    %v626 = vld [vmem:[%s622 + $0xc] sm:$0xf]
    %v627 = vld [vmem:[%s622 + $0x10] sm:$0xf]
    %v628 = vld [vmem:[%s622 + $0x14] sm:$0xf]
    %v629 = vld [vmem:[%s622 + $0x18] sm:$0xf]
    %v630 = vld [vmem:[%s622 + $0x1c] sm:$0xf]
    %v631 = vld [vmem:[%s622 + $0x20] sm:$0xf]
    %v632 = vld [vmem:[%s622 + $0x24] sm:$0xf]
    %v633 = vld [vmem:[%s622 + $0x28] sm:$0xf]
    %v634 = vld [vmem:[%s622 + $0x2c] sm:$0xf]
    %v635 = vld [vmem:[%s622 + $0x30] sm:$0xf]
    %v636 = vld [vmem:[%s622 + $0x34] sm:$0xf]
    %v637 = vld [vmem:[%s622 + $0x38] sm:$0xf]
    %v638 = vld [vmem:[%s622 + $0x3c] sm:$0xf]
    %v639 = vld [vmem:[%s622 + $0x40] sm:$0xf]
    %v640 = vld [vmem:[%s622 + $0x44] sm:$0xf]
    %v641 = vld [vmem:[%s622 + $0x48] sm:$0xf]
    %v642 = vld [vmem:[%s622 + $0x4c] sm:$0xf]
    %v643 = vld [vmem:[%s622 + $0x50] sm:$0xf]
    %v644 = vld [vmem:[%s622 + $0x54] sm:$0xf]
    %v645 = vld [vmem:[%s622 + $0x58] sm:$0xf]
    %v646 = vld [vmem:[%s622 + $0x5c] sm:$0xf]
    %v647 = vld [vmem:[%s622 + $0x60] sm:$0xf]
    %v648 = vld [vmem:[%s622 + $0x64] sm:$0xf]
    %v649 = vld [vmem:[%s622 + $0x68] sm:$0xf]
    %v650 = vld [vmem:[%s622 + $0x6c] sm:$0xf]
    %v651 = vld [vmem:[%s622 + $0x70] sm:$0xf]
    %v652 = vld [vmem:[%s622 + $0x74] sm:$0xf]
    %v653 = vld [vmem:[%s622 + $0x78] sm:$0xf]
    %v654 = vld [vmem:[%s622 + $0x7c] sm:$0xf]
    %v687 = vunpack.c.l.b16 %v623
    %v688 = vunpack.c.l.b16 %v624
    %v689 = vunpack.c.l.b16 %v625
    %v690 = vunpack.c.l.b16 %v626
    %v691 = vunpack.c.l.b16 %v627
    %v692 = vunpack.c.l.b16 %v628
    %v693 = vunpack.c.l.b16 %v629
    %v694 = vunpack.c.l.b16 %v630
    %v695 = vunpack.c.l.b16 %v631
    %v696 = vunpack.c.l.b16 %v632
    %v697 = vunpack.c.l.b16 %v633
    %v698 = vunpack.c.l.b16 %v634
    %v699 = vunpack.c.l.b16 %v635
    %v700 = vunpack.c.l.b16 %v636
    %v701 = vunpack.c.l.b16 %v637
    %v702 = vunpack.c.l.b16 %v638
    %v703 = vunpack.c.l.b16 %v639
    %v704 = vunpack.c.l.b16 %v640
    %v705 = vunpack.c.l.b16 %v641
    %v706 = vunpack.c.l.b16 %v642
    %v707 = vunpack.c.l.b16 %v643
    %v708 = vunpack.c.l.b16 %v644
    %v709 = vunpack.c.l.b16 %v645
    %v710 = vunpack.c.l.b16 %v646
    %v711 = vunpack.c.l.b16 %v647
    %v712 = vunpack.c.l.b16 %v648
    %v713 = vunpack.c.l.b16 %v649
    %v714 = vunpack.c.l.b16 %v650
    %v715 = vunpack.c.l.b16 %v651
    %v716 = vunpack.c.l.b16 %v652
    %v717 = vunpack.c.l.b16 %v653
    %v718 = vunpack.c.l.b16 %v654
    %v719 = vpack.c.b16 %v688, %v687
    %v720 = vpack.c.b16 %v690, %v689
    %v721 = vpack.c.b16 %v692, %v691
    %v722 = vpack.c.b16 %v694, %v693
    %v723 = vpack.c.b16 %v696, %v695
    %v724 = vpack.c.b16 %v698, %v697
    %v725 = vpack.c.b16 %v700, %v699
    %v726 = vpack.c.b16 %v702, %v701
    %v727 = vpack.c.b16 %v704, %v703
    %v728 = vpack.c.b16 %v706, %v705
    %v729 = vpack.c.b16 %v708, %v707
    %v730 = vpack.c.b16 %v710, %v709
    %v731 = vpack.c.b16 %v712, %v711
    %v732 = vpack.c.b16 %v714, %v713
    %v733 = vpack.c.b16 %v716, %v715
    %v734 = vpack.c.b16 %v718, %v717
    %751 = vmatprep.subr.bf16.mxu0 0
    %752 = vmatpush1.bf16.msra.mxu0 %v726
    %753 = vmatprep.subr.bf16.mxu0 0
    %754 = vmatpush1.bf16.msra.mxu0 %v725
    %755 = vmatprep.subr.bf16.mxu0 0
    %756 = vmatpush1.bf16.msra.mxu0 %v724
    %757 = vmatprep.subr.bf16.mxu0 0
    %758 = vmatpush1.bf16.msra.mxu0 %v723
    %759 = vmatprep.subr.bf16.mxu0 0
    %760 = vmatpush1.bf16.msra.mxu0 %v722
    %761 = vmatprep.subr.bf16.mxu0 0
    %762 = vmatpush1.bf16.msra.mxu0 %v721
    %763 = vmatprep.subr.bf16.mxu0 0
    %764 = vmatpush1.bf16.msra.mxu0 %v720
    %765 = vmatprep.subr.bf16.mxu0 0
    %766 = vmatpush1.bf16.msra.mxu0 %v719
    %767 = vmatprep.subr.bf16.mxu0 0
    %768 = vmatpush2.bf16.msra.mxu0 %v734
    %769 = vmatprep.subr.bf16.mxu0 0
    %770 = vmatpush2.bf16.msra.mxu0 %v733
    %771 = vmatprep.subr.bf16.mxu0 0
    %772 = vmatpush2.bf16.msra.mxu0 %v732
    %773 = vmatprep.subr.bf16.mxu0 0
    %774 = vmatpush2.bf16.msra.mxu0 %v731
    %775 = vmatprep.subr.bf16.mxu0 0
    %776 = vmatpush2.bf16.msra.mxu0 %v730
    %777 = vmatprep.subr.bf16.mxu0 0
    %778 = vmatpush2.bf16.msra.mxu0 %v729
    %779 = vmatprep.subr.bf16.mxu0 0
    %780 = vmatpush2.bf16.msra.mxu0 %v728
    %781 = vmatprep.subr.bf16.mxu0 0
    %782 = vmatpush2.bf16.msra.mxu0 %v727
    %783 = vmatprep.mubr.bf16.mxu0 %v398
    %784 = vmatmul.mubr.bf16.gmra.mxu0 %v397
    %v785 = vpop.f32.mrf.mxu0
    %v786 = vadd.f32 0.0, %v785
    %v787 = vpop.f32.mrf.mxu0
    %v788 = vpop.f32.mrf.mxu0
    %v789 = vadd.f32 0.0, %v788
    %v790 = vpop.f32.mrf.mxu0
    %791 = vdwg.mxu0
    %v792 = vadd.f32 %v620, %v786
    %v793 = vadd.f32 %v621, %v789
    %794 = vmatprep.subr.bf16.mxu0 0
    %795 = vmatpush1.bf16.msra.mxu0 0
    %796 = vmatprep.subr.bf16.mxu0 0
    %797 = vmatpush1.bf16.msra.mxu0 0
    %798 = vmatprep.subr.bf16.mxu0 0
    %799 = vmatpush1.bf16.msra.mxu0 0
    %800 = vmatprep.subr.bf16.mxu0 0
    %801 = vmatpush1.bf16.msra.mxu0 0
    %802 = vmatprep.subr.bf16.mxu0 0
    %803 = vmatpush1.bf16.msra.mxu0 0
    %804 = vmatprep.subr.bf16.mxu0 0
    %805 = vmatpush1.bf16.msra.mxu0 0
    %806 = vmatprep.subr.bf16.mxu0 0
    %807 = vmatpush1.bf16.msra.mxu0 0
    %808 = vmatprep.subr.bf16.mxu0 %v398
    %809 = vmatpush1.bf16.msra.mxu0 %v397
    %810 = vmatprep.subr.bf16.mxu0 0
    %811 = vmatpush2.bf16.msra.mxu0 0
    %812 = vmatprep.subr.bf16.mxu0 0
    %813 = vmatpush2.bf16.msra.mxu0 0
    %814 = vmatprep.subr.bf16.mxu0 0
    %815 = vmatpush2.bf16.msra.mxu0 0
    %816 = vmatprep.subr.bf16.mxu0 0
    %817 = vmatpush2.bf16.msra.mxu0 0
    %818 = vmatprep.subr.bf16.mxu0 0
    %819 = vmatpush2.bf16.msra.mxu0 0
    %820 = vmatprep.subr.bf16.mxu0 0
    %821 = vmatpush2.bf16.msra.mxu0 0
    %822 = vmatprep.subr.bf16.mxu0 0
    %823 = vmatpush2.bf16.msra.mxu0 0
    %824 = vmatprep.subr.bf16.mxu0 0
    %825 = vmatpush2.bf16.msra.mxu0 0
    %826 = vmatprep.mubr.bf16.mxu0 0
    %827 = vmatmul.mubr.bf16.gmra.mxu0 %v286
    %v828 = vpop.f32.mrf.mxu0
    %v829 = vadd.f32 0.0, %v828
    %v830 = vpop.f32.mrf.mxu0
    %v831 = vadd.f32 0.0, %v830
    %v832 = vpop.f32.mrf.mxu0
    %v833 = vadd.f32 0.0, %v832
    %v834 = vpop.f32.mrf.mxu0
    %v835 = vadd.f32 0.0, %v834
    %836 = vdwg.mxu0
    %v837 = vpack.c.bf16 %v833, %v829
    %v838 = vpack.c.bf16 %v835, %v831
    %s839 = scalar_lea.vmem %s6, 256
    %v840 = vld [vmem:[%s839] sm:$0xf]
    %v841 = vld [vmem:[%s839 + $0x4] sm:$0xf]
    %v842 = vld [vmem:[%s839 + $0x8] sm:$0xf]
    %v843 = vld [vmem:[%s839 + $0xc] sm:$0xf]
    %v844 = vld [vmem:[%s839 + $0x10] sm:$0xf]
    %v845 = vld [vmem:[%s839 + $0x14] sm:$0xf]
    %v846 = vld [vmem:[%s839 + $0x18] sm:$0xf]
    %v847 = vld [vmem:[%s839 + $0x1c] sm:$0xf]
    %v848 = vld [vmem:[%s839 + $0x20] sm:$0xf]
    %v849 = vld [vmem:[%s839 + $0x24] sm:$0xf]
    %v850 = vld [vmem:[%s839 + $0x28] sm:$0xf]
    %v851 = vld [vmem:[%s839 + $0x2c] sm:$0xf]
    %v852 = vld [vmem:[%s839 + $0x30] sm:$0xf]
    %v853 = vld [vmem:[%s839 + $0x34] sm:$0xf]
    %v854 = vld [vmem:[%s839 + $0x38] sm:$0xf]
    %v855 = vld [vmem:[%s839 + $0x3c] sm:$0xf]
    %v856 = vld [vmem:[%s839 + $0x40] sm:$0xf]
    %v857 = vld [vmem:[%s839 + $0x44] sm:$0xf]
    %v858 = vld [vmem:[%s839 + $0x48] sm:$0xf]
    %v859 = vld [vmem:[%s839 + $0x4c] sm:$0xf]
    %v860 = vld [vmem:[%s839 + $0x50] sm:$0xf]
    %v861 = vld [vmem:[%s839 + $0x54] sm:$0xf]
    %v862 = vld [vmem:[%s839 + $0x58] sm:$0xf]
    %v863 = vld [vmem:[%s839 + $0x5c] sm:$0xf]
    %v864 = vld [vmem:[%s839 + $0x60] sm:$0xf]
    %v865 = vld [vmem:[%s839 + $0x64] sm:$0xf]
    %v866 = vld [vmem:[%s839 + $0x68] sm:$0xf]
    %v867 = vld [vmem:[%s839 + $0x6c] sm:$0xf]
    %v868 = vld [vmem:[%s839 + $0x70] sm:$0xf]
    %v869 = vld [vmem:[%s839 + $0x74] sm:$0xf]
    %v870 = vld [vmem:[%s839 + $0x78] sm:$0xf]
    %v871 = vld [vmem:[%s839 + $0x7c] sm:$0xf]
    %v904 = vunpack.c.l.b16 %v840
    %v905 = vunpack.c.l.b16 %v841
    %v906 = vunpack.c.l.b16 %v842
    %v907 = vunpack.c.l.b16 %v843
    %v908 = vunpack.c.l.b16 %v844
    %v909 = vunpack.c.l.b16 %v845
    %v910 = vunpack.c.l.b16 %v846
    %v911 = vunpack.c.l.b16 %v847
    %v912 = vunpack.c.l.b16 %v848
    %v913 = vunpack.c.l.b16 %v849
    %v914 = vunpack.c.l.b16 %v850
    %v915 = vunpack.c.l.b16 %v851
    %v916 = vunpack.c.l.b16 %v852
    %v917 = vunpack.c.l.b16 %v853
    %v918 = vunpack.c.l.b16 %v854
    %v919 = vunpack.c.l.b16 %v855
    %v920 = vunpack.c.l.b16 %v856
    %v921 = vunpack.c.l.b16 %v857
    %v922 = vunpack.c.l.b16 %v858
    %v923 = vunpack.c.l.b16 %v859
    %v924 = vunpack.c.l.b16 %v860
    %v925 = vunpack.c.l.b16 %v861
    %v926 = vunpack.c.l.b16 %v862
    %v927 = vunpack.c.l.b16 %v863
    %v928 = vunpack.c.l.b16 %v864
    %v929 = vunpack.c.l.b16 %v865
    %v930 = vunpack.c.l.b16 %v866
    %v931 = vunpack.c.l.b16 %v867
    %v932 = vunpack.c.l.b16 %v868
    %v933 = vunpack.c.l.b16 %v869
    %v934 = vunpack.c.l.b16 %v870
    %v935 = vunpack.c.l.b16 %v871
    %v936 = vpack.c.b16 %v905, %v904
    %v937 = vpack.c.b16 %v907, %v906
    %v938 = vpack.c.b16 %v909, %v908
    %v939 = vpack.c.b16 %v911, %v910
    %v940 = vpack.c.b16 %v913, %v912
    %v941 = vpack.c.b16 %v915, %v914
    %v942 = vpack.c.b16 %v917, %v916
    %v943 = vpack.c.b16 %v919, %v918
    %v944 = vpack.c.b16 %v921, %v920
    %v945 = vpack.c.b16 %v923, %v922
    %v946 = vpack.c.b16 %v925, %v924
    %v947 = vpack.c.b16 %v927, %v926
    %v948 = vpack.c.b16 %v929, %v928
    %v949 = vpack.c.b16 %v931, %v930
    %v950 = vpack.c.b16 %v933, %v932
    %v951 = vpack.c.b16 %v935, %v934
    %968 = vmatprep.subr.bf16.mxu0 0
    %969 = vmatpush1.bf16.msra.mxu0 %v943
    %970 = vmatprep.subr.bf16.mxu0 0
    %971 = vmatpush1.bf16.msra.mxu0 %v942
    %972 = vmatprep.subr.bf16.mxu0 0
    %973 = vmatpush1.bf16.msra.mxu0 %v941
    %974 = vmatprep.subr.bf16.mxu0 0
    %975 = vmatpush1.bf16.msra.mxu0 %v940
    %976 = vmatprep.subr.bf16.mxu0 0
    %977 = vmatpush1.bf16.msra.mxu0 %v939
    %978 = vmatprep.subr.bf16.mxu0 0
    %979 = vmatpush1.bf16.msra.mxu0 %v938
    %980 = vmatprep.subr.bf16.mxu0 0
    %981 = vmatpush1.bf16.msra.mxu0 %v937
    %982 = vmatprep.subr.bf16.mxu0 0
    %983 = vmatpush1.bf16.msra.mxu0 %v936
    %984 = vmatprep.subr.bf16.mxu0 0
    %985 = vmatpush2.bf16.msra.mxu0 %v951
    %986 = vmatprep.subr.bf16.mxu0 0
    %987 = vmatpush2.bf16.msra.mxu0 %v950
    %988 = vmatprep.subr.bf16.mxu0 0
    %989 = vmatpush2.bf16.msra.mxu0 %v949
    %990 = vmatprep.subr.bf16.mxu0 0
    %991 = vmatpush2.bf16.msra.mxu0 %v948
    %992 = vmatprep.subr.bf16.mxu0 0
    %993 = vmatpush2.bf16.msra.mxu0 %v947
    %994 = vmatprep.subr.bf16.mxu0 0
    %995 = vmatpush2.bf16.msra.mxu0 %v946
    %996 = vmatprep.subr.bf16.mxu0 0
    %997 = vmatpush2.bf16.msra.mxu0 %v945
    %998 = vmatprep.subr.bf16.mxu0 0
    %999 = vmatpush2.bf16.msra.mxu0 %v944
    %1000 = vmatprep.mubr.bf16.mxu0 %v838
    %1001 = vmatmul.mubr.bf16.gmra.mxu0 %v837
    %v1002 = vpop.f32.mrf.mxu0
    %v1003 = vadd.f32 0.0, %v1002
    %v1004 = vpop.f32.mrf.mxu0
    %v1005 = vpop.f32.mrf.mxu0
    %v1006 = vadd.f32 0.0, %v1005
    %v1007 = vpop.f32.mrf.mxu0
    %1008 = vdwg.mxu0
    %v1009 = vadd.f32 %v792, %v1003
    %v1010 = vadd.f32 %v793, %v1006
    %v1011 = vmax.f32 %v1009, 0.0
    %v1012 = vmax.f32 %v1010, 0.0
    %v1013 = vpack.c.bf16 %v1012, %v1011
    %v1014 = vld [vmem:[%s9] sm:$0x1]
    %v1015 = vld [vmem:[%s2] sm:$0x1]
    %v1017 = vsel %vm95, %v1015, 0
    %1019 = vmatprep.subr.bf16.mxu0 0
    %1020 = vmatpush1.bf16.msra.mxu0 0
    %1021 = vmatprep.subr.bf16.mxu0 0
    %1022 = vmatpush1.bf16.msra.mxu0 0
    %1023 = vmatprep.subr.bf16.mxu0 0
    %1024 = vmatpush1.bf16.msra.mxu0 0
    %1025 = vmatprep.subr.bf16.mxu0 0
    %1026 = vmatpush1.bf16.msra.mxu0 0
    %1027 = vmatprep.subr.bf16.mxu0 0
    %1028 = vmatpush1.bf16.msra.mxu0 0
    %1029 = vmatprep.subr.bf16.mxu0 0
    %1030 = vmatpush1.bf16.msra.mxu0 0
    %1031 = vmatprep.subr.bf16.mxu0 0
    %1032 = vmatpush1.bf16.msra.mxu0 0
    %1033 = vmatprep.subr.bf16.mxu0 0
    %1034 = vmatpush1.bf16.msra.mxu0 %v1013
    %1035 = vmatprep.subr.bf16.mxu0 0
    %1036 = vmatpush2.bf16.msra.mxu0 0
    %1037 = vmatprep.subr.bf16.mxu0 0
    %1038 = vmatpush2.bf16.msra.mxu0 0
    %1039 = vmatprep.subr.bf16.mxu0 0
    %1040 = vmatpush2.bf16.msra.mxu0 0
    %1041 = vmatprep.subr.bf16.mxu0 0
    %1042 = vmatpush2.bf16.msra.mxu0 0
    %1043 = vmatprep.subr.bf16.mxu0 0
    %1044 = vmatpush2.bf16.msra.mxu0 0
    %1045 = vmatprep.subr.bf16.mxu0 0
    %1046 = vmatpush2.bf16.msra.mxu0 0
    %1047 = vmatprep.subr.bf16.mxu0 0
    %1048 = vmatpush2.bf16.msra.mxu0 0
    %1049 = vmatprep.subr.bf16.mxu0 0
    %1050 = vmatpush2.bf16.msra.mxu0 0
    %1051 = vmatprep.mubr.bf16.mxu0 0
    %1052 = vmatmul.mubr.bf16.gmra.mxu0 %v1017
    %v1053 = vpop.f32.mrf.mxu0
    %v1054 = vadd.f32 0.0, %v1053
    %v1055 = vpop.f32.mrf.mxu0
    %v1056 = vpop.f32.mrf.mxu0
    %v1057 = vpop.f32.mrf.mxu0
    %1058 = vdwg.mxu0
    %v1059 = vpack.c.bf16 %v1054, %v1054
    %v1060 = vld [vmem:[%s8] sm:$0xf]
    %v1061 = vld [vmem:[%s8 + $0x4] sm:$0xf]
    %v1062 = vld [vmem:[%s8 + $0x8] sm:$0xf]
    %v1063 = vld [vmem:[%s8 + $0xc] sm:$0xf]
    %v1064 = vld [vmem:[%s8 + $0x10] sm:$0xf]
    %v1065 = vld [vmem:[%s8 + $0x14] sm:$0xf]
    %v1066 = vld [vmem:[%s8 + $0x18] sm:$0xf]
    %v1067 = vld [vmem:[%s8 + $0x1c] sm:$0xf]
    %v1068 = vld [vmem:[%s8 + $0x20] sm:$0xf]
    %v1069 = vld [vmem:[%s8 + $0x24] sm:$0xf]
    %v1070 = vld [vmem:[%s8 + $0x28] sm:$0xf]
    %v1071 = vld [vmem:[%s8 + $0x2c] sm:$0xf]
    %v1072 = vld [vmem:[%s8 + $0x30] sm:$0xf]
    %v1073 = vld [vmem:[%s8 + $0x34] sm:$0xf]
    %v1074 = vld [vmem:[%s8 + $0x38] sm:$0xf]
    %v1075 = vld [vmem:[%s8 + $0x3c] sm:$0xf]
    %v1092 = vunpack.c.l.b16 %v1060
    %v1093 = vunpack.c.l.b16 %v1061
    %v1094 = vunpack.c.l.b16 %v1062
    %v1095 = vunpack.c.l.b16 %v1063
    %v1096 = vunpack.c.l.b16 %v1064
    %v1097 = vunpack.c.l.b16 %v1065
    %v1098 = vunpack.c.l.b16 %v1066
    %v1099 = vunpack.c.l.b16 %v1067
    %v1100 = vunpack.c.l.b16 %v1068
    %v1101 = vunpack.c.l.b16 %v1069
    %v1102 = vunpack.c.l.b16 %v1070
    %v1103 = vunpack.c.l.b16 %v1071
    %v1104 = vunpack.c.l.b16 %v1072
    %v1105 = vunpack.c.l.b16 %v1073
    %v1106 = vunpack.c.l.b16 %v1074
    %v1107 = vunpack.c.l.b16 %v1075
    %v1108 = vpack.c.b16 %v1093, %v1092
    %v1109 = vpack.c.b16 %v1095, %v1094
    %v1110 = vpack.c.b16 %v1097, %v1096
    %v1111 = vpack.c.b16 %v1099, %v1098
    %v1112 = vpack.c.b16 %v1101, %v1100
    %v1113 = vpack.c.b16 %v1103, %v1102
    %v1114 = vpack.c.b16 %v1105, %v1104
    %v1115 = vpack.c.b16 %v1107, %v1106
    %1124 = vmatprep.subr.bf16.mxu0 0
    %1125 = vmatpush1.bf16.msra.mxu0 %v1115
    %1126 = vmatprep.subr.bf16.mxu0 0
    %1127 = vmatpush1.bf16.msra.mxu0 %v1114
    %1128 = vmatprep.subr.bf16.mxu0 0
    %1129 = vmatpush1.bf16.msra.mxu0 %v1113
    %1130 = vmatprep.subr.bf16.mxu0 0
    %1131 = vmatpush1.bf16.msra.mxu0 %v1112
    %1132 = vmatprep.subr.bf16.mxu0 0
    %1133 = vmatpush1.bf16.msra.mxu0 %v1111
    %1134 = vmatprep.subr.bf16.mxu0 0
    %1135 = vmatpush1.bf16.msra.mxu0 %v1110
    %1136 = vmatprep.subr.bf16.mxu0 0
    %1137 = vmatpush1.bf16.msra.mxu0 %v1109
    %1138 = vmatprep.subr.bf16.mxu0 0
    %1139 = vmatpush1.bf16.msra.mxu0 %v1108
    %1140 = vmatprep.subr.bf16.mxu0 0
    %1141 = vmatpush2.bf16.msra.mxu0 0
    %1142 = vmatprep.subr.bf16.mxu0 0
    %1143 = vmatpush2.bf16.msra.mxu0 0
    %1144 = vmatprep.subr.bf16.mxu0 0
    %1145 = vmatpush2.bf16.msra.mxu0 0
    %1146 = vmatprep.subr.bf16.mxu0 0
    %1147 = vmatpush2.bf16.msra.mxu0 0
    %1148 = vmatprep.subr.bf16.mxu0 0
    %1149 = vmatpush2.bf16.msra.mxu0 0
    %1150 = vmatprep.subr.bf16.mxu0 0
    %1151 = vmatpush2.bf16.msra.mxu0 0
    %1152 = vmatprep.subr.bf16.mxu0 0
    %1153 = vmatpush2.bf16.msra.mxu0 0
    %1154 = vmatprep.subr.bf16.mxu0 0
    %1155 = vmatpush2.bf16.msra.mxu0 0
    %1156 = vmatprep.mubr.bf16.mxu0 0
    %1157 = vmatmul.mubr.bf16.gmra.mxu0 %v1059
    %v1158 = vpop.f32.mrf.mxu0
    %v1159 = vadd.f32 0.0, %v1158
    %v1160 = vpop.f32.mrf.mxu0
    %v1161 = vpop.f32.mrf.mxu0
    %v1162 = vpop.f32.mrf.mxu0
    %1163 = vdwg.mxu0
    %v1165 = vlaneseq
    %v1166 = vshrl.u32 %v1165, 7
    %v1167 = vsub.s32 0, %v1166
    %v1168 = vrot.slane %v1014, %v1167
    %v1170 = vadd.f32 %v1168, %v1159
    %s1171 = scalar_lea.vmem %s2, 1
    %v1172 = vld [vmem:[%s1171] sm:$0x1]
    %v1174 = vsel %vm95, %v1172, 0
    %1176 = vmatprep.subr.bf16.mxu0 0
    %1177 = vmatpush1.bf16.msra.mxu0 0
    %1178 = vmatprep.subr.bf16.mxu0 0
    %1179 = vmatpush1.bf16.msra.mxu0 0
    %1180 = vmatprep.subr.bf16.mxu0 0
    %1181 = vmatpush1.bf16.msra.mxu0 0
    %1182 = vmatprep.subr.bf16.mxu0 0
    %1183 = vmatpush1.bf16.msra.mxu0 0
    %1184 = vmatprep.subr.bf16.mxu0 0
    %1185 = vmatpush1.bf16.msra.mxu0 0
    %1186 = vmatprep.subr.bf16.mxu0 0
    %1187 = vmatpush1.bf16.msra.mxu0 0
    %1188 = vmatprep.subr.bf16.mxu0 0
    %1189 = vmatpush1.bf16.msra.mxu0 0
    %1190 = vmatprep.subr.bf16.mxu0 0
    %1191 = vmatpush1.bf16.msra.mxu0 %v1013
    %1192 = vmatprep.subr.bf16.mxu0 0
    %1193 = vmatpush2.bf16.msra.mxu0 0
    %1194 = vmatprep.subr.bf16.mxu0 0
    %1195 = vmatpush2.bf16.msra.mxu0 0
    %1196 = vmatprep.subr.bf16.mxu0 0
    %1197 = vmatpush2.bf16.msra.mxu0 0
    %1198 = vmatprep.subr.bf16.mxu0 0
    %1199 = vmatpush2.bf16.msra.mxu0 0
    %1200 = vmatprep.subr.bf16.mxu0 0
    %1201 = vmatpush2.bf16.msra.mxu0 0
    %1202 = vmatprep.subr.bf16.mxu0 0
    %1203 = vmatpush2.bf16.msra.mxu0 0
    %1204 = vmatprep.subr.bf16.mxu0 0
    %1205 = vmatpush2.bf16.msra.mxu0 0
    %1206 = vmatprep.subr.bf16.mxu0 0
    %1207 = vmatpush2.bf16.msra.mxu0 0
    %1208 = vmatprep.mubr.bf16.mxu0 0
    %1209 = vmatmul.mubr.bf16.gmra.mxu0 %v1174
    %v1210 = vpop.f32.mrf.mxu0
    %v1211 = vadd.f32 0.0, %v1210
    %v1212 = vpop.f32.mrf.mxu0
    %v1213 = vpop.f32.mrf.mxu0
    %v1214 = vpop.f32.mrf.mxu0
    %1215 = vdwg.mxu0
    %v1216 = vpack.c.bf16 %v1211, %v1211
    %s1217 = scalar_lea.vmem %s8, 64
    %v1218 = vld [vmem:[%s1217] sm:$0xf]
    %v1219 = vld [vmem:[%s1217 + $0x4] sm:$0xf]
    %v1220 = vld [vmem:[%s1217 + $0x8] sm:$0xf]
    %v1221 = vld [vmem:[%s1217 + $0xc] sm:$0xf]
    %v1222 = vld [vmem:[%s1217 + $0x10] sm:$0xf]
    %v1223 = vld [vmem:[%s1217 + $0x14] sm:$0xf]
    %v1224 = vld [vmem:[%s1217 + $0x18] sm:$0xf]
    %v1225 = vld [vmem:[%s1217 + $0x1c] sm:$0xf]
    %v1226 = vld [vmem:[%s1217 + $0x20] sm:$0xf]
    %v1227 = vld [vmem:[%s1217 + $0x24] sm:$0xf]
    %v1228 = vld [vmem:[%s1217 + $0x28] sm:$0xf]
    %v1229 = vld [vmem:[%s1217 + $0x2c] sm:$0xf]
    %v1230 = vld [vmem:[%s1217 + $0x30] sm:$0xf]
    %v1231 = vld [vmem:[%s1217 + $0x34] sm:$0xf]
    %v1232 = vld [vmem:[%s1217 + $0x38] sm:$0xf]
    %v1233 = vld [vmem:[%s1217 + $0x3c] sm:$0xf]
    %v1250 = vunpack.c.l.b16 %v1218
    %v1251 = vunpack.c.l.b16 %v1219
    %v1252 = vunpack.c.l.b16 %v1220
    %v1253 = vunpack.c.l.b16 %v1221
    %v1254 = vunpack.c.l.b16 %v1222
    %v1255 = vunpack.c.l.b16 %v1223
    %v1256 = vunpack.c.l.b16 %v1224
    %v1257 = vunpack.c.l.b16 %v1225
    %v1258 = vunpack.c.l.b16 %v1226
    %v1259 = vunpack.c.l.b16 %v1227
    %v1260 = vunpack.c.l.b16 %v1228
    %v1261 = vunpack.c.l.b16 %v1229
    %v1262 = vunpack.c.l.b16 %v1230
    %v1263 = vunpack.c.l.b16 %v1231
    %v1264 = vunpack.c.l.b16 %v1232
    %v1265 = vunpack.c.l.b16 %v1233
    %v1266 = vpack.c.b16 %v1251, %v1250
    %v1267 = vpack.c.b16 %v1253, %v1252
    %v1268 = vpack.c.b16 %v1255, %v1254
    %v1269 = vpack.c.b16 %v1257, %v1256
    %v1270 = vpack.c.b16 %v1259, %v1258
    %v1271 = vpack.c.b16 %v1261, %v1260
    %v1272 = vpack.c.b16 %v1263, %v1262
    %v1273 = vpack.c.b16 %v1265, %v1264
    %1282 = vmatprep.subr.bf16.mxu0 0
    %1283 = vmatpush1.bf16.msra.mxu0 %v1273
    %1284 = vmatprep.subr.bf16.mxu0 0
    %1285 = vmatpush1.bf16.msra.mxu0 %v1272
    %1286 = vmatprep.subr.bf16.mxu0 0
    %1287 = vmatpush1.bf16.msra.mxu0 %v1271
    %1288 = vmatprep.subr.bf16.mxu0 0
    %1289 = vmatpush1.bf16.msra.mxu0 %v1270
    %1290 = vmatprep.subr.bf16.mxu0 0
    %1291 = vmatpush1.bf16.msra.mxu0 %v1269
    %1292 = vmatprep.subr.bf16.mxu0 0
    %1293 = vmatpush1.bf16.msra.mxu0 %v1268
    %1294 = vmatprep.subr.bf16.mxu0 0
    %1295 = vmatpush1.bf16.msra.mxu0 %v1267
    %1296 = vmatprep.subr.bf16.mxu0 0
    %1297 = vmatpush1.bf16.msra.mxu0 %v1266
    %1298 = vmatprep.subr.bf16.mxu0 0
    %1299 = vmatpush2.bf16.msra.mxu0 0
    %1300 = vmatprep.subr.bf16.mxu0 0
    %1301 = vmatpush2.bf16.msra.mxu0 0
    %1302 = vmatprep.subr.bf16.mxu0 0
    %1303 = vmatpush2.bf16.msra.mxu0 0
    %1304 = vmatprep.subr.bf16.mxu0 0
    %1305 = vmatpush2.bf16.msra.mxu0 0
    %1306 = vmatprep.subr.bf16.mxu0 0
    %1307 = vmatpush2.bf16.msra.mxu0 0
    %1308 = vmatprep.subr.bf16.mxu0 0
    %1309 = vmatpush2.bf16.msra.mxu0 0
    %1310 = vmatprep.subr.bf16.mxu0 0
    %1311 = vmatpush2.bf16.msra.mxu0 0
    %1312 = vmatprep.subr.bf16.mxu0 0
    %1313 = vmatpush2.bf16.msra.mxu0 0
    %1314 = vmatprep.mubr.bf16.mxu0 0
    %1315 = vmatmul.mubr.bf16.gmra.mxu0 %v1216
    %v1316 = vpop.f32.mrf.mxu0
    %v1317 = vadd.f32 0.0, %v1316
    %v1318 = vpop.f32.mrf.mxu0
    %v1319 = vpop.f32.mrf.mxu0
    %v1320 = vpop.f32.mrf.mxu0
    %1321 = vdwg.mxu0
    %v1322 = vadd.f32 %v1170, %v1317
    %s1323 = scalar_lea.vmem %s2, 2
    %v1324 = vld [vmem:[%s1323] sm:$0x1]
    %v1326 = vsel %vm95, %v1324, 0
    %1328 = vmatprep.subr.bf16.mxu0 0
    %1329 = vmatpush1.bf16.msra.mxu0 0
    %1330 = vmatprep.subr.bf16.mxu0 0
    %1331 = vmatpush1.bf16.msra.mxu0 0
    %1332 = vmatprep.subr.bf16.mxu0 0
    %1333 = vmatpush1.bf16.msra.mxu0 0
    %1334 = vmatprep.subr.bf16.mxu0 0
    %1335 = vmatpush1.bf16.msra.mxu0 0
    %1336 = vmatprep.subr.bf16.mxu0 0
    %1337 = vmatpush1.bf16.msra.mxu0 0
    %1338 = vmatprep.subr.bf16.mxu0 0
    %1339 = vmatpush1.bf16.msra.mxu0 0
    %1340 = vmatprep.subr.bf16.mxu0 0
    %1341 = vmatpush1.bf16.msra.mxu0 0
    %1342 = vmatprep.subr.bf16.mxu0 0
    %1343 = vmatpush1.bf16.msra.mxu0 %v1013
    %1344 = vmatprep.subr.bf16.mxu0 0
    %1345 = vmatpush2.bf16.msra.mxu0 0
    %1346 = vmatprep.subr.bf16.mxu0 0
    %1347 = vmatpush2.bf16.msra.mxu0 0
    %1348 = vmatprep.subr.bf16.mxu0 0
    %1349 = vmatpush2.bf16.msra.mxu0 0
    %1350 = vmatprep.subr.bf16.mxu0 0
    %1351 = vmatpush2.bf16.msra.mxu0 0
    %1352 = vmatprep.subr.bf16.mxu0 0
    %1353 = vmatpush2.bf16.msra.mxu0 0
    %1354 = vmatprep.subr.bf16.mxu0 0
    %1355 = vmatpush2.bf16.msra.mxu0 0
    %1356 = vmatprep.subr.bf16.mxu0 0
    %1357 = vmatpush2.bf16.msra.mxu0 0
    %1358 = vmatprep.subr.bf16.mxu0 0
    %1359 = vmatpush2.bf16.msra.mxu0 0
    %1360 = vmatprep.mubr.bf16.mxu0 0
    %1361 = vmatmul.mubr.bf16.gmra.mxu0 %v1326
    %v1362 = vpop.f32.mrf.mxu0
    %v1363 = vadd.f32 0.0, %v1362
    %v1364 = vpop.f32.mrf.mxu0
    %v1365 = vpop.f32.mrf.mxu0
    %v1366 = vpop.f32.mrf.mxu0
    %1367 = vdwg.mxu0
    %v1368 = vpack.c.bf16 %v1363, %v1363
    %s1369 = scalar_lea.vmem %s8, 128
    %v1370 = vld [vmem:[%s1369] sm:$0xf]
    %v1371 = vld [vmem:[%s1369 + $0x4] sm:$0xf]
    %v1372 = vld [vmem:[%s1369 + $0x8] sm:$0xf]
    %v1373 = vld [vmem:[%s1369 + $0xc] sm:$0xf]
    %v1374 = vld [vmem:[%s1369 + $0x10] sm:$0xf]
    %v1375 = vld [vmem:[%s1369 + $0x14] sm:$0xf]
    %v1376 = vld [vmem:[%s1369 + $0x18] sm:$0xf]
    %v1377 = vld [vmem:[%s1369 + $0x1c] sm:$0xf]
    %v1378 = vld [vmem:[%s1369 + $0x20] sm:$0xf]
    %v1379 = vld [vmem:[%s1369 + $0x24] sm:$0xf]
    %v1380 = vld [vmem:[%s1369 + $0x28] sm:$0xf]
    %v1381 = vld [vmem:[%s1369 + $0x2c] sm:$0xf]
    %v1382 = vld [vmem:[%s1369 + $0x30] sm:$0xf]
    %v1383 = vld [vmem:[%s1369 + $0x34] sm:$0xf]
    %v1384 = vld [vmem:[%s1369 + $0x38] sm:$0xf]
    %v1385 = vld [vmem:[%s1369 + $0x3c] sm:$0xf]
    %v1402 = vunpack.c.l.b16 %v1370
    %v1403 = vunpack.c.l.b16 %v1371
    %v1404 = vunpack.c.l.b16 %v1372
    %v1405 = vunpack.c.l.b16 %v1373
    %v1406 = vunpack.c.l.b16 %v1374
    %v1407 = vunpack.c.l.b16 %v1375
    %v1408 = vunpack.c.l.b16 %v1376
    %v1409 = vunpack.c.l.b16 %v1377
    %v1410 = vunpack.c.l.b16 %v1378
    %v1411 = vunpack.c.l.b16 %v1379
    %v1412 = vunpack.c.l.b16 %v1380
    %v1413 = vunpack.c.l.b16 %v1381
    %v1414 = vunpack.c.l.b16 %v1382
    %v1415 = vunpack.c.l.b16 %v1383
    %v1416 = vunpack.c.l.b16 %v1384
    %v1417 = vunpack.c.l.b16 %v1385
    %v1418 = vpack.c.b16 %v1403, %v1402
    %v1419 = vpack.c.b16 %v1405, %v1404
    %v1420 = vpack.c.b16 %v1407, %v1406
    %v1421 = vpack.c.b16 %v1409, %v1408
    %v1422 = vpack.c.b16 %v1411, %v1410
    %v1423 = vpack.c.b16 %v1413, %v1412
    %v1424 = vpack.c.b16 %v1415, %v1414
    %v1425 = vpack.c.b16 %v1417, %v1416
    %1434 = vmatprep.subr.bf16.mxu0 0
    %1435 = vmatpush1.bf16.msra.mxu0 %v1425
    %1436 = vmatprep.subr.bf16.mxu0 0
    %1437 = vmatpush1.bf16.msra.mxu0 %v1424
    %1438 = vmatprep.subr.bf16.mxu0 0
    %1439 = vmatpush1.bf16.msra.mxu0 %v1423
    %1440 = vmatprep.subr.bf16.mxu0 0
    %1441 = vmatpush1.bf16.msra.mxu0 %v1422
    %1442 = vmatprep.subr.bf16.mxu0 0
    %1443 = vmatpush1.bf16.msra.mxu0 %v1421
    %1444 = vmatprep.subr.bf16.mxu0 0
    %1445 = vmatpush1.bf16.msra.mxu0 %v1420
    %1446 = vmatprep.subr.bf16.mxu0 0
    %1447 = vmatpush1.bf16.msra.mxu0 %v1419
    %1448 = vmatprep.subr.bf16.mxu0 0
    %1449 = vmatpush1.bf16.msra.mxu0 %v1418
    %1450 = vmatprep.subr.bf16.mxu0 0
    %1451 = vmatpush2.bf16.msra.mxu0 0
    %1452 = vmatprep.subr.bf16.mxu0 0
    %1453 = vmatpush2.bf16.msra.mxu0 0
    %1454 = vmatprep.subr.bf16.mxu0 0
    %1455 = vmatpush2.bf16.msra.mxu0 0
    %1456 = vmatprep.subr.bf16.mxu0 0
    %1457 = vmatpush2.bf16.msra.mxu0 0
    %1458 = vmatprep.subr.bf16.mxu0 0
    %1459 = vmatpush2.bf16.msra.mxu0 0
    %1460 = vmatprep.subr.bf16.mxu0 0
    %1461 = vmatpush2.bf16.msra.mxu0 0
    %1462 = vmatprep.subr.bf16.mxu0 0
    %1463 = vmatpush2.bf16.msra.mxu0 0
    %1464 = vmatprep.subr.bf16.mxu0 0
    %1465 = vmatpush2.bf16.msra.mxu0 0
    %1466 = vmatprep.mubr.bf16.mxu0 0
    %1467 = vmatmul.mubr.bf16.gmra.mxu0 %v1368
    %v1468 = vpop.f32.mrf.mxu0
    %v1469 = vadd.f32 0.0, %v1468
    %v1470 = vpop.f32.mrf.mxu0
    %v1471 = vpop.f32.mrf.mxu0
    %v1472 = vpop.f32.mrf.mxu0
    %1473 = vdwg.mxu0
    %v1474 = vadd.f32 %v1322, %v1469
    %s1475 = scalar_lea.vmem %s2, 3
    %v1476 = vld [vmem:[%s1475] sm:$0x1]
    %v1478 = vsel %vm95, %v1476, 0
    %1480 = vmatprep.subr.bf16.mxu0 0
    %1481 = vmatpush1.bf16.msra.mxu0 0
    %1482 = vmatprep.subr.bf16.mxu0 0
    %1483 = vmatpush1.bf16.msra.mxu0 0
    %1484 = vmatprep.subr.bf16.mxu0 0
    %1485 = vmatpush1.bf16.msra.mxu0 0
    %1486 = vmatprep.subr.bf16.mxu0 0
    %1487 = vmatpush1.bf16.msra.mxu0 0
    %1488 = vmatprep.subr.bf16.mxu0 0
    %1489 = vmatpush1.bf16.msra.mxu0 0
    %1490 = vmatprep.subr.bf16.mxu0 0
    %1491 = vmatpush1.bf16.msra.mxu0 0
    %1492 = vmatprep.subr.bf16.mxu0 0
    %1493 = vmatpush1.bf16.msra.mxu0 0
    %1494 = vmatprep.subr.bf16.mxu0 0
    %1495 = vmatpush1.bf16.msra.mxu0 %v1013
    %1496 = vmatprep.subr.bf16.mxu0 0
    %1497 = vmatpush2.bf16.msra.mxu0 0
    %1498 = vmatprep.subr.bf16.mxu0 0
    %1499 = vmatpush2.bf16.msra.mxu0 0
    %1500 = vmatprep.subr.bf16.mxu0 0
    %1501 = vmatpush2.bf16.msra.mxu0 0
    %1502 = vmatprep.subr.bf16.mxu0 0
    %1503 = vmatpush2.bf16.msra.mxu0 0
    %1504 = vmatprep.subr.bf16.mxu0 0
    %1505 = vmatpush2.bf16.msra.mxu0 0
    %1506 = vmatprep.subr.bf16.mxu0 0
    %1507 = vmatpush2.bf16.msra.mxu0 0
    %1508 = vmatprep.subr.bf16.mxu0 0
    %1509 = vmatpush2.bf16.msra.mxu0 0
    %1510 = vmatprep.subr.bf16.mxu0 0
    %1511 = vmatpush2.bf16.msra.mxu0 0
    %1512 = vmatprep.mubr.bf16.mxu0 0
    %1513 = vmatmul.mubr.bf16.gmra.mxu0 %v1478
    %v1514 = vpop.f32.mrf.mxu0
    %v1515 = vadd.f32 0.0, %v1514
    %v1516 = vpop.f32.mrf.mxu0
    %v1517 = vpop.f32.mrf.mxu0
    %v1518 = vpop.f32.mrf.mxu0
    %1519 = vdwg.mxu0
    %v1520 = vpack.c.bf16 %v1515, %v1515
    %s1521 = scalar_lea.vmem %s8, 192
    %v1522 = vld [vmem:[%s1521] sm:$0xf]
    %v1523 = vld [vmem:[%s1521 + $0x4] sm:$0xf]
    %v1524 = vld [vmem:[%s1521 + $0x8] sm:$0xf]
    %v1525 = vld [vmem:[%s1521 + $0xc] sm:$0xf]
    %v1526 = vld [vmem:[%s1521 + $0x10] sm:$0xf]
    %v1527 = vld [vmem:[%s1521 + $0x14] sm:$0xf]
    %v1528 = vld [vmem:[%s1521 + $0x18] sm:$0xf]
    %v1529 = vld [vmem:[%s1521 + $0x1c] sm:$0xf]
    %v1530 = vld [vmem:[%s1521 + $0x20] sm:$0xf]
    %v1531 = vld [vmem:[%s1521 + $0x24] sm:$0xf]
    %v1532 = vld [vmem:[%s1521 + $0x28] sm:$0xf]
    %v1533 = vld [vmem:[%s1521 + $0x2c] sm:$0xf]
    %v1534 = vld [vmem:[%s1521 + $0x30] sm:$0xf]
    %v1535 = vld [vmem:[%s1521 + $0x34] sm:$0xf]
    %v1536 = vld [vmem:[%s1521 + $0x38] sm:$0xf]
    %v1537 = vld [vmem:[%s1521 + $0x3c] sm:$0xf]
    %v1554 = vunpack.c.l.b16 %v1522
    %v1555 = vunpack.c.l.b16 %v1523
    %v1556 = vunpack.c.l.b16 %v1524
    %v1557 = vunpack.c.l.b16 %v1525
    %v1558 = vunpack.c.l.b16 %v1526
    %v1559 = vunpack.c.l.b16 %v1527
    %v1560 = vunpack.c.l.b16 %v1528
    %v1561 = vunpack.c.l.b16 %v1529
    %v1562 = vunpack.c.l.b16 %v1530
    %v1563 = vunpack.c.l.b16 %v1531
    %v1564 = vunpack.c.l.b16 %v1532
    %v1565 = vunpack.c.l.b16 %v1533
    %v1566 = vunpack.c.l.b16 %v1534
    %v1567 = vunpack.c.l.b16 %v1535
    %v1568 = vunpack.c.l.b16 %v1536
    %v1569 = vunpack.c.l.b16 %v1537
    %v1570 = vpack.c.b16 %v1555, %v1554
    %v1571 = vpack.c.b16 %v1557, %v1556
    %v1572 = vpack.c.b16 %v1559, %v1558
    %v1573 = vpack.c.b16 %v1561, %v1560
    %v1574 = vpack.c.b16 %v1563, %v1562
    %v1575 = vpack.c.b16 %v1565, %v1564
    %v1576 = vpack.c.b16 %v1567, %v1566
    %v1577 = vpack.c.b16 %v1569, %v1568
    %1586 = vmatprep.subr.bf16.mxu0 0
    %1587 = vmatpush1.bf16.msra.mxu0 %v1577
    %1588 = vmatprep.subr.bf16.mxu0 0
    %1589 = vmatpush1.bf16.msra.mxu0 %v1576
    %1590 = vmatprep.subr.bf16.mxu0 0
    %1591 = vmatpush1.bf16.msra.mxu0 %v1575
    %1592 = vmatprep.subr.bf16.mxu0 0
    %1593 = vmatpush1.bf16.msra.mxu0 %v1574
    %1594 = vmatprep.subr.bf16.mxu0 0
    %1595 = vmatpush1.bf16.msra.mxu0 %v1573
    %1596 = vmatprep.subr.bf16.mxu0 0
    %1597 = vmatpush1.bf16.msra.mxu0 %v1572
    %1598 = vmatprep.subr.bf16.mxu0 0
    %1599 = vmatpush1.bf16.msra.mxu0 %v1571
    %1600 = vmatprep.subr.bf16.mxu0 0
    %1601 = vmatpush1.bf16.msra.mxu0 %v1570
    %1602 = vmatprep.subr.bf16.mxu0 0
    %1603 = vmatpush2.bf16.msra.mxu0 0
    %1604 = vmatprep.subr.bf16.mxu0 0
    %1605 = vmatpush2.bf16.msra.mxu0 0
    %1606 = vmatprep.subr.bf16.mxu0 0
    %1607 = vmatpush2.bf16.msra.mxu0 0
    %1608 = vmatprep.subr.bf16.mxu0 0
    %1609 = vmatpush2.bf16.msra.mxu0 0
    %1610 = vmatprep.subr.bf16.mxu0 0
    %1611 = vmatpush2.bf16.msra.mxu0 0
    %1612 = vmatprep.subr.bf16.mxu0 0
    %1613 = vmatpush2.bf16.msra.mxu0 0
    %1614 = vmatprep.subr.bf16.mxu0 0
    %1615 = vmatpush2.bf16.msra.mxu0 0
    %1616 = vmatprep.subr.bf16.mxu0 0
    %1617 = vmatpush2.bf16.msra.mxu0 0
    %1618 = vmatprep.mubr.bf16.mxu0 0
    %1619 = vmatmul.mubr.bf16.gmra.mxu0 %v1520
    %v1620 = vpop.f32.mrf.mxu0
    %v1621 = vadd.f32 0.0, %v1620
    %v1622 = vpop.f32.mrf.mxu0
    %v1623 = vpop.f32.mrf.mxu0
    %v1624 = vpop.f32.mrf.mxu0
    %1625 = vdwg.mxu0
    %v1626 = vadd.f32 %v1474, %v1621
    %s1627 = scalar_lea.vmem %s2, 4
    %v1628 = vld [vmem:[%s1627] sm:$0x1]
    %v1630 = vsel %vm95, %v1628, 0
    %1632 = vmatprep.subr.bf16.mxu0 0
    %1633 = vmatpush1.bf16.msra.mxu0 0
    %1634 = vmatprep.subr.bf16.mxu0 0
    %1635 = vmatpush1.bf16.msra.mxu0 0
    %1636 = vmatprep.subr.bf16.mxu0 0
    %1637 = vmatpush1.bf16.msra.mxu0 0
    %1638 = vmatprep.subr.bf16.mxu0 0
    %1639 = vmatpush1.bf16.msra.mxu0 0
    %1640 = vmatprep.subr.bf16.mxu0 0
    %1641 = vmatpush1.bf16.msra.mxu0 0
    %1642 = vmatprep.subr.bf16.mxu0 0
    %1643 = vmatpush1.bf16.msra.mxu0 0
    %1644 = vmatprep.subr.bf16.mxu0 0
    %1645 = vmatpush1.bf16.msra.mxu0 0
    %1646 = vmatprep.subr.bf16.mxu0 0
    %1647 = vmatpush1.bf16.msra.mxu0 %v1013
    %1648 = vmatprep.subr.bf16.mxu0 0
    %1649 = vmatpush2.bf16.msra.mxu0 0
    %1650 = vmatprep.subr.bf16.mxu0 0
    %1651 = vmatpush2.bf16.msra.mxu0 0
    %1652 = vmatprep.subr.bf16.mxu0 0
    %1653 = vmatpush2.bf16.msra.mxu0 0
    %1654 = vmatprep.subr.bf16.mxu0 0
    %1655 = vmatpush2.bf16.msra.mxu0 0
    %1656 = vmatprep.subr.bf16.mxu0 0
    %1657 = vmatpush2.bf16.msra.mxu0 0
    %1658 = vmatprep.subr.bf16.mxu0 0
    %1659 = vmatpush2.bf16.msra.mxu0 0
    %1660 = vmatprep.subr.bf16.mxu0 0
    %1661 = vmatpush2.bf16.msra.mxu0 0
    %1662 = vmatprep.subr.bf16.mxu0 0
    %1663 = vmatpush2.bf16.msra.mxu0 0
    %1664 = vmatprep.mubr.bf16.mxu0 0
    %1665 = vmatmul.mubr.bf16.gmra.mxu0 %v1630
    %v1666 = vpop.f32.mrf.mxu0
    %v1667 = vadd.f32 0.0, %v1666
    %v1668 = vpop.f32.mrf.mxu0
    %v1669 = vpop.f32.mrf.mxu0
    %v1670 = vpop.f32.mrf.mxu0
    %1671 = vdwg.mxu0
    %v1672 = vpack.c.bf16 %v1667, %v1667
    %s1673 = scalar_lea.vmem %s8, 256
    %v1674 = vld [vmem:[%s1673] sm:$0xf]
    %v1675 = vld [vmem:[%s1673 + $0x4] sm:$0xf]
    %v1676 = vld [vmem:[%s1673 + $0x8] sm:$0xf]
    %v1677 = vld [vmem:[%s1673 + $0xc] sm:$0xf]
    %v1678 = vld [vmem:[%s1673 + $0x10] sm:$0xf]
    %v1679 = vld [vmem:[%s1673 + $0x14] sm:$0xf]
    %v1680 = vld [vmem:[%s1673 + $0x18] sm:$0xf]
    %v1681 = vld [vmem:[%s1673 + $0x1c] sm:$0xf]
    %v1682 = vld [vmem:[%s1673 + $0x20] sm:$0xf]
    %v1683 = vld [vmem:[%s1673 + $0x24] sm:$0xf]
    %v1684 = vld [vmem:[%s1673 + $0x28] sm:$0xf]
    %v1685 = vld [vmem:[%s1673 + $0x2c] sm:$0xf]
    %v1686 = vld [vmem:[%s1673 + $0x30] sm:$0xf]
    %v1687 = vld [vmem:[%s1673 + $0x34] sm:$0xf]
    %v1688 = vld [vmem:[%s1673 + $0x38] sm:$0xf]
    %v1689 = vld [vmem:[%s1673 + $0x3c] sm:$0xf]
    %v1706 = vunpack.c.l.b16 %v1674
    %v1707 = vunpack.c.l.b16 %v1675
    %v1708 = vunpack.c.l.b16 %v1676
    %v1709 = vunpack.c.l.b16 %v1677
    %v1710 = vunpack.c.l.b16 %v1678
    %v1711 = vunpack.c.l.b16 %v1679
    %v1712 = vunpack.c.l.b16 %v1680
    %v1713 = vunpack.c.l.b16 %v1681
    %v1714 = vunpack.c.l.b16 %v1682
    %v1715 = vunpack.c.l.b16 %v1683
    %v1716 = vunpack.c.l.b16 %v1684
    %v1717 = vunpack.c.l.b16 %v1685
    %v1718 = vunpack.c.l.b16 %v1686
    %v1719 = vunpack.c.l.b16 %v1687
    %v1720 = vunpack.c.l.b16 %v1688
    %v1721 = vunpack.c.l.b16 %v1689
    %v1722 = vpack.c.b16 %v1707, %v1706
    %v1723 = vpack.c.b16 %v1709, %v1708
    %v1724 = vpack.c.b16 %v1711, %v1710
    %v1725 = vpack.c.b16 %v1713, %v1712
    %v1726 = vpack.c.b16 %v1715, %v1714
    %v1727 = vpack.c.b16 %v1717, %v1716
    %v1728 = vpack.c.b16 %v1719, %v1718
    %v1729 = vpack.c.b16 %v1721, %v1720
    %1738 = vmatprep.subr.bf16.mxu0 0
    %1739 = vmatpush1.bf16.msra.mxu0 %v1729
    %1740 = vmatprep.subr.bf16.mxu0 0
    %1741 = vmatpush1.bf16.msra.mxu0 %v1728
    %1742 = vmatprep.subr.bf16.mxu0 0
    %1743 = vmatpush1.bf16.msra.mxu0 %v1727
    %1744 = vmatprep.subr.bf16.mxu0 0
    %1745 = vmatpush1.bf16.msra.mxu0 %v1726
    %1746 = vmatprep.subr.bf16.mxu0 0
    %1747 = vmatpush1.bf16.msra.mxu0 %v1725
    %1748 = vmatprep.subr.bf16.mxu0 0
    %1749 = vmatpush1.bf16.msra.mxu0 %v1724
    %1750 = vmatprep.subr.bf16.mxu0 0
    %1751 = vmatpush1.bf16.msra.mxu0 %v1723
    %1752 = vmatprep.subr.bf16.mxu0 0
    %1753 = vmatpush1.bf16.msra.mxu0 %v1722
    %1754 = vmatprep.subr.bf16.mxu0 0
    %1755 = vmatpush2.bf16.msra.mxu0 0
    %1756 = vmatprep.subr.bf16.mxu0 0
    %1757 = vmatpush2.bf16.msra.mxu0 0
    %1758 = vmatprep.subr.bf16.mxu0 0
    %1759 = vmatpush2.bf16.msra.mxu0 0
    %1760 = vmatprep.subr.bf16.mxu0 0
    %1761 = vmatpush2.bf16.msra.mxu0 0
    %1762 = vmatprep.subr.bf16.mxu0 0
    %1763 = vmatpush2.bf16.msra.mxu0 0
    %1764 = vmatprep.subr.bf16.mxu0 0
    %1765 = vmatpush2.bf16.msra.mxu0 0
    %1766 = vmatprep.subr.bf16.mxu0 0
    %1767 = vmatpush2.bf16.msra.mxu0 0
    %1768 = vmatprep.subr.bf16.mxu0 0
    %1769 = vmatpush2.bf16.msra.mxu0 0
    %1770 = vmatprep.mubr.bf16.mxu0 0
    %1771 = vmatmul.mubr.bf16.gmra.mxu0 %v1672
    %v1772 = vpop.f32.mrf.mxu0
    %v1773 = vadd.f32 0.0, %v1772
    %v1774 = vpop.f32.mrf.mxu0
    %v1775 = vpop.f32.mrf.mxu0
    %v1776 = vpop.f32.mrf.mxu0
    %1777 = vdwg.mxu0
    %v1778 = vadd.f32 %v1626, %v1773
    %s1779 = scalar_lea.vmem %s2, 5
    %v1780 = vld [vmem:[%s1779] sm:$0x1]
    %v1782 = vsel %vm95, %v1780, 0
    %1784 = vmatprep.subr.bf16.mxu0 0
    %1785 = vmatpush1.bf16.msra.mxu0 0
    %1786 = vmatprep.subr.bf16.mxu0 0
    %1787 = vmatpush1.bf16.msra.mxu0 0
    %1788 = vmatprep.subr.bf16.mxu0 0
    %1789 = vmatpush1.bf16.msra.mxu0 0
    %1790 = vmatprep.subr.bf16.mxu0 0
    %1791 = vmatpush1.bf16.msra.mxu0 0
    %1792 = vmatprep.subr.bf16.mxu0 0
    %1793 = vmatpush1.bf16.msra.mxu0 0
    %1794 = vmatprep.subr.bf16.mxu0 0
    %1795 = vmatpush1.bf16.msra.mxu0 0
    %1796 = vmatprep.subr.bf16.mxu0 0
    %1797 = vmatpush1.bf16.msra.mxu0 0
    %1798 = vmatprep.subr.bf16.mxu0 0
    %1799 = vmatpush1.bf16.msra.mxu0 %v1013
    %1800 = vmatprep.subr.bf16.mxu0 0
    %1801 = vmatpush2.bf16.msra.mxu0 0
    %1802 = vmatprep.subr.bf16.mxu0 0
    %1803 = vmatpush2.bf16.msra.mxu0 0
    %1804 = vmatprep.subr.bf16.mxu0 0
    %1805 = vmatpush2.bf16.msra.mxu0 0
    %1806 = vmatprep.subr.bf16.mxu0 0
    %1807 = vmatpush2.bf16.msra.mxu0 0
    %1808 = vmatprep.subr.bf16.mxu0 0
    %1809 = vmatpush2.bf16.msra.mxu0 0
    %1810 = vmatprep.subr.bf16.mxu0 0
    %1811 = vmatpush2.bf16.msra.mxu0 0
    %1812 = vmatprep.subr.bf16.mxu0 0
    %1813 = vmatpush2.bf16.msra.mxu0 0
    %1814 = vmatprep.subr.bf16.mxu0 0
    %1815 = vmatpush2.bf16.msra.mxu0 0
    %1816 = vmatprep.mubr.bf16.mxu0 0
    %1817 = vmatmul.mubr.bf16.gmra.mxu0 %v1782
    %v1818 = vpop.f32.mrf.mxu0
    %v1819 = vadd.f32 0.0, %v1818
    %v1820 = vpop.f32.mrf.mxu0
    %v1821 = vpop.f32.mrf.mxu0
    %v1822 = vpop.f32.mrf.mxu0
    %1823 = vdwg.mxu0
    %v1824 = vpack.c.bf16 %v1819, %v1819
    %s1825 = scalar_lea.vmem %s8, 320
    %v1826 = vld [vmem:[%s1825] sm:$0xf]
    %v1827 = vld [vmem:[%s1825 + $0x4] sm:$0xf]
    %v1828 = vld [vmem:[%s1825 + $0x8] sm:$0xf]
    %v1829 = vld [vmem:[%s1825 + $0xc] sm:$0xf]
    %v1830 = vld [vmem:[%s1825 + $0x10] sm:$0xf]
    %v1831 = vld [vmem:[%s1825 + $0x14] sm:$0xf]
    %v1832 = vld [vmem:[%s1825 + $0x18] sm:$0xf]
    %v1833 = vld [vmem:[%s1825 + $0x1c] sm:$0xf]
    %v1834 = vld [vmem:[%s1825 + $0x20] sm:$0xf]
    %v1835 = vld [vmem:[%s1825 + $0x24] sm:$0xf]
    %v1836 = vld [vmem:[%s1825 + $0x28] sm:$0xf]
    %v1837 = vld [vmem:[%s1825 + $0x2c] sm:$0xf]
    %v1838 = vld [vmem:[%s1825 + $0x30] sm:$0xf]
    %v1839 = vld [vmem:[%s1825 + $0x34] sm:$0xf]
    %v1840 = vld [vmem:[%s1825 + $0x38] sm:$0xf]
    %v1841 = vld [vmem:[%s1825 + $0x3c] sm:$0xf]
    %v1858 = vunpack.c.l.b16 %v1826
    %v1859 = vunpack.c.l.b16 %v1827
    %v1860 = vunpack.c.l.b16 %v1828
    %v1861 = vunpack.c.l.b16 %v1829
    %v1862 = vunpack.c.l.b16 %v1830
    %v1863 = vunpack.c.l.b16 %v1831
    %v1864 = vunpack.c.l.b16 %v1832
    %v1865 = vunpack.c.l.b16 %v1833
    %v1866 = vunpack.c.l.b16 %v1834
    %v1867 = vunpack.c.l.b16 %v1835
    %v1868 = vunpack.c.l.b16 %v1836
    %v1869 = vunpack.c.l.b16 %v1837
    %v1870 = vunpack.c.l.b16 %v1838
    %v1871 = vunpack.c.l.b16 %v1839
    %v1872 = vunpack.c.l.b16 %v1840
    %v1873 = vunpack.c.l.b16 %v1841
    %v1874 = vpack.c.b16 %v1859, %v1858
    %v1875 = vpack.c.b16 %v1861, %v1860
    %v1876 = vpack.c.b16 %v1863, %v1862
    %v1877 = vpack.c.b16 %v1865, %v1864
    %v1878 = vpack.c.b16 %v1867, %v1866
    %v1879 = vpack.c.b16 %v1869, %v1868
    %v1880 = vpack.c.b16 %v1871, %v1870
    %v1881 = vpack.c.b16 %v1873, %v1872
    %1890 = vmatprep.subr.bf16.mxu0 0
    %1891 = vmatpush1.bf16.msra.mxu0 %v1881
    %1892 = vmatprep.subr.bf16.mxu0 0
    %1893 = vmatpush1.bf16.msra.mxu0 %v1880
    %1894 = vmatprep.subr.bf16.mxu0 0
    %1895 = vmatpush1.bf16.msra.mxu0 %v1879
    %1896 = vmatprep.subr.bf16.mxu0 0
    %1897 = vmatpush1.bf16.msra.mxu0 %v1878
    %1898 = vmatprep.subr.bf16.mxu0 0
    %1899 = vmatpush1.bf16.msra.mxu0 %v1877
    %1900 = vmatprep.subr.bf16.mxu0 0
    %1901 = vmatpush1.bf16.msra.mxu0 %v1876
    %1902 = vmatprep.subr.bf16.mxu0 0
    %1903 = vmatpush1.bf16.msra.mxu0 %v1875
    %1904 = vmatprep.subr.bf16.mxu0 0
    %1905 = vmatpush1.bf16.msra.mxu0 %v1874
    %1906 = vmatprep.subr.bf16.mxu0 0
    %1907 = vmatpush2.bf16.msra.mxu0 0
    %1908 = vmatprep.subr.bf16.mxu0 0
    %1909 = vmatpush2.bf16.msra.mxu0 0
    %1910 = vmatprep.subr.bf16.mxu0 0
    %1911 = vmatpush2.bf16.msra.mxu0 0
    %1912 = vmatprep.subr.bf16.mxu0 0
    %1913 = vmatpush2.bf16.msra.mxu0 0
    %1914 = vmatprep.subr.bf16.mxu0 0
    %1915 = vmatpush2.bf16.msra.mxu0 0
    %1916 = vmatprep.subr.bf16.mxu0 0
    %1917 = vmatpush2.bf16.msra.mxu0 0
    %1918 = vmatprep.subr.bf16.mxu0 0
    %1919 = vmatpush2.bf16.msra.mxu0 0
    %1920 = vmatprep.subr.bf16.mxu0 0
    %1921 = vmatpush2.bf16.msra.mxu0 0
    %1922 = vmatprep.mubr.bf16.mxu0 0
    %1923 = vmatmul.mubr.bf16.gmra.mxu0 %v1824
    %v1924 = vpop.f32.mrf.mxu0
    %v1925 = vadd.f32 0.0, %v1924
    %v1926 = vpop.f32.mrf.mxu0
    %v1927 = vpop.f32.mrf.mxu0
    %v1928 = vpop.f32.mrf.mxu0
    %1929 = vdwg.mxu0
    %v1930 = vadd.f32 %v1778, %v1925
    %s1931 = scalar_lea.vmem %s2, 6
    %v1932 = vld [vmem:[%s1931] sm:$0x1]
    %v1934 = vsel %vm95, %v1932, 0
    %1936 = vmatprep.subr.bf16.mxu0 0
    %1937 = vmatpush1.bf16.msra.mxu0 0
    %1938 = vmatprep.subr.bf16.mxu0 0
    %1939 = vmatpush1.bf16.msra.mxu0 0
    %1940 = vmatprep.subr.bf16.mxu0 0
    %1941 = vmatpush1.bf16.msra.mxu0 0
    %1942 = vmatprep.subr.bf16.mxu0 0
    %1943 = vmatpush1.bf16.msra.mxu0 0
    %1944 = vmatprep.subr.bf16.mxu0 0
    %1945 = vmatpush1.bf16.msra.mxu0 0
    %1946 = vmatprep.subr.bf16.mxu0 0
    %1947 = vmatpush1.bf16.msra.mxu0 0
    %1948 = vmatprep.subr.bf16.mxu0 0
    %1949 = vmatpush1.bf16.msra.mxu0 0
    %1950 = vmatprep.subr.bf16.mxu0 0
    %1951 = vmatpush1.bf16.msra.mxu0 %v1013
    %1952 = vmatprep.subr.bf16.mxu0 0
    %1953 = vmatpush2.bf16.msra.mxu0 0
    %1954 = vmatprep.subr.bf16.mxu0 0
    %1955 = vmatpush2.bf16.msra.mxu0 0
    %1956 = vmatprep.subr.bf16.mxu0 0
    %1957 = vmatpush2.bf16.msra.mxu0 0
    %1958 = vmatprep.subr.bf16.mxu0 0
    %1959 = vmatpush2.bf16.msra.mxu0 0
    %1960 = vmatprep.subr.bf16.mxu0 0
    %1961 = vmatpush2.bf16.msra.mxu0 0
    %1962 = vmatprep.subr.bf16.mxu0 0
    %1963 = vmatpush2.bf16.msra.mxu0 0
    %1964 = vmatprep.subr.bf16.mxu0 0
    %1965 = vmatpush2.bf16.msra.mxu0 0
    %1966 = vmatprep.subr.bf16.mxu0 0
    %1967 = vmatpush2.bf16.msra.mxu0 0
    %1968 = vmatprep.mubr.bf16.mxu0 0
    %1969 = vmatmul.mubr.bf16.gmra.mxu0 %v1934
    %v1970 = vpop.f32.mrf.mxu0
    %v1971 = vadd.f32 0.0, %v1970
    %v1972 = vpop.f32.mrf.mxu0
    %v1973 = vpop.f32.mrf.mxu0
    %v1974 = vpop.f32.mrf.mxu0
    %1975 = vdwg.mxu0
    %v1976 = vpack.c.bf16 %v1971, %v1971
    %s1977 = scalar_lea.vmem %s8, 384
    %v1978 = vld [vmem:[%s1977] sm:$0xf]
    %v1979 = vld [vmem:[%s1977 + $0x4] sm:$0xf]
    %v1980 = vld [vmem:[%s1977 + $0x8] sm:$0xf]
    %v1981 = vld [vmem:[%s1977 + $0xc] sm:$0xf]
    %v1982 = vld [vmem:[%s1977 + $0x10] sm:$0xf]
    %v1983 = vld [vmem:[%s1977 + $0x14] sm:$0xf]
    %v1984 = vld [vmem:[%s1977 + $0x18] sm:$0xf]
    %v1985 = vld [vmem:[%s1977 + $0x1c] sm:$0xf]
    %v1986 = vld [vmem:[%s1977 + $0x20] sm:$0xf]
    %v1987 = vld [vmem:[%s1977 + $0x24] sm:$0xf]
    %v1988 = vld [vmem:[%s1977 + $0x28] sm:$0xf]
    %v1989 = vld [vmem:[%s1977 + $0x2c] sm:$0xf]
    %v1990 = vld [vmem:[%s1977 + $0x30] sm:$0xf]
    %v1991 = vld [vmem:[%s1977 + $0x34] sm:$0xf]
    %v1992 = vld [vmem:[%s1977 + $0x38] sm:$0xf]
    %v1993 = vld [vmem:[%s1977 + $0x3c] sm:$0xf]
    %v2010 = vunpack.c.l.b16 %v1978
    %v2011 = vunpack.c.l.b16 %v1979
    %v2012 = vunpack.c.l.b16 %v1980
    %v2013 = vunpack.c.l.b16 %v1981
    %v2014 = vunpack.c.l.b16 %v1982
    %v2015 = vunpack.c.l.b16 %v1983
    %v2016 = vunpack.c.l.b16 %v1984
    %v2017 = vunpack.c.l.b16 %v1985
    %v2018 = vunpack.c.l.b16 %v1986
    %v2019 = vunpack.c.l.b16 %v1987
    %v2020 = vunpack.c.l.b16 %v1988
    %v2021 = vunpack.c.l.b16 %v1989
    %v2022 = vunpack.c.l.b16 %v1990
    %v2023 = vunpack.c.l.b16 %v1991
    %v2024 = vunpack.c.l.b16 %v1992
    %v2025 = vunpack.c.l.b16 %v1993
    %v2026 = vpack.c.b16 %v2011, %v2010
    %v2027 = vpack.c.b16 %v2013, %v2012
    %v2028 = vpack.c.b16 %v2015, %v2014
    %v2029 = vpack.c.b16 %v2017, %v2016
    %v2030 = vpack.c.b16 %v2019, %v2018
    %v2031 = vpack.c.b16 %v2021, %v2020
    %v2032 = vpack.c.b16 %v2023, %v2022
    %v2033 = vpack.c.b16 %v2025, %v2024
    %2042 = vmatprep.subr.bf16.mxu0 0
    %2043 = vmatpush1.bf16.msra.mxu0 %v2033
    %2044 = vmatprep.subr.bf16.mxu0 0
    %2045 = vmatpush1.bf16.msra.mxu0 %v2032
    %2046 = vmatprep.subr.bf16.mxu0 0
    %2047 = vmatpush1.bf16.msra.mxu0 %v2031
    %2048 = vmatprep.subr.bf16.mxu0 0
    %2049 = vmatpush1.bf16.msra.mxu0 %v2030
    %2050 = vmatprep.subr.bf16.mxu0 0
    %2051 = vmatpush1.bf16.msra.mxu0 %v2029
    %2052 = vmatprep.subr.bf16.mxu0 0
    %2053 = vmatpush1.bf16.msra.mxu0 %v2028
    %2054 = vmatprep.subr.bf16.mxu0 0
    %2055 = vmatpush1.bf16.msra.mxu0 %v2027
    %2056 = vmatprep.subr.bf16.mxu0 0
    %2057 = vmatpush1.bf16.msra.mxu0 %v2026
    %2058 = vmatprep.subr.bf16.mxu0 0
    %2059 = vmatpush2.bf16.msra.mxu0 0
    %2060 = vmatprep.subr.bf16.mxu0 0
    %2061 = vmatpush2.bf16.msra.mxu0 0
    %2062 = vmatprep.subr.bf16.mxu0 0
    %2063 = vmatpush2.bf16.msra.mxu0 0
    %2064 = vmatprep.subr.bf16.mxu0 0
    %2065 = vmatpush2.bf16.msra.mxu0 0
    %2066 = vmatprep.subr.bf16.mxu0 0
    %2067 = vmatpush2.bf16.msra.mxu0 0
    %2068 = vmatprep.subr.bf16.mxu0 0
    %2069 = vmatpush2.bf16.msra.mxu0 0
    %2070 = vmatprep.subr.bf16.mxu0 0
    %2071 = vmatpush2.bf16.msra.mxu0 0
    %2072 = vmatprep.subr.bf16.mxu0 0
    %2073 = vmatpush2.bf16.msra.mxu0 0
    %2074 = vmatprep.mubr.bf16.mxu0 0
    %2075 = vmatmul.mubr.bf16.gmra.mxu0 %v1976
    %v2076 = vpop.f32.mrf.mxu0
    %v2077 = vadd.f32 0.0, %v2076
    %v2078 = vpop.f32.mrf.mxu0
    %v2079 = vpop.f32.mrf.mxu0
    %v2080 = vpop.f32.mrf.mxu0
    %2081 = vdwg.mxu0
    %v2082 = vadd.f32 %v1930, %v2077
    %s2083 = scalar_lea.vmem %s2, 7
    %v2084 = vld [vmem:[%s2083] sm:$0x1]
    %v2086 = vsel %vm95, %v2084, 0
    %2088 = vmatprep.subr.bf16.mxu0 0
    %2089 = vmatpush1.bf16.msra.mxu0 0
    %2090 = vmatprep.subr.bf16.mxu0 0
    %2091 = vmatpush1.bf16.msra.mxu0 0
    %2092 = vmatprep.subr.bf16.mxu0 0
    %2093 = vmatpush1.bf16.msra.mxu0 0
    %2094 = vmatprep.subr.bf16.mxu0 0
    %2095 = vmatpush1.bf16.msra.mxu0 0
    %2096 = vmatprep.subr.bf16.mxu0 0
    %2097 = vmatpush1.bf16.msra.mxu0 0
    %2098 = vmatprep.subr.bf16.mxu0 0
    %2099 = vmatpush1.bf16.msra.mxu0 0
    %2100 = vmatprep.subr.bf16.mxu0 0
    %2101 = vmatpush1.bf16.msra.mxu0 0
    %2102 = vmatprep.subr.bf16.mxu0 0
    %2103 = vmatpush1.bf16.msra.mxu0 %v1013
    %2104 = vmatprep.subr.bf16.mxu0 0
    %2105 = vmatpush2.bf16.msra.mxu0 0
    %2106 = vmatprep.subr.bf16.mxu0 0
    %2107 = vmatpush2.bf16.msra.mxu0 0
    %2108 = vmatprep.subr.bf16.mxu0 0
    %2109 = vmatpush2.bf16.msra.mxu0 0
    %2110 = vmatprep.subr.bf16.mxu0 0
    %2111 = vmatpush2.bf16.msra.mxu0 0
    %2112 = vmatprep.subr.bf16.mxu0 0
    %2113 = vmatpush2.bf16.msra.mxu0 0
    %2114 = vmatprep.subr.bf16.mxu0 0
    %2115 = vmatpush2.bf16.msra.mxu0 0
    %2116 = vmatprep.subr.bf16.mxu0 0
    %2117 = vmatpush2.bf16.msra.mxu0 0
    %2118 = vmatprep.subr.bf16.mxu0 0
    %2119 = vmatpush2.bf16.msra.mxu0 0
    %2120 = vmatprep.mubr.bf16.mxu0 0
    %2121 = vmatmul.mubr.bf16.gmra.mxu0 %v2086
    %v2122 = vpop.f32.mrf.mxu0
    %v2123 = vadd.f32 0.0, %v2122
    %v2124 = vpop.f32.mrf.mxu0
    %v2125 = vpop.f32.mrf.mxu0
    %v2126 = vpop.f32.mrf.mxu0
    %2127 = vdwg.mxu0
    %v2128 = vpack.c.bf16 %v2123, %v2123
    %s2129 = scalar_lea.vmem %s8, 448
    %v2130 = vld [vmem:[%s2129] sm:$0xf]
    %v2131 = vld [vmem:[%s2129 + $0x4] sm:$0xf]
    %v2132 = vld [vmem:[%s2129 + $0x8] sm:$0xf]
    %v2133 = vld [vmem:[%s2129 + $0xc] sm:$0xf]
    %v2134 = vld [vmem:[%s2129 + $0x10] sm:$0xf]
    %v2135 = vld [vmem:[%s2129 + $0x14] sm:$0xf]
    %v2136 = vld [vmem:[%s2129 + $0x18] sm:$0xf]
    %v2137 = vld [vmem:[%s2129 + $0x1c] sm:$0xf]
    %v2138 = vld [vmem:[%s2129 + $0x20] sm:$0xf]
    %v2139 = vld [vmem:[%s2129 + $0x24] sm:$0xf]
    %v2140 = vld [vmem:[%s2129 + $0x28] sm:$0xf]
    %v2141 = vld [vmem:[%s2129 + $0x2c] sm:$0xf]
    %v2142 = vld [vmem:[%s2129 + $0x30] sm:$0xf]
    %v2143 = vld [vmem:[%s2129 + $0x34] sm:$0xf]
    %v2144 = vld [vmem:[%s2129 + $0x38] sm:$0xf]
    %v2145 = vld [vmem:[%s2129 + $0x3c] sm:$0xf]
    %v2162 = vunpack.c.l.b16 %v2130
    %v2163 = vunpack.c.l.b16 %v2131
    %v2164 = vunpack.c.l.b16 %v2132
    %v2165 = vunpack.c.l.b16 %v2133
    %v2166 = vunpack.c.l.b16 %v2134
    %v2167 = vunpack.c.l.b16 %v2135
    %v2168 = vunpack.c.l.b16 %v2136
    %v2169 = vunpack.c.l.b16 %v2137
    %v2170 = vunpack.c.l.b16 %v2138
    %v2171 = vunpack.c.l.b16 %v2139
    %v2172 = vunpack.c.l.b16 %v2140
    %v2173 = vunpack.c.l.b16 %v2141
    %v2174 = vunpack.c.l.b16 %v2142
    %v2175 = vunpack.c.l.b16 %v2143
    %v2176 = vunpack.c.l.b16 %v2144
    %v2177 = vunpack.c.l.b16 %v2145
    %v2178 = vpack.c.b16 %v2163, %v2162
    %v2179 = vpack.c.b16 %v2165, %v2164
    %v2180 = vpack.c.b16 %v2167, %v2166
    %v2181 = vpack.c.b16 %v2169, %v2168
    %v2182 = vpack.c.b16 %v2171, %v2170
    %v2183 = vpack.c.b16 %v2173, %v2172
    %v2184 = vpack.c.b16 %v2175, %v2174
    %v2185 = vpack.c.b16 %v2177, %v2176
    %2194 = vmatprep.subr.bf16.mxu0 0
    %2195 = vmatpush1.bf16.msra.mxu0 %v2185
    %2196 = vmatprep.subr.bf16.mxu0 0
    %2197 = vmatpush1.bf16.msra.mxu0 %v2184
    %2198 = vmatprep.subr.bf16.mxu0 0
    %2199 = vmatpush1.bf16.msra.mxu0 %v2183
    %2200 = vmatprep.subr.bf16.mxu0 0
    %2201 = vmatpush1.bf16.msra.mxu0 %v2182
    %2202 = vmatprep.subr.bf16.mxu0 0
    %2203 = vmatpush1.bf16.msra.mxu0 %v2181
    %2204 = vmatprep.subr.bf16.mxu0 0
    %2205 = vmatpush1.bf16.msra.mxu0 %v2180
    %2206 = vmatprep.subr.bf16.mxu0 0
    %2207 = vmatpush1.bf16.msra.mxu0 %v2179
    %2208 = vmatprep.subr.bf16.mxu0 0
    %2209 = vmatpush1.bf16.msra.mxu0 %v2178
    %2210 = vmatprep.subr.bf16.mxu0 0
    %2211 = vmatpush2.bf16.msra.mxu0 0
    %2212 = vmatprep.subr.bf16.mxu0 0
    %2213 = vmatpush2.bf16.msra.mxu0 0
    %2214 = vmatprep.subr.bf16.mxu0 0
    %2215 = vmatpush2.bf16.msra.mxu0 0
    %2216 = vmatprep.subr.bf16.mxu0 0
    %2217 = vmatpush2.bf16.msra.mxu0 0
    %2218 = vmatprep.subr.bf16.mxu0 0
    %2219 = vmatpush2.bf16.msra.mxu0 0
    %2220 = vmatprep.subr.bf16.mxu0 0
    %2221 = vmatpush2.bf16.msra.mxu0 0
    %2222 = vmatprep.subr.bf16.mxu0 0
    %2223 = vmatpush2.bf16.msra.mxu0 0
    %2224 = vmatprep.subr.bf16.mxu0 0
    %2225 = vmatpush2.bf16.msra.mxu0 0
    %2226 = vmatprep.mubr.bf16.mxu0 0
    %2227 = vmatmul.mubr.bf16.gmra.mxu0 %v2128
    %v2228 = vpop.f32.mrf.mxu0
    %v2229 = vadd.f32 0.0, %v2228
    %v2230 = vpop.f32.mrf.mxu0
    %v2231 = vpop.f32.mrf.mxu0
    %v2232 = vpop.f32.mrf.mxu0
    %2233 = vdwg.mxu0
    %v2234 = vadd.f32 %v2082, %v2229
    %v2235 = vmax.f32 %v2234, 0.0
    %v2236 = vpack.c.bf16 %v2235, %v2235
    %v2237 = vld [vmem:[%s10] sm:$0xf]
    %v2238 = vld [vmem:[%s10 + $0x4] sm:$0xf]
    %v2239 = vld [vmem:[%s10 + $0x8] sm:$0xf]
    %v2240 = vld [vmem:[%s10 + $0xc] sm:$0xf]
    %v2241 = vld [vmem:[%s11] sm:$0x1]
    %v2243 = vlaneseq
    %v2244 = vshrl.u32 %v2243, 7
    %v2245 = vsub.s32 0, %v2244
    %v2246 = vrot.slane %v2241, %v2245
    %v2252 = vunpack.c.l.b16 %v2237
    %v2253 = vunpack.c.l.b16 %v2238
    %v2254 = vunpack.c.l.b16 %v2239
    %v2255 = vunpack.c.l.b16 %v2240
    %v2256 = vpack.c.b16 %v2253, %v2252
    %v2257 = vpack.c.b16 %v2255, %v2254
    %vm2260 = vcmask 261120
    %v2262 = vsel %vm2260, %v2236, 0
    %2264 = vmatprep.subr.bf16.mxu0 0
    %2265 = vmatpush1.bf16.msra.mxu0 0
    %2266 = vmatprep.subr.bf16.mxu0 0
    %2267 = vmatpush1.bf16.msra.mxu0 0
    %2268 = vmatprep.subr.bf16.mxu0 0
    %2269 = vmatpush1.bf16.msra.mxu0 0
    %2270 = vmatprep.subr.bf16.mxu0 0
    %2271 = vmatpush1.bf16.msra.mxu0 0
    %2272 = vmatprep.subr.bf16.mxu0 0
    %2273 = vmatpush1.bf16.msra.mxu0 0
    %2274 = vmatprep.subr.bf16.mxu0 0
    %2275 = vmatpush1.bf16.msra.mxu0 0
    %2276 = vmatprep.subr.bf16.mxu0 0
    %2277 = vmatpush1.bf16.msra.mxu0 %v2257
    %2278 = vmatprep.subr.bf16.mxu0 0
    %2279 = vmatpush1.bf16.msra.mxu0 %v2256
    %2280 = vmatprep.subr.bf16.mxu0 0
    %2281 = vmatpush2.bf16.msra.mxu0 0
    %2282 = vmatprep.subr.bf16.mxu0 0
    %2283 = vmatpush2.bf16.msra.mxu0 0
    %2284 = vmatprep.subr.bf16.mxu0 0
    %2285 = vmatpush2.bf16.msra.mxu0 0
    %2286 = vmatprep.subr.bf16.mxu0 0
    %2287 = vmatpush2.bf16.msra.mxu0 0
    %2288 = vmatprep.subr.bf16.mxu0 0
    %2289 = vmatpush2.bf16.msra.mxu0 0
    %2290 = vmatprep.subr.bf16.mxu0 0
    %2291 = vmatpush2.bf16.msra.mxu0 0
    %2292 = vmatprep.subr.bf16.mxu0 0
    %2293 = vmatpush2.bf16.msra.mxu0 0
    %2294 = vmatprep.subr.bf16.mxu0 0
    %2295 = vmatpush2.bf16.msra.mxu0 0
    %2296 = vmatprep.mubr.bf16.mxu0 0
    %2297 = vmatmul.mubr.bf16.gmra.mxu0 %v2262
    %v2298 = vpop.f32.mrf.mxu0
    %v2299 = vadd.f32 %v2246, %v2298
    %v2300 = vpop.f32.mrf.mxu0
    %v2301 = vpop.f32.mrf.mxu0
    %v2302 = vpop.f32.mrf.mxu0
    %2303 = vdwg.mxu0
    %v2304 = vmax.f32 %v2299, 0.0
    %v2305 = vpack.c.bf16 %v2304, %v2304
    %v2306 = vld [vmem:[%s12] sm:$0xf]
    %v2307 = vld [vmem:[%s12 + $0x4] sm:$0xf]
    %v2308 = vld [vmem:[%s13] sm:$0x1]
    %v2310 = vlaneseq
    %v2311 = vshrl.u32 %v2310, 7
    %v2312 = vsub.s32 0, %v2311
    %v2313 = vrot.slane %v2308, %v2312
    %v2317 = vunpack.c.l.b16 %v2306
    %v2318 = vunpack.c.l.b16 %v2307
    %v2319 = vpack.c.b16 %v2318, %v2317
    %v2322 = vsel %vm95, %v2305, 0
    %2324 = vmatprep.subr.bf16.mxu0 0
    %2325 = vmatpush1.bf16.msra.mxu0 0
    %2326 = vmatprep.subr.bf16.mxu0 0
    %2327 = vmatpush1.bf16.msra.mxu0 0
    %2328 = vmatprep.subr.bf16.mxu0 0
    %2329 = vmatpush1.bf16.msra.mxu0 0
    %2330 = vmatprep.subr.bf16.mxu0 0
    %2331 = vmatpush1.bf16.msra.mxu0 0
    %2332 = vmatprep.subr.bf16.mxu0 0
    %2333 = vmatpush1.bf16.msra.mxu0 0
    %2334 = vmatprep.subr.bf16.mxu0 0
    %2335 = vmatpush1.bf16.msra.mxu0 0
    %2336 = vmatprep.subr.bf16.mxu0 0
    %2337 = vmatpush1.bf16.msra.mxu0 0
    %2338 = vmatprep.subr.bf16.mxu0 0
    %2339 = vmatpush1.bf16.msra.mxu0 %v2319
    %2340 = vmatprep.subr.bf16.mxu0 0
    %2341 = vmatpush2.bf16.msra.mxu0 0
    %2342 = vmatprep.subr.bf16.mxu0 0
    %2343 = vmatpush2.bf16.msra.mxu0 0
    %2344 = vmatprep.subr.bf16.mxu0 0
    %2345 = vmatpush2.bf16.msra.mxu0 0
    %2346 = vmatprep.subr.bf16.mxu0 0
    %2347 = vmatpush2.bf16.msra.mxu0 0
    %2348 = vmatprep.subr.bf16.mxu0 0
    %2349 = vmatpush2.bf16.msra.mxu0 0
    %2350 = vmatprep.subr.bf16.mxu0 0
    %2351 = vmatpush2.bf16.msra.mxu0 0
    %2352 = vmatprep.subr.bf16.mxu0 0
    %2353 = vmatpush2.bf16.msra.mxu0 0
    %2354 = vmatprep.subr.bf16.mxu0 0
    %2355 = vmatpush2.bf16.msra.mxu0 0
    %2356 = vmatprep.mubr.bf16.mxu0 0
    %2357 = vmatmul.mubr.bf16.gmra.mxu0 %v2322
    %v2358 = vpop.f32.mrf.mxu0
    %v2359 = vadd.f32 %v2313, %v2358
    %v2360 = vpop.f32.mrf.mxu0
    %v2361 = vpop.f32.mrf.mxu0
    %v2362 = vpop.f32.mrf.mxu0
    %2363 = vdwg.mxu0
    %v2364 = vmax.f32 %v2359, 0.0
    %v2365 = vpack.c.bf16 %v2364, %v2364
    %v2366 = vld [vmem:[%s14] sm:$0xf]
    %v2367 = vld [vmem:[%s15] sm:$0x1]
    %v2369 = vlaneseq
    %v2370 = vshrl.u32 %v2369, 7
    %v2371 = vsub.s32 0, %v2370
    %v2372 = vrot.slane %v2367, %v2371
    %vm2374 = vcmask 64512
    %v2376 = vsel %vm2374, %v2365, 0
    %vm2378 = vcmask 1043456
    %v2380 = vsel %vm2378, %v2366, 0
    %2382 = vmatprep.subr.bf16.mxu0 0
    %2383 = vmatpush1.bf16.msra.mxu0 0
    %2384 = vmatprep.subr.bf16.mxu0 0
    %2385 = vmatpush1.bf16.msra.mxu0 0
    %2386 = vmatprep.subr.bf16.mxu0 0
    %2387 = vmatpush1.bf16.msra.mxu0 0
    %2388 = vmatprep.subr.bf16.mxu0 0
    %2389 = vmatpush1.bf16.msra.mxu0 0
    %2390 = vmatprep.subr.bf16.mxu0 0
    %2391 = vmatpush1.bf16.msra.mxu0 0
    %2392 = vmatprep.subr.bf16.mxu0 0
    %2393 = vmatpush1.bf16.msra.mxu0 0
    %2394 = vmatprep.subr.bf16.mxu0 0
    %2395 = vmatpush1.bf16.msra.mxu0 0
    %2396 = vmatprep.subr.bf16.mxu0 0
    %2397 = vmatpush1.bf16.msra.mxu0 %v2380
    %2398 = vmatprep.subr.bf16.mxu0 0
    %2399 = vmatpush2.bf16.msra.mxu0 0
    %2400 = vmatprep.subr.bf16.mxu0 0
    %2401 = vmatpush2.bf16.msra.mxu0 0
    %2402 = vmatprep.subr.bf16.mxu0 0
    %2403 = vmatpush2.bf16.msra.mxu0 0
    %2404 = vmatprep.subr.bf16.mxu0 0
    %2405 = vmatpush2.bf16.msra.mxu0 0
    %2406 = vmatprep.subr.bf16.mxu0 0
    %2407 = vmatpush2.bf16.msra.mxu0 0
    %2408 = vmatprep.subr.bf16.mxu0 0
    %2409 = vmatpush2.bf16.msra.mxu0 0
    %2410 = vmatprep.subr.bf16.mxu0 0
    %2411 = vmatpush2.bf16.msra.mxu0 0
    %2412 = vmatprep.subr.bf16.mxu0 0
    %2413 = vmatpush2.bf16.msra.mxu0 0
    %2414 = vmatprep.mubr.bf16.mxu0 0
    %2415 = vmatmul.mubr.bf16.gmra.mxu0 %v2376
    %v2416 = vpop.f32.mrf.mxu0
    %v2417 = vadd.f32 %v2372, %v2416
    %v2418 = vpop.f32.mrf.mxu0
    %v2419 = vpop.f32.mrf.mxu0
    %v2420 = vpop.f32.mrf.mxu0
    %2421 = vdwg.mxu0
    %v2422 = vmax.f32 %v2417, 0.0
    %v2423 = vpack.c.bf16 %v2422, %v2422
    %v2424 = vld [vmem:[%s16] sm:$0xf]
    %v2425 = vld [vmem:[%s16 + $0x4] sm:$0xf]
    %v2426 = vld [vmem:[%s17] sm:$0x1]
    %v2428 = vlaneseq
    %v2429 = vshrl.u32 %v2428, 7
    %v2430 = vsub.s32 0, %v2429
    %v2431 = vrot.slane %v2426, %v2430
    %v2435 = vunpack.c.l.b16 %v2424
    %v2436 = vunpack.c.l.b16 %v2425
    %v2437 = vpack.c.b16 %v2436, %v2435
    %v2440 = vsel %vm95, %v2423, 0
    %2442 = vmatprep.subr.bf16.mxu0 0
    %2443 = vmatpush1.bf16.msra.mxu0 0
    %2444 = vmatprep.subr.bf16.mxu0 0
    %2445 = vmatpush1.bf16.msra.mxu0 0
    %2446 = vmatprep.subr.bf16.mxu0 0
    %2447 = vmatpush1.bf16.msra.mxu0 0
    %2448 = vmatprep.subr.bf16.mxu0 0
    %2449 = vmatpush1.bf16.msra.mxu0 0
    %2450 = vmatprep.subr.bf16.mxu0 0
    %2451 = vmatpush1.bf16.msra.mxu0 0
    %2452 = vmatprep.subr.bf16.mxu0 0
    %2453 = vmatpush1.bf16.msra.mxu0 0
    %2454 = vmatprep.subr.bf16.mxu0 0
    %2455 = vmatpush1.bf16.msra.mxu0 0
    %2456 = vmatprep.subr.bf16.mxu0 0
    %2457 = vmatpush1.bf16.msra.mxu0 %v2437
    %2458 = vmatprep.subr.bf16.mxu0 0
    %2459 = vmatpush2.bf16.msra.mxu0 0
    %2460 = vmatprep.subr.bf16.mxu0 0
    %2461 = vmatpush2.bf16.msra.mxu0 0
    %2462 = vmatprep.subr.bf16.mxu0 0
    %2463 = vmatpush2.bf16.msra.mxu0 0
    %2464 = vmatprep.subr.bf16.mxu0 0
    %2465 = vmatpush2.bf16.msra.mxu0 0
    %2466 = vmatprep.subr.bf16.mxu0 0
    %2467 = vmatpush2.bf16.msra.mxu0 0
    %2468 = vmatprep.subr.bf16.mxu0 0
    %2469 = vmatpush2.bf16.msra.mxu0 0
    %2470 = vmatprep.subr.bf16.mxu0 0
    %2471 = vmatpush2.bf16.msra.mxu0 0
    %2472 = vmatprep.subr.bf16.mxu0 0
    %2473 = vmatpush2.bf16.msra.mxu0 0
    %2474 = vmatprep.mubr.bf16.mxu0 0
    %2475 = vmatmul.mubr.bf16.gmra.mxu0 %v2440
    %v2476 = vpop.f32.mrf.mxu0
    %v2477 = vadd.f32 %v2431, %v2476
    %v2478 = vpop.f32.mrf.mxu0
    %v2479 = vpop.f32.mrf.mxu0
    %v2480 = vpop.f32.mrf.mxu0
    %2481 = vdwg.mxu0
    %v2482 = vmax.f32 %v2477, 0.0
    %v2483 = vpack.c.bf16 %v2482, %v2482
    %v2484 = vld [vmem:[%s18] sm:$0xf]
    %v2485 = vld [vmem:[%s18 + $0x4] sm:$0xf]
    %v2486 = vld [vmem:[%s18 + $0x8] sm:$0xf]
    %v2487 = vld [vmem:[%s18 + $0xc] sm:$0xf]
    %v2488 = vld [vmem:[%s19] sm:$0x1]
    %v2490 = vlaneseq
    %v2491 = vshrl.u32 %v2490, 7
    %v2492 = vsub.s32 0, %v2491
    %v2493 = vrot.slane %v2488, %v2492
    %v2499 = vunpack.c.l.b16 %v2484
    %v2500 = vunpack.c.l.b16 %v2485
    %v2501 = vunpack.c.l.b16 %v2486
    %v2502 = vunpack.c.l.b16 %v2487
    %v2503 = vpack.c.b16 %v2500, %v2499
    %v2504 = vpack.c.b16 %v2502, %v2501
    %v2508 = vsel %vm2260, %v2483, 0
    %2510 = vmatprep.subr.bf16.mxu0 0
    %2511 = vmatpush1.bf16.msra.mxu0 0
    %2512 = vmatprep.subr.bf16.mxu0 0
    %2513 = vmatpush1.bf16.msra.mxu0 0
    %2514 = vmatprep.subr.bf16.mxu0 0
    %2515 = vmatpush1.bf16.msra.mxu0 0
    %2516 = vmatprep.subr.bf16.mxu0 0
    %2517 = vmatpush1.bf16.msra.mxu0 0
    %2518 = vmatprep.subr.bf16.mxu0 0
    %2519 = vmatpush1.bf16.msra.mxu0 0
    %2520 = vmatprep.subr.bf16.mxu0 0
    %2521 = vmatpush1.bf16.msra.mxu0 0
    %2522 = vmatprep.subr.bf16.mxu0 0
    %2523 = vmatpush1.bf16.msra.mxu0 %v2504
    %2524 = vmatprep.subr.bf16.mxu0 0
    %2525 = vmatpush1.bf16.msra.mxu0 %v2503
    %2526 = vmatprep.subr.bf16.mxu0 0
    %2527 = vmatpush2.bf16.msra.mxu0 0
    %2528 = vmatprep.subr.bf16.mxu0 0
    %2529 = vmatpush2.bf16.msra.mxu0 0
    %2530 = vmatprep.subr.bf16.mxu0 0
    %2531 = vmatpush2.bf16.msra.mxu0 0
    %2532 = vmatprep.subr.bf16.mxu0 0
    %2533 = vmatpush2.bf16.msra.mxu0 0
    %2534 = vmatprep.subr.bf16.mxu0 0
    %2535 = vmatpush2.bf16.msra.mxu0 0
    %2536 = vmatprep.subr.bf16.mxu0 0
    %2537 = vmatpush2.bf16.msra.mxu0 0
    %2538 = vmatprep.subr.bf16.mxu0 0
    %2539 = vmatpush2.bf16.msra.mxu0 0
    %2540 = vmatprep.subr.bf16.mxu0 0
    %2541 = vmatpush2.bf16.msra.mxu0 0
    %2542 = vmatprep.mubr.bf16.mxu0 0
    %2543 = vmatmul.mubr.bf16.gmra.mxu0 %v2508
    %v2544 = vpop.f32.mrf.mxu0
    %v2545 = vadd.f32 %v2493, %v2544
    %v2546 = vpop.f32.mrf.mxu0
    %v2547 = vpop.f32.mrf.mxu0
    %v2548 = vpop.f32.mrf.mxu0
    %2549 = vdwg.mxu0
    %v2550 = vmax.f32 %v2545, 0.0
    %v2551 = vpack.c.bf16 %v2550, %v2550
    %v2552 = vld [vmem:[%s3] sm:$0xf]
    %v2553 = vld [vmem:[%s3 + $0x4] sm:$0xf]
    %s2554 = scalar_lea.vmem %s18, 16
    %v2555 = vld [vmem:[%s2554] sm:$0xf]
    %v2556 = vld [vmem:[%s2554 + $0x4] sm:$0xf]
    %v2557 = vld [vmem:[%s2554 + $0x8] sm:$0xf]
    %v2558 = vld [vmem:[%s2554 + $0xc] sm:$0xf]
    %s2559 = scalar_lea.vmem %s19, 1
    %v2560 = vld [vmem:[%s2559] sm:$0x1]
    %v2562 = vlaneseq
    %v2563 = vshrl.u32 %v2562, 7
    %v2564 = vsub.s32 0, %v2563
    %v2565 = vrot.slane %v2560, %v2564
    %v2571 = vunpack.c.l.b16 %v2555
    %v2572 = vunpack.c.l.b16 %v2556
    %v2573 = vunpack.c.l.b16 %v2557
    %v2574 = vunpack.c.l.b16 %v2558
    %v2575 = vpack.c.b16 %v2572, %v2571
    %v2576 = vpack.c.b16 %v2574, %v2573
    %2579 = vmatprep.subr.bf16.mxu0 0
    %2580 = vmatpush1.bf16.msra.mxu0 0
    %2581 = vmatprep.subr.bf16.mxu0 0
    %2582 = vmatpush1.bf16.msra.mxu0 0
    %2583 = vmatprep.subr.bf16.mxu0 0
    %2584 = vmatpush1.bf16.msra.mxu0 0
    %2585 = vmatprep.subr.bf16.mxu0 0
    %2586 = vmatpush1.bf16.msra.mxu0 0
    %2587 = vmatprep.subr.bf16.mxu0 0
    %2588 = vmatpush1.bf16.msra.mxu0 0
    %2589 = vmatprep.subr.bf16.mxu0 0
    %2590 = vmatpush1.bf16.msra.mxu0 0
    %2591 = vmatprep.subr.bf16.mxu0 0
    %2592 = vmatpush1.bf16.msra.mxu0 %v2576
    %2593 = vmatprep.subr.bf16.mxu0 0
    %2594 = vmatpush1.bf16.msra.mxu0 %v2575
    %2595 = vmatprep.subr.bf16.mxu0 0
    %2596 = vmatpush2.bf16.msra.mxu0 0
    %2597 = vmatprep.subr.bf16.mxu0 0
    %2598 = vmatpush2.bf16.msra.mxu0 0
    %2599 = vmatprep.subr.bf16.mxu0 0
    %2600 = vmatpush2.bf16.msra.mxu0 0
    %2601 = vmatprep.subr.bf16.mxu0 0
    %2602 = vmatpush2.bf16.msra.mxu0 0
    %2603 = vmatprep.subr.bf16.mxu0 0
    %2604 = vmatpush2.bf16.msra.mxu0 0
    %2605 = vmatprep.subr.bf16.mxu0 0
    %2606 = vmatpush2.bf16.msra.mxu0 0
    %2607 = vmatprep.subr.bf16.mxu0 0
    %2608 = vmatpush2.bf16.msra.mxu0 0
    %2609 = vmatprep.subr.bf16.mxu0 0
    %2610 = vmatpush2.bf16.msra.mxu0 0
    %2611 = vmatprep.mubr.bf16.mxu0 0
    %2612 = vmatmul.mubr.bf16.gmra.mxu0 %v2508
    %v2613 = vpop.f32.mrf.mxu0
    %v2614 = vadd.f32 %v2565, %v2613
    %v2615 = vpop.f32.mrf.mxu0
    %v2616 = vpop.f32.mrf.mxu0
    %v2617 = vpop.f32.mrf.mxu0
    %2618 = vdwg.mxu0
    %v2619 = vmax.f32 %v2614, 0.0
    %v2620 = vpack.c.bf16 %v2619, %v2619
    %s2621 = scalar_lea.vmem %s3, 8
    %v2622 = vld [vmem:[%s2621] sm:$0xf]
    %v2623 = vld [vmem:[%s2621 + $0x4] sm:$0xf]
    %v2626 = vunpack.c.l.b16 %v2622
    %v2627 = vunpack.c.l.b16 %v2623
    %v2628 = vpack.c.b16 %v2627, %v2626
    %vm2629 = vcmask 15360
    %v2631 = vsel %vm2629, %v2628, 0
    %vm2633 = vcmask 1040384
    %v2635 = vsel %vm2633, %v2620, 0
    %2637 = vmatprep.subr.bf16.mxu0 0
    %2638 = vmatpush1.bf16.msra.mxu0 0
    %2639 = vmatprep.subr.bf16.mxu0 0
    %2640 = vmatpush1.bf16.msra.mxu0 0
    %2641 = vmatprep.subr.bf16.mxu0 0
    %2642 = vmatpush1.bf16.msra.mxu0 0
    %2643 = vmatprep.subr.bf16.mxu0 0
    %2644 = vmatpush1.bf16.msra.mxu0 0
    %2645 = vmatprep.subr.bf16.mxu0 0
    %2646 = vmatpush1.bf16.msra.mxu0 0
    %2647 = vmatprep.subr.bf16.mxu0 0
    %2648 = vmatpush1.bf16.msra.mxu0 0
    %2649 = vmatprep.subr.bf16.mxu0 0
    %2650 = vmatpush1.bf16.msra.mxu0 0
    %2651 = vmatprep.subr.bf16.mxu0 0
    %2652 = vmatpush1.bf16.msra.mxu0 %v2635
    %2653 = vmatprep.subr.bf16.mxu0 0
    %2654 = vmatpush2.bf16.msra.mxu0 0
    %2655 = vmatprep.subr.bf16.mxu0 0
    %2656 = vmatpush2.bf16.msra.mxu0 0
    %2657 = vmatprep.subr.bf16.mxu0 0
    %2658 = vmatpush2.bf16.msra.mxu0 0
    %2659 = vmatprep.subr.bf16.mxu0 0
    %2660 = vmatpush2.bf16.msra.mxu0 0
    %2661 = vmatprep.subr.bf16.mxu0 0
    %2662 = vmatpush2.bf16.msra.mxu0 0
    %2663 = vmatprep.subr.bf16.mxu0 0
    %2664 = vmatpush2.bf16.msra.mxu0 0
    %2665 = vmatprep.subr.bf16.mxu0 0
    %2666 = vmatpush2.bf16.msra.mxu0 0
    %2667 = vmatprep.subr.bf16.mxu0 0
    %2668 = vmatpush2.bf16.msra.mxu0 0
    %2669 = vmatprep.mubr.bf16.mxu0 0
    %2670 = vmatmul.mubr.bf16.gmra.mxu0 %v2631
    %v2671 = vpop.f32.mrf.mxu0
    %v2672 = vadd.f32 0.0, %v2671
    %v2673 = vpop.f32.mrf.mxu0
    %v2674 = vpop.f32.mrf.mxu0
    %v2675 = vadd.f32 0.0, %v2674
    %v2676 = vpop.f32.mrf.mxu0
    %2677 = vdwg.mxu0
    %v2680 = vunpack.c.l.b16 %v2552
    %v2681 = vunpack.c.l.b16 %v2553
    %v2682 = vpack.c.b16 %v2681, %v2680
    %v2684 = vsel %vm2629, %v2682, 0
    %v2687 = vsel %vm2633, %v2551, 0
    %2689 = vmatprep.subr.bf16.mxu0 0
    %2690 = vmatpush1.bf16.msra.mxu0 0
    %2691 = vmatprep.subr.bf16.mxu0 0
    %2692 = vmatpush1.bf16.msra.mxu0 0
    %2693 = vmatprep.subr.bf16.mxu0 0
    %2694 = vmatpush1.bf16.msra.mxu0 0
    %2695 = vmatprep.subr.bf16.mxu0 0
    %2696 = vmatpush1.bf16.msra.mxu0 0
    %2697 = vmatprep.subr.bf16.mxu0 0
    %2698 = vmatpush1.bf16.msra.mxu0 0
    %2699 = vmatprep.subr.bf16.mxu0 0
    %2700 = vmatpush1.bf16.msra.mxu0 0
    %2701 = vmatprep.subr.bf16.mxu0 0
    %2702 = vmatpush1.bf16.msra.mxu0 0
    %2703 = vmatprep.subr.bf16.mxu0 0
    %2704 = vmatpush1.bf16.msra.mxu0 %v2687
    %2705 = vmatprep.subr.bf16.mxu0 0
    %2706 = vmatpush2.bf16.msra.mxu0 0
    %2707 = vmatprep.subr.bf16.mxu0 0
    %2708 = vmatpush2.bf16.msra.mxu0 0
    %2709 = vmatprep.subr.bf16.mxu0 0
    %2710 = vmatpush2.bf16.msra.mxu0 0
    %2711 = vmatprep.subr.bf16.mxu0 0
    %2712 = vmatpush2.bf16.msra.mxu0 0
    %2713 = vmatprep.subr.bf16.mxu0 0
    %2714 = vmatpush2.bf16.msra.mxu0 0
    %2715 = vmatprep.subr.bf16.mxu0 0
    %2716 = vmatpush2.bf16.msra.mxu0 0
    %2717 = vmatprep.subr.bf16.mxu0 0
    %2718 = vmatpush2.bf16.msra.mxu0 0
    %2719 = vmatprep.subr.bf16.mxu0 0
    %2720 = vmatpush2.bf16.msra.mxu0 0
    %2721 = vmatprep.mubr.bf16.mxu0 0
    %2722 = vmatmul.mubr.bf16.gmra.mxu0 %v2684
    %v2723 = vpop.f32.mrf.mxu0
    %v2724 = vadd.f32 %v2672, %v2723
    %v2725 = vpop.f32.mrf.mxu0
    %v2726 = vpop.f32.mrf.mxu0
    %v2727 = vadd.f32 %v2675, %v2726
    %v2728 = vpop.f32.mrf.mxu0
    %2729 = vdwg.mxu0
    %s2730 = scalar_lea.vmem %s18, 32
    %v2731 = vld [vmem:[%s2730] sm:$0xf]
    %v2732 = vld [vmem:[%s2730 + $0x4] sm:$0xf]
    %v2733 = vld [vmem:[%s2730 + $0x8] sm:$0xf]
    %v2734 = vld [vmem:[%s2730 + $0xc] sm:$0xf]
    %s2735 = scalar_lea.vmem %s19, 2
    %v2736 = vld [vmem:[%s2735] sm:$0x1]
    %v2738 = vlaneseq
    %v2739 = vshrl.u32 %v2738, 7
    %v2740 = vsub.s32 0, %v2739
    %v2741 = vrot.slane %v2736, %v2740
    %v2747 = vunpack.c.l.b16 %v2731
    %v2748 = vunpack.c.l.b16 %v2732
    %v2749 = vunpack.c.l.b16 %v2733
    %v2750 = vunpack.c.l.b16 %v2734
    %v2751 = vpack.c.b16 %v2748, %v2747
    %v2752 = vpack.c.b16 %v2750, %v2749
    %2755 = vmatprep.subr.bf16.mxu0 0
    %2756 = vmatpush1.bf16.msra.mxu0 0
    %2757 = vmatprep.subr.bf16.mxu0 0
    %2758 = vmatpush1.bf16.msra.mxu0 0
    %2759 = vmatprep.subr.bf16.mxu0 0
    %2760 = vmatpush1.bf16.msra.mxu0 0
    %2761 = vmatprep.subr.bf16.mxu0 0
    %2762 = vmatpush1.bf16.msra.mxu0 0
    %2763 = vmatprep.subr.bf16.mxu0 0
    %2764 = vmatpush1.bf16.msra.mxu0 0
    %2765 = vmatprep.subr.bf16.mxu0 0
    %2766 = vmatpush1.bf16.msra.mxu0 0
    %2767 = vmatprep.subr.bf16.mxu0 0
    %2768 = vmatpush1.bf16.msra.mxu0 %v2752
    %2769 = vmatprep.subr.bf16.mxu0 0
    %2770 = vmatpush1.bf16.msra.mxu0 %v2751
    %2771 = vmatprep.subr.bf16.mxu0 0
    %2772 = vmatpush2.bf16.msra.mxu0 0
    %2773 = vmatprep.subr.bf16.mxu0 0
    %2774 = vmatpush2.bf16.msra.mxu0 0
    %2775 = vmatprep.subr.bf16.mxu0 0
    %2776 = vmatpush2.bf16.msra.mxu0 0
    %2777 = vmatprep.subr.bf16.mxu0 0
    %2778 = vmatpush2.bf16.msra.mxu0 0
    %2779 = vmatprep.subr.bf16.mxu0 0
    %2780 = vmatpush2.bf16.msra.mxu0 0
    %2781 = vmatprep.subr.bf16.mxu0 0
    %2782 = vmatpush2.bf16.msra.mxu0 0
    %2783 = vmatprep.subr.bf16.mxu0 0
    %2784 = vmatpush2.bf16.msra.mxu0 0
    %2785 = vmatprep.subr.bf16.mxu0 0
    %2786 = vmatpush2.bf16.msra.mxu0 0
    %2787 = vmatprep.mubr.bf16.mxu0 0
    %2788 = vmatmul.mubr.bf16.gmra.mxu0 %v2508
    %v2789 = vpop.f32.mrf.mxu0
    %v2790 = vadd.f32 %v2741, %v2789
    %v2791 = vpop.f32.mrf.mxu0
    %v2792 = vpop.f32.mrf.mxu0
    %v2793 = vpop.f32.mrf.mxu0
    %2794 = vdwg.mxu0
    %v2795 = vmax.f32 %v2790, 0.0
    %v2796 = vpack.c.bf16 %v2795, %v2795
    %s2797 = scalar_lea.vmem %s3, 16
    %v2798 = vld [vmem:[%s2797] sm:$0xf]
    %v2799 = vld [vmem:[%s2797 + $0x4] sm:$0xf]
    %v2802 = vunpack.c.l.b16 %v2798
    %v2803 = vunpack.c.l.b16 %v2799
    %v2804 = vpack.c.b16 %v2803, %v2802
    %v2806 = vsel %vm2629, %v2804, 0
    %v2809 = vsel %vm2633, %v2796, 0
    %2811 = vmatprep.subr.bf16.mxu0 0
    %2812 = vmatpush1.bf16.msra.mxu0 0
    %2813 = vmatprep.subr.bf16.mxu0 0
    %2814 = vmatpush1.bf16.msra.mxu0 0
    %2815 = vmatprep.subr.bf16.mxu0 0
    %2816 = vmatpush1.bf16.msra.mxu0 0
    %2817 = vmatprep.subr.bf16.mxu0 0
    %2818 = vmatpush1.bf16.msra.mxu0 0
    %2819 = vmatprep.subr.bf16.mxu0 0
    %2820 = vmatpush1.bf16.msra.mxu0 0
    %2821 = vmatprep.subr.bf16.mxu0 0
    %2822 = vmatpush1.bf16.msra.mxu0 0
    %2823 = vmatprep.subr.bf16.mxu0 0
    %2824 = vmatpush1.bf16.msra.mxu0 0
    %2825 = vmatprep.subr.bf16.mxu0 0
    %2826 = vmatpush1.bf16.msra.mxu0 %v2809
    %2827 = vmatprep.subr.bf16.mxu0 0
    %2828 = vmatpush2.bf16.msra.mxu0 0
    %2829 = vmatprep.subr.bf16.mxu0 0
    %2830 = vmatpush2.bf16.msra.mxu0 0
    %2831 = vmatprep.subr.bf16.mxu0 0
    %2832 = vmatpush2.bf16.msra.mxu0 0
    %2833 = vmatprep.subr.bf16.mxu0 0
    %2834 = vmatpush2.bf16.msra.mxu0 0
    %2835 = vmatprep.subr.bf16.mxu0 0
    %2836 = vmatpush2.bf16.msra.mxu0 0
    %2837 = vmatprep.subr.bf16.mxu0 0
    %2838 = vmatpush2.bf16.msra.mxu0 0
    %2839 = vmatprep.subr.bf16.mxu0 0
    %2840 = vmatpush2.bf16.msra.mxu0 0
    %2841 = vmatprep.subr.bf16.mxu0 0
    %2842 = vmatpush2.bf16.msra.mxu0 0
    %2843 = vmatprep.mubr.bf16.mxu0 0
    %2844 = vmatmul.mubr.bf16.gmra.mxu0 %v2806
    %v2845 = vpop.f32.mrf.mxu0
    %v2846 = vadd.f32 0.0, %v2845
    %v2847 = vpop.f32.mrf.mxu0
    %v2848 = vpop.f32.mrf.mxu0
    %v2849 = vadd.f32 0.0, %v2848
    %v2850 = vpop.f32.mrf.mxu0
    %2851 = vdwg.mxu0
    %v2852 = vadd.f32 %v2724, %v2846
    %v2853 = vadd.f32 %v2727, %v2849
    %s2854 = scalar_lea.vmem %s18, 48
    %v2855 = vld [vmem:[%s2854] sm:$0xf]
    %v2856 = vld [vmem:[%s2854 + $0x4] sm:$0xf]
    %v2857 = vld [vmem:[%s2854 + $0x8] sm:$0xf]
    %v2858 = vld [vmem:[%s2854 + $0xc] sm:$0xf]
    %s2859 = scalar_lea.vmem %s19, 3
    %v2860 = vld [vmem:[%s2859] sm:$0x1]
    %v2862 = vlaneseq
    %v2863 = vshrl.u32 %v2862, 7
    %v2864 = vsub.s32 0, %v2863
    %v2865 = vrot.slane %v2860, %v2864
    %v2871 = vunpack.c.l.b16 %v2855
    %v2872 = vunpack.c.l.b16 %v2856
    %v2873 = vunpack.c.l.b16 %v2857
    %v2874 = vunpack.c.l.b16 %v2858
    %v2875 = vpack.c.b16 %v2872, %v2871
    %v2876 = vpack.c.b16 %v2874, %v2873
    %2879 = vmatprep.subr.bf16.mxu0 0
    %2880 = vmatpush1.bf16.msra.mxu0 0
    %2881 = vmatprep.subr.bf16.mxu0 0
    %2882 = vmatpush1.bf16.msra.mxu0 0
    %2883 = vmatprep.subr.bf16.mxu0 0
    %2884 = vmatpush1.bf16.msra.mxu0 0
    %2885 = vmatprep.subr.bf16.mxu0 0
    %2886 = vmatpush1.bf16.msra.mxu0 0
    %2887 = vmatprep.subr.bf16.mxu0 0
    %2888 = vmatpush1.bf16.msra.mxu0 0
    %2889 = vmatprep.subr.bf16.mxu0 0
    %2890 = vmatpush1.bf16.msra.mxu0 0
    %2891 = vmatprep.subr.bf16.mxu0 0
    %2892 = vmatpush1.bf16.msra.mxu0 %v2876
    %2893 = vmatprep.subr.bf16.mxu0 0
    %2894 = vmatpush1.bf16.msra.mxu0 %v2875
    %2895 = vmatprep.subr.bf16.mxu0 0
    %2896 = vmatpush2.bf16.msra.mxu0 0
    %2897 = vmatprep.subr.bf16.mxu0 0
    %2898 = vmatpush2.bf16.msra.mxu0 0
    %2899 = vmatprep.subr.bf16.mxu0 0
    %2900 = vmatpush2.bf16.msra.mxu0 0
    %2901 = vmatprep.subr.bf16.mxu0 0
    %2902 = vmatpush2.bf16.msra.mxu0 0
    %2903 = vmatprep.subr.bf16.mxu0 0
    %2904 = vmatpush2.bf16.msra.mxu0 0
    %2905 = vmatprep.subr.bf16.mxu0 0
    %2906 = vmatpush2.bf16.msra.mxu0 0
    %2907 = vmatprep.subr.bf16.mxu0 0
    %2908 = vmatpush2.bf16.msra.mxu0 0
    %2909 = vmatprep.subr.bf16.mxu0 0
    %2910 = vmatpush2.bf16.msra.mxu0 0
    %2911 = vmatprep.mubr.bf16.mxu0 0
    %2912 = vmatmul.mubr.bf16.gmra.mxu0 %v2508
    %v2913 = vpop.f32.mrf.mxu0
    %v2914 = vadd.f32 %v2865, %v2913
    %v2915 = vpop.f32.mrf.mxu0
    %v2916 = vpop.f32.mrf.mxu0
    %v2917 = vpop.f32.mrf.mxu0
    %2918 = vdwg.mxu0
    %v2919 = vmax.f32 %v2914, 0.0
    %v2920 = vpack.c.bf16 %v2919, %v2919
    %s2921 = scalar_lea.vmem %s3, 24
    %v2922 = vld [vmem:[%s2921] sm:$0xf]
    %v2923 = vld [vmem:[%s2921 + $0x4] sm:$0xf]
    %v2926 = vunpack.c.l.b16 %v2922
    %v2927 = vunpack.c.l.b16 %v2923
    %v2928 = vpack.c.b16 %v2927, %v2926
    %v2930 = vsel %vm2629, %v2928, 0
    %v2933 = vsel %vm2633, %v2920, 0
    %2935 = vmatprep.subr.bf16.mxu0 0
    %2936 = vmatpush1.bf16.msra.mxu0 0
    %2937 = vmatprep.subr.bf16.mxu0 0
    %2938 = vmatpush1.bf16.msra.mxu0 0
    %2939 = vmatprep.subr.bf16.mxu0 0
    %2940 = vmatpush1.bf16.msra.mxu0 0
    %2941 = vmatprep.subr.bf16.mxu0 0
    %2942 = vmatpush1.bf16.msra.mxu0 0
    %2943 = vmatprep.subr.bf16.mxu0 0
    %2944 = vmatpush1.bf16.msra.mxu0 0
    %2945 = vmatprep.subr.bf16.mxu0 0
    %2946 = vmatpush1.bf16.msra.mxu0 0
    %2947 = vmatprep.subr.bf16.mxu0 0
    %2948 = vmatpush1.bf16.msra.mxu0 0
    %2949 = vmatprep.subr.bf16.mxu0 0
    %2950 = vmatpush1.bf16.msra.mxu0 %v2933
    %2951 = vmatprep.subr.bf16.mxu0 0
    %2952 = vmatpush2.bf16.msra.mxu0 0
    %2953 = vmatprep.subr.bf16.mxu0 0
    %2954 = vmatpush2.bf16.msra.mxu0 0
    %2955 = vmatprep.subr.bf16.mxu0 0
    %2956 = vmatpush2.bf16.msra.mxu0 0
    %2957 = vmatprep.subr.bf16.mxu0 0
    %2958 = vmatpush2.bf16.msra.mxu0 0
    %2959 = vmatprep.subr.bf16.mxu0 0
    %2960 = vmatpush2.bf16.msra.mxu0 0
    %2961 = vmatprep.subr.bf16.mxu0 0
    %2962 = vmatpush2.bf16.msra.mxu0 0
    %2963 = vmatprep.subr.bf16.mxu0 0
    %2964 = vmatpush2.bf16.msra.mxu0 0
    %2965 = vmatprep.subr.bf16.mxu0 0
    %2966 = vmatpush2.bf16.msra.mxu0 0
    %2967 = vmatprep.mubr.bf16.mxu0 0
    %2968 = vmatmul.mubr.bf16.gmra.mxu0 %v2930
    %v2969 = vpop.f32.mrf.mxu0
    %v2970 = vadd.f32 0.0, %v2969
    %v2971 = vpop.f32.mrf.mxu0
    %v2972 = vpop.f32.mrf.mxu0
    %v2973 = vadd.f32 0.0, %v2972
    %v2974 = vpop.f32.mrf.mxu0
    %2975 = vdwg.mxu0
    %v2976 = vadd.f32 %v2852, %v2970
    %v2977 = vadd.f32 %v2853, %v2973
    %s2978 = scalar_lea.vmem %s18, 64
    %v2979 = vld [vmem:[%s2978] sm:$0xf]
    %v2980 = vld [vmem:[%s2978 + $0x4] sm:$0xf]
    %v2981 = vld [vmem:[%s2978 + $0x8] sm:$0xf]
    %v2982 = vld [vmem:[%s2978 + $0xc] sm:$0xf]
    %s2983 = scalar_lea.vmem %s19, 4
    %v2984 = vld [vmem:[%s2983] sm:$0x1]
    %v2986 = vlaneseq
    %v2987 = vshrl.u32 %v2986, 7
    %v2988 = vsub.s32 0, %v2987
    %v2989 = vrot.slane %v2984, %v2988
    %v2995 = vunpack.c.l.b16 %v2979
    %v2996 = vunpack.c.l.b16 %v2980
    %v2997 = vunpack.c.l.b16 %v2981
    %v2998 = vunpack.c.l.b16 %v2982
    %v2999 = vpack.c.b16 %v2996, %v2995
    %v3000 = vpack.c.b16 %v2998, %v2997
    %3003 = vmatprep.subr.bf16.mxu0 0
    %3004 = vmatpush1.bf16.msra.mxu0 0
    %3005 = vmatprep.subr.bf16.mxu0 0
    %3006 = vmatpush1.bf16.msra.mxu0 0
    %3007 = vmatprep.subr.bf16.mxu0 0
    %3008 = vmatpush1.bf16.msra.mxu0 0
    %3009 = vmatprep.subr.bf16.mxu0 0
    %3010 = vmatpush1.bf16.msra.mxu0 0
    %3011 = vmatprep.subr.bf16.mxu0 0
    %3012 = vmatpush1.bf16.msra.mxu0 0
    %3013 = vmatprep.subr.bf16.mxu0 0
    %3014 = vmatpush1.bf16.msra.mxu0 0
    %3015 = vmatprep.subr.bf16.mxu0 0
    %3016 = vmatpush1.bf16.msra.mxu0 %v3000
    %3017 = vmatprep.subr.bf16.mxu0 0
    %3018 = vmatpush1.bf16.msra.mxu0 %v2999
    %3019 = vmatprep.subr.bf16.mxu0 0
    %3020 = vmatpush2.bf16.msra.mxu0 0
    %3021 = vmatprep.subr.bf16.mxu0 0
    %3022 = vmatpush2.bf16.msra.mxu0 0
    %3023 = vmatprep.subr.bf16.mxu0 0
    %3024 = vmatpush2.bf16.msra.mxu0 0
    %3025 = vmatprep.subr.bf16.mxu0 0
    %3026 = vmatpush2.bf16.msra.mxu0 0
    %3027 = vmatprep.subr.bf16.mxu0 0
    %3028 = vmatpush2.bf16.msra.mxu0 0
    %3029 = vmatprep.subr.bf16.mxu0 0
    %3030 = vmatpush2.bf16.msra.mxu0 0
    %3031 = vmatprep.subr.bf16.mxu0 0
    %3032 = vmatpush2.bf16.msra.mxu0 0
    %3033 = vmatprep.subr.bf16.mxu0 0
    %3034 = vmatpush2.bf16.msra.mxu0 0
    %3035 = vmatprep.mubr.bf16.mxu0 0
    %3036 = vmatmul.mubr.bf16.gmra.mxu0 %v2508
    %v3037 = vpop.f32.mrf.mxu0
    %v3038 = vadd.f32 %v2989, %v3037
    %v3039 = vpop.f32.mrf.mxu0
    %v3040 = vpop.f32.mrf.mxu0
    %v3041 = vpop.f32.mrf.mxu0
    %3042 = vdwg.mxu0
    %v3043 = vmax.f32 %v3038, 0.0
    %v3044 = vpack.c.bf16 %v3043, %v3043
    %s3045 = scalar_lea.vmem %s3, 32
    %v3046 = vld [vmem:[%s3045] sm:$0xf]
    %v3047 = vld [vmem:[%s3045 + $0x4] sm:$0xf]
    %v3050 = vunpack.c.l.b16 %v3046
    %v3051 = vunpack.c.l.b16 %v3047
    %v3052 = vpack.c.b16 %v3051, %v3050
    %v3054 = vsel %vm2629, %v3052, 0
    %v3057 = vsel %vm2633, %v3044, 0
    %3059 = vmatprep.subr.bf16.mxu0 0
    %3060 = vmatpush1.bf16.msra.mxu0 0
    %3061 = vmatprep.subr.bf16.mxu0 0
    %3062 = vmatpush1.bf16.msra.mxu0 0
    %3063 = vmatprep.subr.bf16.mxu0 0
    %3064 = vmatpush1.bf16.msra.mxu0 0
    %3065 = vmatprep.subr.bf16.mxu0 0
    %3066 = vmatpush1.bf16.msra.mxu0 0
    %3067 = vmatprep.subr.bf16.mxu0 0
    %3068 = vmatpush1.bf16.msra.mxu0 0
    %3069 = vmatprep.subr.bf16.mxu0 0
    %3070 = vmatpush1.bf16.msra.mxu0 0
    %3071 = vmatprep.subr.bf16.mxu0 0
    %3072 = vmatpush1.bf16.msra.mxu0 0
    %3073 = vmatprep.subr.bf16.mxu0 0
    %3074 = vmatpush1.bf16.msra.mxu0 %v3057
    %3075 = vmatprep.subr.bf16.mxu0 0
    %3076 = vmatpush2.bf16.msra.mxu0 0
    %3077 = vmatprep.subr.bf16.mxu0 0
    %3078 = vmatpush2.bf16.msra.mxu0 0
    %3079 = vmatprep.subr.bf16.mxu0 0
    %3080 = vmatpush2.bf16.msra.mxu0 0
    %3081 = vmatprep.subr.bf16.mxu0 0
    %3082 = vmatpush2.bf16.msra.mxu0 0
    %3083 = vmatprep.subr.bf16.mxu0 0
    %3084 = vmatpush2.bf16.msra.mxu0 0
    %3085 = vmatprep.subr.bf16.mxu0 0
    %3086 = vmatpush2.bf16.msra.mxu0 0
    %3087 = vmatprep.subr.bf16.mxu0 0
    %3088 = vmatpush2.bf16.msra.mxu0 0
    %3089 = vmatprep.subr.bf16.mxu0 0
    %3090 = vmatpush2.bf16.msra.mxu0 0
    %3091 = vmatprep.mubr.bf16.mxu0 0
    %3092 = vmatmul.mubr.bf16.gmra.mxu0 %v3054
    %v3093 = vpop.f32.mrf.mxu0
    %v3094 = vadd.f32 0.0, %v3093
    %v3095 = vpop.f32.mrf.mxu0
    %v3096 = vpop.f32.mrf.mxu0
    %v3097 = vadd.f32 0.0, %v3096
    %v3098 = vpop.f32.mrf.mxu0
    %3099 = vdwg.mxu0
    %v3100 = vadd.f32 %v2976, %v3094
    %v3101 = vadd.f32 %v2977, %v3097
    %s3102 = scalar_lea.vmem %s18, 80
    %v3103 = vld [vmem:[%s3102] sm:$0xf]
    %v3104 = vld [vmem:[%s3102 + $0x4] sm:$0xf]
    %v3105 = vld [vmem:[%s3102 + $0x8] sm:$0xf]
    %v3106 = vld [vmem:[%s3102 + $0xc] sm:$0xf]
    %s3107 = scalar_lea.vmem %s19, 5
    %v3108 = vld [vmem:[%s3107] sm:$0x1]
    %v3110 = vlaneseq
    %v3111 = vshrl.u32 %v3110, 7
    %v3112 = vsub.s32 0, %v3111
    %v3113 = vrot.slane %v3108, %v3112
    %v3119 = vunpack.c.l.b16 %v3103
    %v3120 = vunpack.c.l.b16 %v3104
    %v3121 = vunpack.c.l.b16 %v3105
    %v3122 = vunpack.c.l.b16 %v3106
    %v3123 = vpack.c.b16 %v3120, %v3119
    %v3124 = vpack.c.b16 %v3122, %v3121
    %3127 = vmatprep.subr.bf16.mxu0 0
    %3128 = vmatpush1.bf16.msra.mxu0 0
    %3129 = vmatprep.subr.bf16.mxu0 0
    %3130 = vmatpush1.bf16.msra.mxu0 0
    %3131 = vmatprep.subr.bf16.mxu0 0
    %3132 = vmatpush1.bf16.msra.mxu0 0
    %3133 = vmatprep.subr.bf16.mxu0 0
    %3134 = vmatpush1.bf16.msra.mxu0 0
    %3135 = vmatprep.subr.bf16.mxu0 0
    %3136 = vmatpush1.bf16.msra.mxu0 0
    %3137 = vmatprep.subr.bf16.mxu0 0
    %3138 = vmatpush1.bf16.msra.mxu0 0
    %3139 = vmatprep.subr.bf16.mxu0 0
    %3140 = vmatpush1.bf16.msra.mxu0 %v3124
    %3141 = vmatprep.subr.bf16.mxu0 0
    %3142 = vmatpush1.bf16.msra.mxu0 %v3123
    %3143 = vmatprep.subr.bf16.mxu0 0
    %3144 = vmatpush2.bf16.msra.mxu0 0
    %3145 = vmatprep.subr.bf16.mxu0 0
    %3146 = vmatpush2.bf16.msra.mxu0 0
    %3147 = vmatprep.subr.bf16.mxu0 0
    %3148 = vmatpush2.bf16.msra.mxu0 0
    %3149 = vmatprep.subr.bf16.mxu0 0
    %3150 = vmatpush2.bf16.msra.mxu0 0
    %3151 = vmatprep.subr.bf16.mxu0 0
    %3152 = vmatpush2.bf16.msra.mxu0 0
    %3153 = vmatprep.subr.bf16.mxu0 0
    %3154 = vmatpush2.bf16.msra.mxu0 0
    %3155 = vmatprep.subr.bf16.mxu0 0
    %3156 = vmatpush2.bf16.msra.mxu0 0
    %3157 = vmatprep.subr.bf16.mxu0 0
    %3158 = vmatpush2.bf16.msra.mxu0 0
    %3159 = vmatprep.mubr.bf16.mxu0 0
    %3160 = vmatmul.mubr.bf16.gmra.mxu0 %v2508
    %v3161 = vpop.f32.mrf.mxu0
    %v3162 = vadd.f32 %v3113, %v3161
    %v3163 = vpop.f32.mrf.mxu0
    %v3164 = vpop.f32.mrf.mxu0
    %v3165 = vpop.f32.mrf.mxu0
    %3166 = vdwg.mxu0
    %v3167 = vmax.f32 %v3162, 0.0
    %v3168 = vpack.c.bf16 %v3167, %v3167
    %s3169 = scalar_lea.vmem %s3, 40
    %v3170 = vld [vmem:[%s3169] sm:$0xf]
    %v3171 = vld [vmem:[%s3169 + $0x4] sm:$0xf]
    %v3174 = vunpack.c.l.b16 %v3170
    %v3175 = vunpack.c.l.b16 %v3171
    %v3176 = vpack.c.b16 %v3175, %v3174
    %v3178 = vsel %vm2629, %v3176, 0
    %v3181 = vsel %vm2633, %v3168, 0
    %3183 = vmatprep.subr.bf16.mxu0 0
    %3184 = vmatpush1.bf16.msra.mxu0 0
    %3185 = vmatprep.subr.bf16.mxu0 0
    %3186 = vmatpush1.bf16.msra.mxu0 0
    %3187 = vmatprep.subr.bf16.mxu0 0
    %3188 = vmatpush1.bf16.msra.mxu0 0
    %3189 = vmatprep.subr.bf16.mxu0 0
    %3190 = vmatpush1.bf16.msra.mxu0 0
    %3191 = vmatprep.subr.bf16.mxu0 0
    %3192 = vmatpush1.bf16.msra.mxu0 0
    %3193 = vmatprep.subr.bf16.mxu0 0
    %3194 = vmatpush1.bf16.msra.mxu0 0
    %3195 = vmatprep.subr.bf16.mxu0 0
    %3196 = vmatpush1.bf16.msra.mxu0 0
    %3197 = vmatprep.subr.bf16.mxu0 0
    %3198 = vmatpush1.bf16.msra.mxu0 %v3181
    %3199 = vmatprep.subr.bf16.mxu0 0
    %3200 = vmatpush2.bf16.msra.mxu0 0
    %3201 = vmatprep.subr.bf16.mxu0 0
    %3202 = vmatpush2.bf16.msra.mxu0 0
    %3203 = vmatprep.subr.bf16.mxu0 0
    %3204 = vmatpush2.bf16.msra.mxu0 0
    %3205 = vmatprep.subr.bf16.mxu0 0
    %3206 = vmatpush2.bf16.msra.mxu0 0
    %3207 = vmatprep.subr.bf16.mxu0 0
    %3208 = vmatpush2.bf16.msra.mxu0 0
    %3209 = vmatprep.subr.bf16.mxu0 0
    %3210 = vmatpush2.bf16.msra.mxu0 0
    %3211 = vmatprep.subr.bf16.mxu0 0
    %3212 = vmatpush2.bf16.msra.mxu0 0
    %3213 = vmatprep.subr.bf16.mxu0 0
    %3214 = vmatpush2.bf16.msra.mxu0 0
    %3215 = vmatprep.mubr.bf16.mxu0 0
    %3216 = vmatmul.mubr.bf16.gmra.mxu0 %v3178
    %v3217 = vpop.f32.mrf.mxu0
    %v3218 = vadd.f32 0.0, %v3217
    %v3219 = vpop.f32.mrf.mxu0
    %v3220 = vpop.f32.mrf.mxu0
    %v3221 = vadd.f32 0.0, %v3220
    %v3222 = vpop.f32.mrf.mxu0
    %3223 = vdwg.mxu0
    %v3224 = vadd.f32 %v3100, %v3218
    %v3225 = vadd.f32 %v3101, %v3221
    %s3226 = scalar_lea.vmem %s18, 96
    %v3227 = vld [vmem:[%s3226] sm:$0xf]
    %v3228 = vld [vmem:[%s3226 + $0x4] sm:$0xf]
    %v3229 = vld [vmem:[%s3226 + $0x8] sm:$0xf]
    %v3230 = vld [vmem:[%s3226 + $0xc] sm:$0xf]
    %s3231 = scalar_lea.vmem %s19, 6
    %v3232 = vld [vmem:[%s3231] sm:$0x1]
    %v3234 = vlaneseq
    %v3235 = vshrl.u32 %v3234, 7
    %v3236 = vsub.s32 0, %v3235
    %v3237 = vrot.slane %v3232, %v3236
    %v3243 = vunpack.c.l.b16 %v3227
    %v3244 = vunpack.c.l.b16 %v3228
    %v3245 = vunpack.c.l.b16 %v3229
    %v3246 = vunpack.c.l.b16 %v3230
    %v3247 = vpack.c.b16 %v3244, %v3243
    %v3248 = vpack.c.b16 %v3246, %v3245
    %3251 = vmatprep.subr.bf16.mxu0 0
    %3252 = vmatpush1.bf16.msra.mxu0 0
    %3253 = vmatprep.subr.bf16.mxu0 0
    %3254 = vmatpush1.bf16.msra.mxu0 0
    %3255 = vmatprep.subr.bf16.mxu0 0
    %3256 = vmatpush1.bf16.msra.mxu0 0
    %3257 = vmatprep.subr.bf16.mxu0 0
    %3258 = vmatpush1.bf16.msra.mxu0 0
    %3259 = vmatprep.subr.bf16.mxu0 0
    %3260 = vmatpush1.bf16.msra.mxu0 0
    %3261 = vmatprep.subr.bf16.mxu0 0
    %3262 = vmatpush1.bf16.msra.mxu0 0
    %3263 = vmatprep.subr.bf16.mxu0 0
    %3264 = vmatpush1.bf16.msra.mxu0 %v3248
    %3265 = vmatprep.subr.bf16.mxu0 0
    %3266 = vmatpush1.bf16.msra.mxu0 %v3247
    %3267 = vmatprep.subr.bf16.mxu0 0
    %3268 = vmatpush2.bf16.msra.mxu0 0
    %3269 = vmatprep.subr.bf16.mxu0 0
    %3270 = vmatpush2.bf16.msra.mxu0 0
    %3271 = vmatprep.subr.bf16.mxu0 0
    %3272 = vmatpush2.bf16.msra.mxu0 0
    %3273 = vmatprep.subr.bf16.mxu0 0
    %3274 = vmatpush2.bf16.msra.mxu0 0
    %3275 = vmatprep.subr.bf16.mxu0 0
    %3276 = vmatpush2.bf16.msra.mxu0 0
    %3277 = vmatprep.subr.bf16.mxu0 0
    %3278 = vmatpush2.bf16.msra.mxu0 0
    %3279 = vmatprep.subr.bf16.mxu0 0
    %3280 = vmatpush2.bf16.msra.mxu0 0
    %3281 = vmatprep.subr.bf16.mxu0 0
    %3282 = vmatpush2.bf16.msra.mxu0 0
    %3283 = vmatprep.mubr.bf16.mxu0 0
    %3284 = vmatmul.mubr.bf16.gmra.mxu0 %v2508
    %v3285 = vpop.f32.mrf.mxu0
    %v3286 = vadd.f32 %v3237, %v3285
    %v3287 = vpop.f32.mrf.mxu0
    %v3288 = vpop.f32.mrf.mxu0
    %v3289 = vpop.f32.mrf.mxu0
    %3290 = vdwg.mxu0
    %v3291 = vmax.f32 %v3286, 0.0
    %v3292 = vpack.c.bf16 %v3291, %v3291
    %s3293 = scalar_lea.vmem %s3, 48
    %v3294 = vld [vmem:[%s3293] sm:$0xf]
    %v3295 = vld [vmem:[%s3293 + $0x4] sm:$0xf]
    %v3298 = vunpack.c.l.b16 %v3294
    %v3299 = vunpack.c.l.b16 %v3295
    %v3300 = vpack.c.b16 %v3299, %v3298
    %v3302 = vsel %vm2629, %v3300, 0
    %v3305 = vsel %vm2633, %v3292, 0
    %3307 = vmatprep.subr.bf16.mxu0 0
    %3308 = vmatpush1.bf16.msra.mxu0 0
    %3309 = vmatprep.subr.bf16.mxu0 0
    %3310 = vmatpush1.bf16.msra.mxu0 0
    %3311 = vmatprep.subr.bf16.mxu0 0
    %3312 = vmatpush1.bf16.msra.mxu0 0
    %3313 = vmatprep.subr.bf16.mxu0 0
    %3314 = vmatpush1.bf16.msra.mxu0 0
    %3315 = vmatprep.subr.bf16.mxu0 0
    %3316 = vmatpush1.bf16.msra.mxu0 0
    %3317 = vmatprep.subr.bf16.mxu0 0
    %3318 = vmatpush1.bf16.msra.mxu0 0
    %3319 = vmatprep.subr.bf16.mxu0 0
    %3320 = vmatpush1.bf16.msra.mxu0 0
    %3321 = vmatprep.subr.bf16.mxu0 0
    %3322 = vmatpush1.bf16.msra.mxu0 %v3305
    %3323 = vmatprep.subr.bf16.mxu0 0
    %3324 = vmatpush2.bf16.msra.mxu0 0
    %3325 = vmatprep.subr.bf16.mxu0 0
    %3326 = vmatpush2.bf16.msra.mxu0 0
    %3327 = vmatprep.subr.bf16.mxu0 0
    %3328 = vmatpush2.bf16.msra.mxu0 0
    %3329 = vmatprep.subr.bf16.mxu0 0
    %3330 = vmatpush2.bf16.msra.mxu0 0
    %3331 = vmatprep.subr.bf16.mxu0 0
    %3332 = vmatpush2.bf16.msra.mxu0 0
    %3333 = vmatprep.subr.bf16.mxu0 0
    %3334 = vmatpush2.bf16.msra.mxu0 0
    %3335 = vmatprep.subr.bf16.mxu0 0
    %3336 = vmatpush2.bf16.msra.mxu0 0
    %3337 = vmatprep.subr.bf16.mxu0 0
    %3338 = vmatpush2.bf16.msra.mxu0 0
    %3339 = vmatprep.mubr.bf16.mxu0 0
    %3340 = vmatmul.mubr.bf16.gmra.mxu0 %v3302
    %v3341 = vpop.f32.mrf.mxu0
    %v3342 = vadd.f32 0.0, %v3341
    %v3343 = vpop.f32.mrf.mxu0
    %v3344 = vpop.f32.mrf.mxu0
    %v3345 = vadd.f32 0.0, %v3344
    %v3346 = vpop.f32.mrf.mxu0
    %3347 = vdwg.mxu0
    %v3348 = vadd.f32 %v3224, %v3342
    %v3349 = vadd.f32 %v3225, %v3345
    %s3350 = scalar_lea.vmem %s18, 112
    %v3351 = vld [vmem:[%s3350] sm:$0xf]
    %v3352 = vld [vmem:[%s3350 + $0x4] sm:$0xf]
    %v3353 = vld [vmem:[%s3350 + $0x8] sm:$0xf]
    %v3354 = vld [vmem:[%s3350 + $0xc] sm:$0xf]
    %s3355 = scalar_lea.vmem %s19, 7
    %v3356 = vld [vmem:[%s3355] sm:$0x1]
    %v3358 = vlaneseq
    %v3359 = vshrl.u32 %v3358, 7
    %v3360 = vsub.s32 0, %v3359
    %v3361 = vrot.slane %v3356, %v3360
    %v3367 = vunpack.c.l.b16 %v3351
    %v3368 = vunpack.c.l.b16 %v3352
    %v3369 = vunpack.c.l.b16 %v3353
    %v3370 = vunpack.c.l.b16 %v3354
    %v3371 = vpack.c.b16 %v3368, %v3367
    %v3372 = vpack.c.b16 %v3370, %v3369
    %3375 = vmatprep.subr.bf16.mxu0 0
    %3376 = vmatpush1.bf16.msra.mxu0 0
    %3377 = vmatprep.subr.bf16.mxu0 0
    %3378 = vmatpush1.bf16.msra.mxu0 0
    %3379 = vmatprep.subr.bf16.mxu0 0
    %3380 = vmatpush1.bf16.msra.mxu0 0
    %3381 = vmatprep.subr.bf16.mxu0 0
    %3382 = vmatpush1.bf16.msra.mxu0 0
    %3383 = vmatprep.subr.bf16.mxu0 0
    %3384 = vmatpush1.bf16.msra.mxu0 0
    %3385 = vmatprep.subr.bf16.mxu0 0
    %3386 = vmatpush1.bf16.msra.mxu0 0
    %3387 = vmatprep.subr.bf16.mxu0 0
    %3388 = vmatpush1.bf16.msra.mxu0 %v3372
    %3389 = vmatprep.subr.bf16.mxu0 0
    %3390 = vmatpush1.bf16.msra.mxu0 %v3371
    %3391 = vmatprep.subr.bf16.mxu0 0
    %3392 = vmatpush2.bf16.msra.mxu0 0
    %3393 = vmatprep.subr.bf16.mxu0 0
    %3394 = vmatpush2.bf16.msra.mxu0 0
    %3395 = vmatprep.subr.bf16.mxu0 0
    %3396 = vmatpush2.bf16.msra.mxu0 0
    %3397 = vmatprep.subr.bf16.mxu0 0
    %3398 = vmatpush2.bf16.msra.mxu0 0
    %3399 = vmatprep.subr.bf16.mxu0 0
    %3400 = vmatpush2.bf16.msra.mxu0 0
    %3401 = vmatprep.subr.bf16.mxu0 0
    %3402 = vmatpush2.bf16.msra.mxu0 0
    %3403 = vmatprep.subr.bf16.mxu0 0
    %3404 = vmatpush2.bf16.msra.mxu0 0
    %3405 = vmatprep.subr.bf16.mxu0 0
    %3406 = vmatpush2.bf16.msra.mxu0 0
    %3407 = vmatprep.mubr.bf16.mxu0 0
    %3408 = vmatmul.mubr.bf16.gmra.mxu0 %v2508
    %v3409 = vpop.f32.mrf.mxu0
    %v3410 = vadd.f32 %v3361, %v3409
    %v3411 = vpop.f32.mrf.mxu0
    %v3412 = vpop.f32.mrf.mxu0
    %v3413 = vpop.f32.mrf.mxu0
    %3414 = vdwg.mxu0
    %v3415 = vmax.f32 %v3410, 0.0
    %v3416 = vpack.c.bf16 %v3415, %v3415
    %s3417 = scalar_lea.vmem %s3, 56
    %v3418 = vld [vmem:[%s3417] sm:$0xf]
    %v3419 = vld [vmem:[%s3417 + $0x4] sm:$0xf]
    %v3422 = vunpack.c.l.b16 %v3418
    %v3423 = vunpack.c.l.b16 %v3419
    %v3424 = vpack.c.b16 %v3423, %v3422
    %v3426 = vsel %vm2629, %v3424, 0
    %v3429 = vsel %vm2633, %v3416, 0
    %3431 = vmatprep.subr.bf16.mxu0 0
    %3432 = vmatpush1.bf16.msra.mxu0 0
    %3433 = vmatprep.subr.bf16.mxu0 0
    %3434 = vmatpush1.bf16.msra.mxu0 0
    %3435 = vmatprep.subr.bf16.mxu0 0
    %3436 = vmatpush1.bf16.msra.mxu0 0
    %3437 = vmatprep.subr.bf16.mxu0 0
    %3438 = vmatpush1.bf16.msra.mxu0 0
    %3439 = vmatprep.subr.bf16.mxu0 0
    %3440 = vmatpush1.bf16.msra.mxu0 0
    %3441 = vmatprep.subr.bf16.mxu0 0
    %3442 = vmatpush1.bf16.msra.mxu0 0
    %3443 = vmatprep.subr.bf16.mxu0 0
    %3444 = vmatpush1.bf16.msra.mxu0 0
    %3445 = vmatprep.subr.bf16.mxu0 0
    %3446 = vmatpush1.bf16.msra.mxu0 %v3429
    %3447 = vmatprep.subr.bf16.mxu0 0
    %3448 = vmatpush2.bf16.msra.mxu0 0
    %3449 = vmatprep.subr.bf16.mxu0 0
    %3450 = vmatpush2.bf16.msra.mxu0 0
    %3451 = vmatprep.subr.bf16.mxu0 0
    %3452 = vmatpush2.bf16.msra.mxu0 0
    %3453 = vmatprep.subr.bf16.mxu0 0
    %3454 = vmatpush2.bf16.msra.mxu0 0
    %3455 = vmatprep.subr.bf16.mxu0 0
    %3456 = vmatpush2.bf16.msra.mxu0 0
    %3457 = vmatprep.subr.bf16.mxu0 0
    %3458 = vmatpush2.bf16.msra.mxu0 0
    %3459 = vmatprep.subr.bf16.mxu0 0
    %3460 = vmatpush2.bf16.msra.mxu0 0
    %3461 = vmatprep.subr.bf16.mxu0 0
    %3462 = vmatpush2.bf16.msra.mxu0 0
    %3463 = vmatprep.mubr.bf16.mxu0 0
    %3464 = vmatmul.mubr.bf16.gmra.mxu0 %v3426
    %v3465 = vpop.f32.mrf.mxu0
    %v3466 = vadd.f32 0.0, %v3465
    %v3467 = vpop.f32.mrf.mxu0
    %v3468 = vpop.f32.mrf.mxu0
    %v3469 = vadd.f32 0.0, %v3468
    %v3470 = vpop.f32.mrf.mxu0
    %3471 = vdwg.mxu0
    %v3472 = vadd.f32 %v3348, %v3466
    %v3473 = vadd.f32 %v3349, %v3469
    %v3474 = vpack.c.bf16 %v3473, %v3472
    %v3475 = vld [vmem:[%s21] sm:$0x3]
    %3476 = vmatprep.subr.bf16.mxu0 0
    %3477 = vmatpush1.bf16.msra.mxu0 0
    %3478 = vmatprep.subr.bf16.mxu0 0
    %3479 = vmatpush1.bf16.msra.mxu0 0
    %3480 = vmatprep.subr.bf16.mxu0 0
    %3481 = vmatpush1.bf16.msra.mxu0 0
    %3482 = vmatprep.subr.bf16.mxu0 0
    %3483 = vmatpush1.bf16.msra.mxu0 0
    %3484 = vmatprep.subr.bf16.mxu0 0
    %3485 = vmatpush1.bf16.msra.mxu0 0
    %3486 = vmatprep.subr.bf16.mxu0 0
    %3487 = vmatpush1.bf16.msra.mxu0 0
    %3488 = vmatprep.subr.bf16.mxu0 0
    %3489 = vmatpush1.bf16.msra.mxu0 0
    %3490 = vmatprep.subr.bf16.mxu0 0
    %3491 = vmatpush1.bf16.msra.mxu0 %v3474
    %3492 = vmatprep.subr.bf16.mxu0 0
    %3493 = vmatpush2.bf16.msra.mxu0 0
    %3494 = vmatprep.subr.bf16.mxu0 0
    %3495 = vmatpush2.bf16.msra.mxu0 0
    %3496 = vmatprep.subr.bf16.mxu0 0
    %3497 = vmatpush2.bf16.msra.mxu0 0
    %3498 = vmatprep.subr.bf16.mxu0 0
    %3499 = vmatpush2.bf16.msra.mxu0 0
    %3500 = vmatprep.subr.bf16.mxu0 0
    %3501 = vmatpush2.bf16.msra.mxu0 0
    %3502 = vmatprep.subr.bf16.mxu0 0
    %3503 = vmatpush2.bf16.msra.mxu0 0
    %3504 = vmatprep.subr.bf16.mxu0 0
    %3505 = vmatpush2.bf16.msra.mxu0 0
    %3506 = vmatprep.subr.bf16.mxu0 0
    %3507 = vmatpush2.bf16.msra.mxu0 0
    %3508 = vmatprep.mubr.bf16.mxu0 0
    %3509 = vmatmul.mubr.bf16.gmra.mxu0 %v97
    %v3510 = vpop.f32.mrf.mxu0
    %v3511 = vadd.f32 0.0, %v3510
    %v3512 = vpop.f32.mrf.mxu0
    %v3513 = vpop.f32.mrf.mxu0
    %v3514 = vadd.f32 0.0, %v3513
    %v3515 = vpop.f32.mrf.mxu0
    %3516 = vdwg.mxu0
    %v3517 = vpack.c.bf16 %v3514, %v3511
    %v3518 = vld [vmem:[%s20] sm:$0xff]
    %v3519 = vld [vmem:[%s20 + $0x8] sm:$0xff]
    %v3520 = vld [vmem:[%s20 + $0x10] sm:$0xff]
    %v3521 = vld [vmem:[%s20 + $0x18] sm:$0xff]
    %v3522 = vld [vmem:[%s20 + $0x20] sm:$0xff]
    %v3523 = vld [vmem:[%s20 + $0x28] sm:$0xff]
    %v3524 = vld [vmem:[%s20 + $0x30] sm:$0xff]
    %v3525 = vld [vmem:[%s20 + $0x38] sm:$0xff]
    %v3526 = vld [vmem:[%s20 + $0x40] sm:$0xff]
    %v3527 = vld [vmem:[%s20 + $0x48] sm:$0xff]
    %v3528 = vld [vmem:[%s20 + $0x50] sm:$0xff]
    %v3529 = vld [vmem:[%s20 + $0x58] sm:$0xff]
    %v3530 = vld [vmem:[%s20 + $0x60] sm:$0xff]
    %v3531 = vld [vmem:[%s20 + $0x68] sm:$0xff]
    %v3532 = vld [vmem:[%s20 + $0x70] sm:$0xff]
    %v3533 = vld [vmem:[%s20 + $0x78] sm:$0xff]
    %v3550 = vunpack.c.l.b16 %v3518
    %v3551 = vunpack.c.h.b16 %v3518
    %v3552 = vunpack.c.l.b16 %v3519
    %v3553 = vunpack.c.h.b16 %v3519
    %v3554 = vunpack.c.l.b16 %v3520
    %v3555 = vunpack.c.h.b16 %v3520
    %v3556 = vunpack.c.l.b16 %v3521
    %v3557 = vunpack.c.h.b16 %v3521
    %v3558 = vunpack.c.l.b16 %v3522
    %v3559 = vunpack.c.h.b16 %v3522
    %v3560 = vunpack.c.l.b16 %v3523
    %v3561 = vunpack.c.h.b16 %v3523
    %v3562 = vunpack.c.l.b16 %v3524
    %v3563 = vunpack.c.h.b16 %v3524
    %v3564 = vunpack.c.l.b16 %v3525
    %v3565 = vunpack.c.h.b16 %v3525
    %v3566 = vunpack.c.l.b16 %v3526
    %v3567 = vunpack.c.h.b16 %v3526
    %v3568 = vunpack.c.l.b16 %v3527
    %v3569 = vunpack.c.h.b16 %v3527
    %v3570 = vunpack.c.l.b16 %v3528
    %v3571 = vunpack.c.h.b16 %v3528
    %v3572 = vunpack.c.l.b16 %v3529
    %v3573 = vunpack.c.h.b16 %v3529
    %v3574 = vunpack.c.l.b16 %v3530
    %v3575 = vunpack.c.h.b16 %v3530
    %v3576 = vunpack.c.l.b16 %v3531
    %v3577 = vunpack.c.h.b16 %v3531
    %v3578 = vunpack.c.l.b16 %v3532
    %v3579 = vunpack.c.h.b16 %v3532
    %v3580 = vunpack.c.l.b16 %v3533
    %v3581 = vunpack.c.h.b16 %v3533
    %v3582 = vpack.c.b16 %v3552, %v3550
    %v3583 = vpack.c.b16 %v3553, %v3551
    %v3584 = vpack.c.b16 %v3556, %v3554
    %v3585 = vpack.c.b16 %v3557, %v3555
    %v3586 = vpack.c.b16 %v3560, %v3558
    %v3587 = vpack.c.b16 %v3561, %v3559
    %v3588 = vpack.c.b16 %v3564, %v3562
    %v3589 = vpack.c.b16 %v3565, %v3563
    %v3590 = vpack.c.b16 %v3568, %v3566
    %v3591 = vpack.c.b16 %v3569, %v3567
    %v3592 = vpack.c.b16 %v3572, %v3570
    %v3593 = vpack.c.b16 %v3573, %v3571
    %v3594 = vpack.c.b16 %v3576, %v3574
    %v3595 = vpack.c.b16 %v3577, %v3575
    %v3596 = vpack.c.b16 %v3580, %v3578
    %v3597 = vpack.c.b16 %v3581, %v3579
    %3614 = vmatprep.subr.bf16.mxu0 %v3597
    %3615 = vmatpush1.bf16.msra.mxu0 %v3596
    %3616 = vmatprep.subr.bf16.mxu0 %v3595
    %3617 = vmatpush1.bf16.msra.mxu0 %v3594
    %3618 = vmatprep.subr.bf16.mxu0 %v3593
    %3619 = vmatpush1.bf16.msra.mxu0 %v3592
    %3620 = vmatprep.subr.bf16.mxu0 %v3591
    %3621 = vmatpush1.bf16.msra.mxu0 %v3590
    %3622 = vmatprep.subr.bf16.mxu0 %v3589
    %3623 = vmatpush1.bf16.msra.mxu0 %v3588
    %3624 = vmatprep.subr.bf16.mxu0 %v3587
    %3625 = vmatpush1.bf16.msra.mxu0 %v3586
    %3626 = vmatprep.subr.bf16.mxu0 %v3585
    %3627 = vmatpush1.bf16.msra.mxu0 %v3584
    %3628 = vmatprep.subr.bf16.mxu0 %v3583
    %3629 = vmatpush1.bf16.msra.mxu0 %v3582
    %3630 = vmatprep.subr.bf16.mxu0 0
    %3631 = vmatpush2.bf16.msra.mxu0 0
    %3632 = vmatprep.subr.bf16.mxu0 0
    %3633 = vmatpush2.bf16.msra.mxu0 0
    %3634 = vmatprep.subr.bf16.mxu0 0
    %3635 = vmatpush2.bf16.msra.mxu0 0
    %3636 = vmatprep.subr.bf16.mxu0 0
    %3637 = vmatpush2.bf16.msra.mxu0 0
    %3638 = vmatprep.subr.bf16.mxu0 0
    %3639 = vmatpush2.bf16.msra.mxu0 0
    %3640 = vmatprep.subr.bf16.mxu0 0
    %3641 = vmatpush2.bf16.msra.mxu0 0
    %3642 = vmatprep.subr.bf16.mxu0 0
    %3643 = vmatpush2.bf16.msra.mxu0 0
    %3644 = vmatprep.subr.bf16.mxu0 0
    %3645 = vmatpush2.bf16.msra.mxu0 0
    %3646 = vmatprep.mubr.bf16.mxu0 0
    %3647 = vmatmul.mubr.bf16.gmra.mxu0 %v3517
    %v3648 = vpop.f32.mrf.mxu0
    %v3649 = vadd.f32 0.0, %v3648
    %v3650 = vpop.f32.mrf.mxu0
    %v3651 = vadd.f32 0.0, %v3650
    %v3652 = vpop.f32.mrf.mxu0
    %v3653 = vadd.f32 0.0, %v3652
    %v3654 = vpop.f32.mrf.mxu0
    %v3655 = vadd.f32 0.0, %v3654
    %3656 = vdwg.mxu0
    %v3658 = vlaneseq
    %v3659 = vshrl.u32 %v3658, 7
    %v3660 = vsub.s32 0, %v3659
    %v3661 = vrot.slane %v3475, %v3660
    %v3662 = vlaneseq
    %v3663 = vshrl.u32 %v3662, 7
    %v3664 = vsub.s32 1, %v3663
    %v3665 = vrot.slane %v3475, %v3664
    %v3668 = vadd.f32 %v3661, %v3649
    %v3669 = vadd.f32 %v3665, %v3651
    %v3670 = vadd.f32 %v3661, %v3653
    %v3671 = vadd.f32 %v3665, %v3655
    %s3672 = scalar_lea.vmem %s20, 128
    %v3673 = vld [vmem:[%s3672] sm:$0xff]
    %v3674 = vld [vmem:[%s3672 + $0x8] sm:$0xff]
    %v3675 = vld [vmem:[%s3672 + $0x10] sm:$0xff]
    %v3676 = vld [vmem:[%s3672 + $0x18] sm:$0xff]
    %v3677 = vld [vmem:[%s3672 + $0x20] sm:$0xff]
    %v3678 = vld [vmem:[%s3672 + $0x28] sm:$0xff]
    %v3679 = vld [vmem:[%s3672 + $0x30] sm:$0xff]
    %v3680 = vld [vmem:[%s3672 + $0x38] sm:$0xff]
    %v3681 = vld [vmem:[%s3672 + $0x40] sm:$0xff]
    %v3682 = vld [vmem:[%s3672 + $0x48] sm:$0xff]
    %v3683 = vld [vmem:[%s3672 + $0x50] sm:$0xff]
    %v3684 = vld [vmem:[%s3672 + $0x58] sm:$0xff]
    %v3685 = vld [vmem:[%s3672 + $0x60] sm:$0xff]
    %v3686 = vld [vmem:[%s3672 + $0x68] sm:$0xff]
    %v3687 = vld [vmem:[%s3672 + $0x70] sm:$0xff]
    %v3688 = vld [vmem:[%s3672 + $0x78] sm:$0xff]
    %v3705 = vunpack.c.l.b16 %v3673
    %v3706 = vunpack.c.h.b16 %v3673
    %v3707 = vunpack.c.l.b16 %v3674
    %v3708 = vunpack.c.h.b16 %v3674
    %v3709 = vunpack.c.l.b16 %v3675
    %v3710 = vunpack.c.h.b16 %v3675
    %v3711 = vunpack.c.l.b16 %v3676
    %v3712 = vunpack.c.h.b16 %v3676
    %v3713 = vunpack.c.l.b16 %v3677
    %v3714 = vunpack.c.h.b16 %v3677
    %v3715 = vunpack.c.l.b16 %v3678
    %v3716 = vunpack.c.h.b16 %v3678
    %v3717 = vunpack.c.l.b16 %v3679
    %v3718 = vunpack.c.h.b16 %v3679
    %v3719 = vunpack.c.l.b16 %v3680
    %v3720 = vunpack.c.h.b16 %v3680
    %v3721 = vunpack.c.l.b16 %v3681
    %v3722 = vunpack.c.h.b16 %v3681
    %v3723 = vunpack.c.l.b16 %v3682
    %v3724 = vunpack.c.h.b16 %v3682
    %v3725 = vunpack.c.l.b16 %v3683
    %v3726 = vunpack.c.h.b16 %v3683
    %v3727 = vunpack.c.l.b16 %v3684
    %v3728 = vunpack.c.h.b16 %v3684
    %v3729 = vunpack.c.l.b16 %v3685
    %v3730 = vunpack.c.h.b16 %v3685
    %v3731 = vunpack.c.l.b16 %v3686
    %v3732 = vunpack.c.h.b16 %v3686
    %v3733 = vunpack.c.l.b16 %v3687
    %v3734 = vunpack.c.h.b16 %v3687
    %v3735 = vunpack.c.l.b16 %v3688
    %v3736 = vunpack.c.h.b16 %v3688
    %v3737 = vpack.c.b16 %v3707, %v3705
    %v3738 = vpack.c.b16 %v3708, %v3706
    %v3739 = vpack.c.b16 %v3711, %v3709
    %v3740 = vpack.c.b16 %v3712, %v3710
    %v3741 = vpack.c.b16 %v3715, %v3713
    %v3742 = vpack.c.b16 %v3716, %v3714
    %v3743 = vpack.c.b16 %v3719, %v3717
    %v3744 = vpack.c.b16 %v3720, %v3718
    %v3745 = vpack.c.b16 %v3723, %v3721
    %v3746 = vpack.c.b16 %v3724, %v3722
    %v3747 = vpack.c.b16 %v3727, %v3725
    %v3748 = vpack.c.b16 %v3728, %v3726
    %v3749 = vpack.c.b16 %v3731, %v3729
    %v3750 = vpack.c.b16 %v3732, %v3730
    %v3751 = vpack.c.b16 %v3735, %v3733
    %v3752 = vpack.c.b16 %v3736, %v3734
    %3769 = vmatprep.subr.bf16.mxu0 %v3752
    %3770 = vmatpush1.bf16.msra.mxu0 %v3751
    %3771 = vmatprep.subr.bf16.mxu0 %v3750
    %3772 = vmatpush1.bf16.msra.mxu0 %v3749
    %3773 = vmatprep.subr.bf16.mxu0 %v3748
    %3774 = vmatpush1.bf16.msra.mxu0 %v3747
    %3775 = vmatprep.subr.bf16.mxu0 %v3746
    %3776 = vmatpush1.bf16.msra.mxu0 %v3745
    %3777 = vmatprep.subr.bf16.mxu0 %v3744
    %3778 = vmatpush1.bf16.msra.mxu0 %v3743
    %3779 = vmatprep.subr.bf16.mxu0 %v3742
    %3780 = vmatpush1.bf16.msra.mxu0 %v3741
    %3781 = vmatprep.subr.bf16.mxu0 %v3740
    %3782 = vmatpush1.bf16.msra.mxu0 %v3739
    %3783 = vmatprep.subr.bf16.mxu0 %v3738
    %3784 = vmatpush1.bf16.msra.mxu0 %v3737
    %3785 = vmatprep.subr.bf16.mxu0 0
    %3786 = vmatpush2.bf16.msra.mxu0 0
    %3787 = vmatprep.subr.bf16.mxu0 0
    %3788 = vmatpush2.bf16.msra.mxu0 0
    %3789 = vmatprep.subr.bf16.mxu0 0
    %3790 = vmatpush2.bf16.msra.mxu0 0
    %3791 = vmatprep.subr.bf16.mxu0 0
    %3792 = vmatpush2.bf16.msra.mxu0 0
    %3793 = vmatprep.subr.bf16.mxu0 0
    %3794 = vmatpush2.bf16.msra.mxu0 0
    %3795 = vmatprep.subr.bf16.mxu0 0
    %3796 = vmatpush2.bf16.msra.mxu0 0
    %3797 = vmatprep.subr.bf16.mxu0 0
    %3798 = vmatpush2.bf16.msra.mxu0 0
    %3799 = vmatprep.subr.bf16.mxu0 0
    %3800 = vmatpush2.bf16.msra.mxu0 0
    %3801 = vmatprep.mubr.bf16.mxu0 0
    %3802 = vmatmul.mubr.bf16.gmra.mxu0 %v3474
    %v3803 = vpop.f32.mrf.mxu0
    %v3804 = vadd.f32 0.0, %v3803
    %v3805 = vpop.f32.mrf.mxu0
    %v3806 = vadd.f32 0.0, %v3805
    %v3807 = vpop.f32.mrf.mxu0
    %v3808 = vadd.f32 0.0, %v3807
    %v3809 = vpop.f32.mrf.mxu0
    %v3810 = vadd.f32 0.0, %v3809
    %3811 = vdwg.mxu0
    %v3812 = vadd.f32 %v3668, %v3804
    %v3813 = vadd.f32 %v3669, %v3806
    %v3814 = vadd.f32 %v3670, %v3808
    %v3815 = vadd.f32 %v3671, %v3810
    %3816 = vmatprep.subr.bf16.mxu0 0
    %3817 = vmatpush1.bf16.msra.mxu0 0
    %3818 = vmatprep.subr.bf16.mxu0 0
    %3819 = vmatpush1.bf16.msra.mxu0 0
    %3820 = vmatprep.subr.bf16.mxu0 0
    %3821 = vmatpush1.bf16.msra.mxu0 0
    %3822 = vmatprep.subr.bf16.mxu0 0
    %3823 = vmatpush1.bf16.msra.mxu0 0
    %3824 = vmatprep.subr.bf16.mxu0 0
    %3825 = vmatpush1.bf16.msra.mxu0 0
    %3826 = vmatprep.subr.bf16.mxu0 0
    %3827 = vmatpush1.bf16.msra.mxu0 0
    %3828 = vmatprep.subr.bf16.mxu0 0
    %3829 = vmatpush1.bf16.msra.mxu0 0
    %3830 = vmatprep.subr.bf16.mxu0 0
    %3831 = vmatpush1.bf16.msra.mxu0 %v3474
    %3832 = vmatprep.subr.bf16.mxu0 0
    %3833 = vmatpush2.bf16.msra.mxu0 0
    %3834 = vmatprep.subr.bf16.mxu0 0
    %3835 = vmatpush2.bf16.msra.mxu0 0
    %3836 = vmatprep.subr.bf16.mxu0 0
    %3837 = vmatpush2.bf16.msra.mxu0 0
    %3838 = vmatprep.subr.bf16.mxu0 0
    %3839 = vmatpush2.bf16.msra.mxu0 0
    %3840 = vmatprep.subr.bf16.mxu0 0
    %3841 = vmatpush2.bf16.msra.mxu0 0
    %3842 = vmatprep.subr.bf16.mxu0 0
    %3843 = vmatpush2.bf16.msra.mxu0 0
    %3844 = vmatprep.subr.bf16.mxu0 0
    %3845 = vmatpush2.bf16.msra.mxu0 0
    %3846 = vmatprep.subr.bf16.mxu0 0
    %3847 = vmatpush2.bf16.msra.mxu0 0
    %3848 = vmatprep.mubr.bf16.mxu0 0
    %3849 = vmatmul.mubr.bf16.gmra.mxu0 %v286
    %v3850 = vpop.f32.mrf.mxu0
    %v3851 = vadd.f32 0.0, %v3850
    %v3852 = vpop.f32.mrf.mxu0
    %v3853 = vpop.f32.mrf.mxu0
    %v3854 = vadd.f32 0.0, %v3853
    %v3855 = vpop.f32.mrf.mxu0
    %3856 = vdwg.mxu0
    %v3857 = vpack.c.bf16 %v3854, %v3851
    %s3858 = scalar_lea.vmem %s20, 256
    %v3859 = vld [vmem:[%s3858] sm:$0xff]
    %v3860 = vld [vmem:[%s3858 + $0x8] sm:$0xff]
    %v3861 = vld [vmem:[%s3858 + $0x10] sm:$0xff]
    %v3862 = vld [vmem:[%s3858 + $0x18] sm:$0xff]
    %v3863 = vld [vmem:[%s3858 + $0x20] sm:$0xff]
    %v3864 = vld [vmem:[%s3858 + $0x28] sm:$0xff]
    %v3865 = vld [vmem:[%s3858 + $0x30] sm:$0xff]
    %v3866 = vld [vmem:[%s3858 + $0x38] sm:$0xff]
    %v3867 = vld [vmem:[%s3858 + $0x40] sm:$0xff]
    %v3868 = vld [vmem:[%s3858 + $0x48] sm:$0xff]
    %v3869 = vld [vmem:[%s3858 + $0x50] sm:$0xff]
    %v3870 = vld [vmem:[%s3858 + $0x58] sm:$0xff]
    %v3871 = vld [vmem:[%s3858 + $0x60] sm:$0xff]
    %v3872 = vld [vmem:[%s3858 + $0x68] sm:$0xff]
    %v3873 = vld [vmem:[%s3858 + $0x70] sm:$0xff]
    %v3874 = vld [vmem:[%s3858 + $0x78] sm:$0xff]
    %v3891 = vunpack.c.l.b16 %v3859
    %v3892 = vunpack.c.h.b16 %v3859
    %v3893 = vunpack.c.l.b16 %v3860
    %v3894 = vunpack.c.h.b16 %v3860
    %v3895 = vunpack.c.l.b16 %v3861
    %v3896 = vunpack.c.h.b16 %v3861
    %v3897 = vunpack.c.l.b16 %v3862
    %v3898 = vunpack.c.h.b16 %v3862
    %v3899 = vunpack.c.l.b16 %v3863
    %v3900 = vunpack.c.h.b16 %v3863
    %v3901 = vunpack.c.l.b16 %v3864
    %v3902 = vunpack.c.h.b16 %v3864
    %v3903 = vunpack.c.l.b16 %v3865
    %v3904 = vunpack.c.h.b16 %v3865
    %v3905 = vunpack.c.l.b16 %v3866
    %v3906 = vunpack.c.h.b16 %v3866
    %v3907 = vunpack.c.l.b16 %v3867
    %v3908 = vunpack.c.h.b16 %v3867
    %v3909 = vunpack.c.l.b16 %v3868
    %v3910 = vunpack.c.h.b16 %v3868
    %v3911 = vunpack.c.l.b16 %v3869
    %v3912 = vunpack.c.h.b16 %v3869
    %v3913 = vunpack.c.l.b16 %v3870
    %v3914 = vunpack.c.h.b16 %v3870
    %v3915 = vunpack.c.l.b16 %v3871
    %v3916 = vunpack.c.h.b16 %v3871
    %v3917 = vunpack.c.l.b16 %v3872
    %v3918 = vunpack.c.h.b16 %v3872
    %v3919 = vunpack.c.l.b16 %v3873
    %v3920 = vunpack.c.h.b16 %v3873
    %v3921 = vunpack.c.l.b16 %v3874
    %v3922 = vunpack.c.h.b16 %v3874
    %v3923 = vpack.c.b16 %v3893, %v3891
    %v3924 = vpack.c.b16 %v3894, %v3892
    %v3925 = vpack.c.b16 %v3897, %v3895
    %v3926 = vpack.c.b16 %v3898, %v3896
    %v3927 = vpack.c.b16 %v3901, %v3899
    %v3928 = vpack.c.b16 %v3902, %v3900
    %v3929 = vpack.c.b16 %v3905, %v3903
    %v3930 = vpack.c.b16 %v3906, %v3904
    %v3931 = vpack.c.b16 %v3909, %v3907
    %v3932 = vpack.c.b16 %v3910, %v3908
    %v3933 = vpack.c.b16 %v3913, %v3911
    %v3934 = vpack.c.b16 %v3914, %v3912
    %v3935 = vpack.c.b16 %v3917, %v3915
    %v3936 = vpack.c.b16 %v3918, %v3916
    %v3937 = vpack.c.b16 %v3921, %v3919
    %v3938 = vpack.c.b16 %v3922, %v3920
    %3955 = vmatprep.subr.bf16.mxu0 %v3938
    %3956 = vmatpush1.bf16.msra.mxu0 %v3937
    %3957 = vmatprep.subr.bf16.mxu0 %v3936
    %3958 = vmatpush1.bf16.msra.mxu0 %v3935
    %3959 = vmatprep.subr.bf16.mxu0 %v3934
    %3960 = vmatpush1.bf16.msra.mxu0 %v3933
    %3961 = vmatprep.subr.bf16.mxu0 %v3932
    %3962 = vmatpush1.bf16.msra.mxu0 %v3931
    %3963 = vmatprep.subr.bf16.mxu0 %v3930
    %3964 = vmatpush1.bf16.msra.mxu0 %v3929
    %3965 = vmatprep.subr.bf16.mxu0 %v3928
    %3966 = vmatpush1.bf16.msra.mxu0 %v3927
    %3967 = vmatprep.subr.bf16.mxu0 %v3926
    %3968 = vmatpush1.bf16.msra.mxu0 %v3925
    %3969 = vmatprep.subr.bf16.mxu0 %v3924
    %3970 = vmatpush1.bf16.msra.mxu0 %v3923
    %3971 = vmatprep.subr.bf16.mxu0 0
    %3972 = vmatpush2.bf16.msra.mxu0 0
    %3973 = vmatprep.subr.bf16.mxu0 0
    %3974 = vmatpush2.bf16.msra.mxu0 0
    %3975 = vmatprep.subr.bf16.mxu0 0
    %3976 = vmatpush2.bf16.msra.mxu0 0
    %3977 = vmatprep.subr.bf16.mxu0 0
    %3978 = vmatpush2.bf16.msra.mxu0 0
    %3979 = vmatprep.subr.bf16.mxu0 0
    %3980 = vmatpush2.bf16.msra.mxu0 0
    %3981 = vmatprep.subr.bf16.mxu0 0
    %3982 = vmatpush2.bf16.msra.mxu0 0
    %3983 = vmatprep.subr.bf16.mxu0 0
    %3984 = vmatpush2.bf16.msra.mxu0 0
    %3985 = vmatprep.subr.bf16.mxu0 0
    %3986 = vmatpush2.bf16.msra.mxu0 0
    %3987 = vmatprep.mubr.bf16.mxu0 0
    %3988 = vmatmul.mubr.bf16.gmra.mxu0 %v3857
    %v3989 = vpop.f32.mrf.mxu0
    %v3990 = vadd.f32 0.0, %v3989
    %v3991 = vpop.f32.mrf.mxu0
    %v3992 = vadd.f32 0.0, %v3991
    %v3993 = vpop.f32.mrf.mxu0
    %v3994 = vadd.f32 0.0, %v3993
    %v3995 = vpop.f32.mrf.mxu0
    %v3996 = vadd.f32 0.0, %v3995
    %3997 = vdwg.mxu0
    %v3998 = vadd.f32 %v3812, %v3990
    %v3999 = vadd.f32 %v3813, %v3992
    %v4000 = vadd.f32 %v3814, %v3994
    %v4001 = vadd.f32 %v3815, %v3996
    %v4002 = vmax.f32 %v3998, 0.0
    %v4003 = vmax.f32 %v3999, 0.0
    %v4004 = vmax.f32 %v4000, 0.0
    %v4005 = vmax.f32 %v4001, 0.0
    %v4006 = vpack.c.bf16 %v4004, %v4002
    %v4007 = vpack.c.bf16 %v4005, %v4003
    %v4008 = vld [vmem:[%s23] sm:$0x1]
    %4009 = vmatprep.subr.bf16.mxu0 0
    %4010 = vmatpush1.bf16.msra.mxu0 0
    %4011 = vmatprep.subr.bf16.mxu0 0
    %4012 = vmatpush1.bf16.msra.mxu0 0
    %4013 = vmatprep.subr.bf16.mxu0 0
    %4014 = vmatpush1.bf16.msra.mxu0 0
    %4015 = vmatprep.subr.bf16.mxu0 0
    %4016 = vmatpush1.bf16.msra.mxu0 0
    %4017 = vmatprep.subr.bf16.mxu0 0
    %4018 = vmatpush1.bf16.msra.mxu0 0
    %4019 = vmatprep.subr.bf16.mxu0 0
    %4020 = vmatpush1.bf16.msra.mxu0 0
    %4021 = vmatprep.subr.bf16.mxu0 0
    %4022 = vmatpush1.bf16.msra.mxu0 0
    %4023 = vmatprep.subr.bf16.mxu0 %v4007
    %4024 = vmatpush1.bf16.msra.mxu0 %v4006
    %4025 = vmatprep.subr.bf16.mxu0 0
    %4026 = vmatpush2.bf16.msra.mxu0 0
    %4027 = vmatprep.subr.bf16.mxu0 0
    %4028 = vmatpush2.bf16.msra.mxu0 0
    %4029 = vmatprep.subr.bf16.mxu0 0
    %4030 = vmatpush2.bf16.msra.mxu0 0
    %4031 = vmatprep.subr.bf16.mxu0 0
    %4032 = vmatpush2.bf16.msra.mxu0 0
    %4033 = vmatprep.subr.bf16.mxu0 0
    %4034 = vmatpush2.bf16.msra.mxu0 0
    %4035 = vmatprep.subr.bf16.mxu0 0
    %4036 = vmatpush2.bf16.msra.mxu0 0
    %4037 = vmatprep.subr.bf16.mxu0 0
    %4038 = vmatpush2.bf16.msra.mxu0 0
    %4039 = vmatprep.subr.bf16.mxu0 0
    %4040 = vmatpush2.bf16.msra.mxu0 0
    %4041 = vmatprep.mubr.bf16.mxu0 0
    %4042 = vmatmul.mubr.bf16.gmra.mxu0 %v97
    %v4043 = vpop.f32.mrf.mxu0
    %v4044 = vadd.f32 0.0, %v4043
    %v4045 = vpop.f32.mrf.mxu0
    %v4046 = vadd.f32 0.0, %v4045
    %v4047 = vpop.f32.mrf.mxu0
    %v4048 = vadd.f32 0.0, %v4047
    %v4049 = vpop.f32.mrf.mxu0
    %v4050 = vadd.f32 0.0, %v4049
    %4051 = vdwg.mxu0
    %v4052 = vpack.c.bf16 %v4048, %v4044
    %v4053 = vpack.c.bf16 %v4050, %v4046
    %v4054 = vld [vmem:[%s22] sm:$0xf]
    %v4055 = vld [vmem:[%s22 + $0x4] sm:$0xf]
    %v4056 = vld [vmem:[%s22 + $0x8] sm:$0xf]
    %v4057 = vld [vmem:[%s22 + $0xc] sm:$0xf]
    %v4058 = vld [vmem:[%s22 + $0x10] sm:$0xf]
    %v4059 = vld [vmem:[%s22 + $0x14] sm:$0xf]
    %v4060 = vld [vmem:[%s22 + $0x18] sm:$0xf]
    %v4061 = vld [vmem:[%s22 + $0x1c] sm:$0xf]
    %v4062 = vld [vmem:[%s22 + $0x20] sm:$0xf]
    %v4063 = vld [vmem:[%s22 + $0x24] sm:$0xf]
    %v4064 = vld [vmem:[%s22 + $0x28] sm:$0xf]
    %v4065 = vld [vmem:[%s22 + $0x2c] sm:$0xf]
    %v4066 = vld [vmem:[%s22 + $0x30] sm:$0xf]
    %v4067 = vld [vmem:[%s22 + $0x34] sm:$0xf]
    %v4068 = vld [vmem:[%s22 + $0x38] sm:$0xf]
    %v4069 = vld [vmem:[%s22 + $0x3c] sm:$0xf]
    %v4070 = vld [vmem:[%s22 + $0x40] sm:$0xf]
    %v4071 = vld [vmem:[%s22 + $0x44] sm:$0xf]
    %v4072 = vld [vmem:[%s22 + $0x48] sm:$0xf]
    %v4073 = vld [vmem:[%s22 + $0x4c] sm:$0xf]
    %v4074 = vld [vmem:[%s22 + $0x50] sm:$0xf]
    %v4075 = vld [vmem:[%s22 + $0x54] sm:$0xf]
    %v4076 = vld [vmem:[%s22 + $0x58] sm:$0xf]
    %v4077 = vld [vmem:[%s22 + $0x5c] sm:$0xf]
    %v4078 = vld [vmem:[%s22 + $0x60] sm:$0xf]
    %v4079 = vld [vmem:[%s22 + $0x64] sm:$0xf]
    %v4080 = vld [vmem:[%s22 + $0x68] sm:$0xf]
    %v4081 = vld [vmem:[%s22 + $0x6c] sm:$0xf]
    %v4082 = vld [vmem:[%s22 + $0x70] sm:$0xf]
    %v4083 = vld [vmem:[%s22 + $0x74] sm:$0xf]
    %v4084 = vld [vmem:[%s22 + $0x78] sm:$0xf]
    %v4085 = vld [vmem:[%s22 + $0x7c] sm:$0xf]
    %v4118 = vunpack.c.l.b16 %v4054
    %v4119 = vunpack.c.l.b16 %v4055
    %v4120 = vunpack.c.l.b16 %v4056
    %v4121 = vunpack.c.l.b16 %v4057
    %v4122 = vunpack.c.l.b16 %v4058
    %v4123 = vunpack.c.l.b16 %v4059
    %v4124 = vunpack.c.l.b16 %v4060
    %v4125 = vunpack.c.l.b16 %v4061
    %v4126 = vunpack.c.l.b16 %v4062
    %v4127 = vunpack.c.l.b16 %v4063
    %v4128 = vunpack.c.l.b16 %v4064
    %v4129 = vunpack.c.l.b16 %v4065
    %v4130 = vunpack.c.l.b16 %v4066
    %v4131 = vunpack.c.l.b16 %v4067
    %v4132 = vunpack.c.l.b16 %v4068
    %v4133 = vunpack.c.l.b16 %v4069
    %v4134 = vunpack.c.l.b16 %v4070
    %v4135 = vunpack.c.l.b16 %v4071
    %v4136 = vunpack.c.l.b16 %v4072
    %v4137 = vunpack.c.l.b16 %v4073
    %v4138 = vunpack.c.l.b16 %v4074
    %v4139 = vunpack.c.l.b16 %v4075
    %v4140 = vunpack.c.l.b16 %v4076
    %v4141 = vunpack.c.l.b16 %v4077
    %v4142 = vunpack.c.l.b16 %v4078
    %v4143 = vunpack.c.l.b16 %v4079
    %v4144 = vunpack.c.l.b16 %v4080
    %v4145 = vunpack.c.l.b16 %v4081
    %v4146 = vunpack.c.l.b16 %v4082
    %v4147 = vunpack.c.l.b16 %v4083
    %v4148 = vunpack.c.l.b16 %v4084
    %v4149 = vunpack.c.l.b16 %v4085
    %v4150 = vpack.c.b16 %v4119, %v4118
    %v4151 = vpack.c.b16 %v4121, %v4120
    %v4152 = vpack.c.b16 %v4123, %v4122
    %v4153 = vpack.c.b16 %v4125, %v4124
    %v4154 = vpack.c.b16 %v4127, %v4126
    %v4155 = vpack.c.b16 %v4129, %v4128
    %v4156 = vpack.c.b16 %v4131, %v4130
    %v4157 = vpack.c.b16 %v4133, %v4132
    %v4158 = vpack.c.b16 %v4135, %v4134
    %v4159 = vpack.c.b16 %v4137, %v4136
    %v4160 = vpack.c.b16 %v4139, %v4138
    %v4161 = vpack.c.b16 %v4141, %v4140
    %v4162 = vpack.c.b16 %v4143, %v4142
    %v4163 = vpack.c.b16 %v4145, %v4144
    %v4164 = vpack.c.b16 %v4147, %v4146
    %v4165 = vpack.c.b16 %v4149, %v4148
    %4182 = vmatprep.subr.bf16.mxu0 0
    %4183 = vmatpush1.bf16.msra.mxu0 %v4157
    %4184 = vmatprep.subr.bf16.mxu0 0
    %4185 = vmatpush1.bf16.msra.mxu0 %v4156
    %4186 = vmatprep.subr.bf16.mxu0 0
    %4187 = vmatpush1.bf16.msra.mxu0 %v4155
    %4188 = vmatprep.subr.bf16.mxu0 0
    %4189 = vmatpush1.bf16.msra.mxu0 %v4154
    %4190 = vmatprep.subr.bf16.mxu0 0
    %4191 = vmatpush1.bf16.msra.mxu0 %v4153
    %4192 = vmatprep.subr.bf16.mxu0 0
    %4193 = vmatpush1.bf16.msra.mxu0 %v4152
    %4194 = vmatprep.subr.bf16.mxu0 0
    %4195 = vmatpush1.bf16.msra.mxu0 %v4151
    %4196 = vmatprep.subr.bf16.mxu0 0
    %4197 = vmatpush1.bf16.msra.mxu0 %v4150
    %4198 = vmatprep.subr.bf16.mxu0 0
    %4199 = vmatpush2.bf16.msra.mxu0 %v4165
    %4200 = vmatprep.subr.bf16.mxu0 0
    %4201 = vmatpush2.bf16.msra.mxu0 %v4164
    %4202 = vmatprep.subr.bf16.mxu0 0
    %4203 = vmatpush2.bf16.msra.mxu0 %v4163
    %4204 = vmatprep.subr.bf16.mxu0 0
    %4205 = vmatpush2.bf16.msra.mxu0 %v4162
    %4206 = vmatprep.subr.bf16.mxu0 0
    %4207 = vmatpush2.bf16.msra.mxu0 %v4161
    %4208 = vmatprep.subr.bf16.mxu0 0
    %4209 = vmatpush2.bf16.msra.mxu0 %v4160
    %4210 = vmatprep.subr.bf16.mxu0 0
    %4211 = vmatpush2.bf16.msra.mxu0 %v4159
    %4212 = vmatprep.subr.bf16.mxu0 0
    %4213 = vmatpush2.bf16.msra.mxu0 %v4158
    %4214 = vmatprep.mubr.bf16.mxu0 %v4053
    %4215 = vmatmul.mubr.bf16.gmra.mxu0 %v4052
    %v4216 = vpop.f32.mrf.mxu0
    %v4217 = vadd.f32 0.0, %v4216
    %v4218 = vpop.f32.mrf.mxu0
    %v4219 = vpop.f32.mrf.mxu0
    %v4220 = vadd.f32 0.0, %v4219
    %v4221 = vpop.f32.mrf.mxu0
    %4222 = vdwg.mxu0
    %v4224 = vlaneseq
    %v4225 = vshrl.u32 %v4224, 7
    %v4226 = vsub.s32 0, %v4225
    %v4227 = vrot.slane %v4008, %v4226
    %v4229 = vadd.f32 %v4227, %v4217
    %v4230 = vadd.f32 %v4227, %v4220
    %s4231 = scalar_lea.vmem %s22, 128
    %v4232 = vld [vmem:[%s4231] sm:$0xf]
    %v4233 = vld [vmem:[%s4231 + $0x4] sm:$0xf]
    %v4234 = vld [vmem:[%s4231 + $0x8] sm:$0xf]
    %v4235 = vld [vmem:[%s4231 + $0xc] sm:$0xf]
    %v4236 = vld [vmem:[%s4231 + $0x10] sm:$0xf]
    %v4237 = vld [vmem:[%s4231 + $0x14] sm:$0xf]
    %v4238 = vld [vmem:[%s4231 + $0x18] sm:$0xf]
    %v4239 = vld [vmem:[%s4231 + $0x1c] sm:$0xf]
    %v4240 = vld [vmem:[%s4231 + $0x20] sm:$0xf]
    %v4241 = vld [vmem:[%s4231 + $0x24] sm:$0xf]
    %v4242 = vld [vmem:[%s4231 + $0x28] sm:$0xf]
    %v4243 = vld [vmem:[%s4231 + $0x2c] sm:$0xf]
    %v4244 = vld [vmem:[%s4231 + $0x30] sm:$0xf]
    %v4245 = vld [vmem:[%s4231 + $0x34] sm:$0xf]
    %v4246 = vld [vmem:[%s4231 + $0x38] sm:$0xf]
    %v4247 = vld [vmem:[%s4231 + $0x3c] sm:$0xf]
    %v4248 = vld [vmem:[%s4231 + $0x40] sm:$0xf]
    %v4249 = vld [vmem:[%s4231 + $0x44] sm:$0xf]
    %v4250 = vld [vmem:[%s4231 + $0x48] sm:$0xf]
    %v4251 = vld [vmem:[%s4231 + $0x4c] sm:$0xf]
    %v4252 = vld [vmem:[%s4231 + $0x50] sm:$0xf]
    %v4253 = vld [vmem:[%s4231 + $0x54] sm:$0xf]
    %v4254 = vld [vmem:[%s4231 + $0x58] sm:$0xf]
    %v4255 = vld [vmem:[%s4231 + $0x5c] sm:$0xf]
    %v4256 = vld [vmem:[%s4231 + $0x60] sm:$0xf]
    %v4257 = vld [vmem:[%s4231 + $0x64] sm:$0xf]
    %v4258 = vld [vmem:[%s4231 + $0x68] sm:$0xf]
    %v4259 = vld [vmem:[%s4231 + $0x6c] sm:$0xf]
    %v4260 = vld [vmem:[%s4231 + $0x70] sm:$0xf]
    %v4261 = vld [vmem:[%s4231 + $0x74] sm:$0xf]
    %v4262 = vld [vmem:[%s4231 + $0x78] sm:$0xf]
    %v4263 = vld [vmem:[%s4231 + $0x7c] sm:$0xf]
    %v4296 = vunpack.c.l.b16 %v4232
    %v4297 = vunpack.c.l.b16 %v4233
    %v4298 = vunpack.c.l.b16 %v4234
    %v4299 = vunpack.c.l.b16 %v4235
    %v4300 = vunpack.c.l.b16 %v4236
    %v4301 = vunpack.c.l.b16 %v4237
    %v4302 = vunpack.c.l.b16 %v4238
    %v4303 = vunpack.c.l.b16 %v4239
    %v4304 = vunpack.c.l.b16 %v4240
    %v4305 = vunpack.c.l.b16 %v4241
    %v4306 = vunpack.c.l.b16 %v4242
    %v4307 = vunpack.c.l.b16 %v4243
    %v4308 = vunpack.c.l.b16 %v4244
    %v4309 = vunpack.c.l.b16 %v4245
    %v4310 = vunpack.c.l.b16 %v4246
    %v4311 = vunpack.c.l.b16 %v4247
    %v4312 = vunpack.c.l.b16 %v4248
    %v4313 = vunpack.c.l.b16 %v4249
    %v4314 = vunpack.c.l.b16 %v4250
    %v4315 = vunpack.c.l.b16 %v4251
    %v4316 = vunpack.c.l.b16 %v4252
    %v4317 = vunpack.c.l.b16 %v4253
    %v4318 = vunpack.c.l.b16 %v4254
    %v4319 = vunpack.c.l.b16 %v4255
    %v4320 = vunpack.c.l.b16 %v4256
    %v4321 = vunpack.c.l.b16 %v4257
    %v4322 = vunpack.c.l.b16 %v4258
    %v4323 = vunpack.c.l.b16 %v4259
    %v4324 = vunpack.c.l.b16 %v4260
    %v4325 = vunpack.c.l.b16 %v4261
    %v4326 = vunpack.c.l.b16 %v4262
    %v4327 = vunpack.c.l.b16 %v4263
    %v4328 = vpack.c.b16 %v4297, %v4296
    %v4329 = vpack.c.b16 %v4299, %v4298
    %v4330 = vpack.c.b16 %v4301, %v4300
    %v4331 = vpack.c.b16 %v4303, %v4302
    %v4332 = vpack.c.b16 %v4305, %v4304
    %v4333 = vpack.c.b16 %v4307, %v4306
    %v4334 = vpack.c.b16 %v4309, %v4308
    %v4335 = vpack.c.b16 %v4311, %v4310
    %v4336 = vpack.c.b16 %v4313, %v4312
    %v4337 = vpack.c.b16 %v4315, %v4314
    %v4338 = vpack.c.b16 %v4317, %v4316
    %v4339 = vpack.c.b16 %v4319, %v4318
    %v4340 = vpack.c.b16 %v4321, %v4320
    %v4341 = vpack.c.b16 %v4323, %v4322
    %v4342 = vpack.c.b16 %v4325, %v4324
    %v4343 = vpack.c.b16 %v4327, %v4326
    %4360 = vmatprep.subr.bf16.mxu0 0
    %4361 = vmatpush1.bf16.msra.mxu0 %v4335
    %4362 = vmatprep.subr.bf16.mxu0 0
    %4363 = vmatpush1.bf16.msra.mxu0 %v4334
    %4364 = vmatprep.subr.bf16.mxu0 0
    %4365 = vmatpush1.bf16.msra.mxu0 %v4333
    %4366 = vmatprep.subr.bf16.mxu0 0
    %4367 = vmatpush1.bf16.msra.mxu0 %v4332
    %4368 = vmatprep.subr.bf16.mxu0 0
    %4369 = vmatpush1.bf16.msra.mxu0 %v4331
    %4370 = vmatprep.subr.bf16.mxu0 0
    %4371 = vmatpush1.bf16.msra.mxu0 %v4330
    %4372 = vmatprep.subr.bf16.mxu0 0
    %4373 = vmatpush1.bf16.msra.mxu0 %v4329
    %4374 = vmatprep.subr.bf16.mxu0 0
    %4375 = vmatpush1.bf16.msra.mxu0 %v4328
    %4376 = vmatprep.subr.bf16.mxu0 0
    %4377 = vmatpush2.bf16.msra.mxu0 %v4343
    %4378 = vmatprep.subr.bf16.mxu0 0
    %4379 = vmatpush2.bf16.msra.mxu0 %v4342
    %4380 = vmatprep.subr.bf16.mxu0 0
    %4381 = vmatpush2.bf16.msra.mxu0 %v4341
    %4382 = vmatprep.subr.bf16.mxu0 0
    %4383 = vmatpush2.bf16.msra.mxu0 %v4340
    %4384 = vmatprep.subr.bf16.mxu0 0
    %4385 = vmatpush2.bf16.msra.mxu0 %v4339
    %4386 = vmatprep.subr.bf16.mxu0 0
    %4387 = vmatpush2.bf16.msra.mxu0 %v4338
    %4388 = vmatprep.subr.bf16.mxu0 0
    %4389 = vmatpush2.bf16.msra.mxu0 %v4337
    %4390 = vmatprep.subr.bf16.mxu0 0
    %4391 = vmatpush2.bf16.msra.mxu0 %v4336
    %4392 = vmatprep.mubr.bf16.mxu0 %v4007
    %4393 = vmatmul.mubr.bf16.gmra.mxu0 %v4006
    %v4394 = vpop.f32.mrf.mxu0
    %v4395 = vadd.f32 0.0, %v4394
    %v4396 = vpop.f32.mrf.mxu0
    %v4397 = vpop.f32.mrf.mxu0
    %v4398 = vadd.f32 0.0, %v4397
    %v4399 = vpop.f32.mrf.mxu0
    %4400 = vdwg.mxu0
    %v4401 = vadd.f32 %v4229, %v4395
    %v4402 = vadd.f32 %v4230, %v4398
    %4403 = vmatprep.subr.bf16.mxu0 0
    %4404 = vmatpush1.bf16.msra.mxu0 0
    %4405 = vmatprep.subr.bf16.mxu0 0
    %4406 = vmatpush1.bf16.msra.mxu0 0
    %4407 = vmatprep.subr.bf16.mxu0 0
    %4408 = vmatpush1.bf16.msra.mxu0 0
    %4409 = vmatprep.subr.bf16.mxu0 0
    %4410 = vmatpush1.bf16.msra.mxu0 0
    %4411 = vmatprep.subr.bf16.mxu0 0
    %4412 = vmatpush1.bf16.msra.mxu0 0
    %4413 = vmatprep.subr.bf16.mxu0 0
    %4414 = vmatpush1.bf16.msra.mxu0 0
    %4415 = vmatprep.subr.bf16.mxu0 0
    %4416 = vmatpush1.bf16.msra.mxu0 0
    %4417 = vmatprep.subr.bf16.mxu0 %v4007
    %4418 = vmatpush1.bf16.msra.mxu0 %v4006
    %4419 = vmatprep.subr.bf16.mxu0 0
    %4420 = vmatpush2.bf16.msra.mxu0 0
    %4421 = vmatprep.subr.bf16.mxu0 0
    %4422 = vmatpush2.bf16.msra.mxu0 0
    %4423 = vmatprep.subr.bf16.mxu0 0
    %4424 = vmatpush2.bf16.msra.mxu0 0
    %4425 = vmatprep.subr.bf16.mxu0 0
    %4426 = vmatpush2.bf16.msra.mxu0 0
    %4427 = vmatprep.subr.bf16.mxu0 0
    %4428 = vmatpush2.bf16.msra.mxu0 0
    %4429 = vmatprep.subr.bf16.mxu0 0
    %4430 = vmatpush2.bf16.msra.mxu0 0
    %4431 = vmatprep.subr.bf16.mxu0 0
    %4432 = vmatpush2.bf16.msra.mxu0 0
    %4433 = vmatprep.subr.bf16.mxu0 0
    %4434 = vmatpush2.bf16.msra.mxu0 0
    %4435 = vmatprep.mubr.bf16.mxu0 0
    %4436 = vmatmul.mubr.bf16.gmra.mxu0 %v286
    %v4437 = vpop.f32.mrf.mxu0
    %v4438 = vadd.f32 0.0, %v4437
    %v4439 = vpop.f32.mrf.mxu0
    %v4440 = vadd.f32 0.0, %v4439
    %v4441 = vpop.f32.mrf.mxu0
    %v4442 = vadd.f32 0.0, %v4441
    %v4443 = vpop.f32.mrf.mxu0
    %v4444 = vadd.f32 0.0, %v4443
    %4445 = vdwg.mxu0
    %v4446 = vpack.c.bf16 %v4442, %v4438
    %v4447 = vpack.c.bf16 %v4444, %v4440
    %s4448 = scalar_lea.vmem %s22, 256
    %v4449 = vld [vmem:[%s4448] sm:$0xf]
    %v4450 = vld [vmem:[%s4448 + $0x4] sm:$0xf]
    %v4451 = vld [vmem:[%s4448 + $0x8] sm:$0xf]
    %v4452 = vld [vmem:[%s4448 + $0xc] sm:$0xf]
    %v4453 = vld [vmem:[%s4448 + $0x10] sm:$0xf]
    %v4454 = vld [vmem:[%s4448 + $0x14] sm:$0xf]
    %v4455 = vld [vmem:[%s4448 + $0x18] sm:$0xf]
    %v4456 = vld [vmem:[%s4448 + $0x1c] sm:$0xf]
    %v4457 = vld [vmem:[%s4448 + $0x20] sm:$0xf]
    %v4458 = vld [vmem:[%s4448 + $0x24] sm:$0xf]
    %v4459 = vld [vmem:[%s4448 + $0x28] sm:$0xf]
    %v4460 = vld [vmem:[%s4448 + $0x2c] sm:$0xf]
    %v4461 = vld [vmem:[%s4448 + $0x30] sm:$0xf]
    %v4462 = vld [vmem:[%s4448 + $0x34] sm:$0xf]
    %v4463 = vld [vmem:[%s4448 + $0x38] sm:$0xf]
    %v4464 = vld [vmem:[%s4448 + $0x3c] sm:$0xf]
    %v4465 = vld [vmem:[%s4448 + $0x40] sm:$0xf]
    %v4466 = vld [vmem:[%s4448 + $0x44] sm:$0xf]
    %v4467 = vld [vmem:[%s4448 + $0x48] sm:$0xf]
    %v4468 = vld [vmem:[%s4448 + $0x4c] sm:$0xf]
    %v4469 = vld [vmem:[%s4448 + $0x50] sm:$0xf]
    %v4470 = vld [vmem:[%s4448 + $0x54] sm:$0xf]
    %v4471 = vld [vmem:[%s4448 + $0x58] sm:$0xf]
    %v4472 = vld [vmem:[%s4448 + $0x5c] sm:$0xf]
    %v4473 = vld [vmem:[%s4448 + $0x60] sm:$0xf]
    %v4474 = vld [vmem:[%s4448 + $0x64] sm:$0xf]
    %v4475 = vld [vmem:[%s4448 + $0x68] sm:$0xf]
    %v4476 = vld [vmem:[%s4448 + $0x6c] sm:$0xf]
    %v4477 = vld [vmem:[%s4448 + $0x70] sm:$0xf]
    %v4478 = vld [vmem:[%s4448 + $0x74] sm:$0xf]
    %v4479 = vld [vmem:[%s4448 + $0x78] sm:$0xf]
    %v4480 = vld [vmem:[%s4448 + $0x7c] sm:$0xf]
    %v4513 = vunpack.c.l.b16 %v4449
    %v4514 = vunpack.c.l.b16 %v4450
    %v4515 = vunpack.c.l.b16 %v4451
    %v4516 = vunpack.c.l.b16 %v4452
    %v4517 = vunpack.c.l.b16 %v4453
    %v4518 = vunpack.c.l.b16 %v4454
    %v4519 = vunpack.c.l.b16 %v4455
    %v4520 = vunpack.c.l.b16 %v4456
    %v4521 = vunpack.c.l.b16 %v4457
    %v4522 = vunpack.c.l.b16 %v4458
    %v4523 = vunpack.c.l.b16 %v4459
    %v4524 = vunpack.c.l.b16 %v4460
    %v4525 = vunpack.c.l.b16 %v4461
    %v4526 = vunpack.c.l.b16 %v4462
    %v4527 = vunpack.c.l.b16 %v4463
    %v4528 = vunpack.c.l.b16 %v4464
    %v4529 = vunpack.c.l.b16 %v4465
    %v4530 = vunpack.c.l.b16 %v4466
    %v4531 = vunpack.c.l.b16 %v4467
    %v4532 = vunpack.c.l.b16 %v4468
    %v4533 = vunpack.c.l.b16 %v4469
    %v4534 = vunpack.c.l.b16 %v4470
    %v4535 = vunpack.c.l.b16 %v4471
    %v4536 = vunpack.c.l.b16 %v4472
    %v4537 = vunpack.c.l.b16 %v4473
    %v4538 = vunpack.c.l.b16 %v4474
    %v4539 = vunpack.c.l.b16 %v4475
    %v4540 = vunpack.c.l.b16 %v4476
    %v4541 = vunpack.c.l.b16 %v4477
    %v4542 = vunpack.c.l.b16 %v4478
    %v4543 = vunpack.c.l.b16 %v4479
    %v4544 = vunpack.c.l.b16 %v4480
    %v4545 = vpack.c.b16 %v4514, %v4513
    %v4546 = vpack.c.b16 %v4516, %v4515
    %v4547 = vpack.c.b16 %v4518, %v4517
    %v4548 = vpack.c.b16 %v4520, %v4519
    %v4549 = vpack.c.b16 %v4522, %v4521
    %v4550 = vpack.c.b16 %v4524, %v4523
    %v4551 = vpack.c.b16 %v4526, %v4525
    %v4552 = vpack.c.b16 %v4528, %v4527
    %v4553 = vpack.c.b16 %v4530, %v4529
    %v4554 = vpack.c.b16 %v4532, %v4531
    %v4555 = vpack.c.b16 %v4534, %v4533
    %v4556 = vpack.c.b16 %v4536, %v4535
    %v4557 = vpack.c.b16 %v4538, %v4537
    %v4558 = vpack.c.b16 %v4540, %v4539
    %v4559 = vpack.c.b16 %v4542, %v4541
    %v4560 = vpack.c.b16 %v4544, %v4543
    %4577 = vmatprep.subr.bf16.mxu0 0
    %4578 = vmatpush1.bf16.msra.mxu0 %v4552
    %4579 = vmatprep.subr.bf16.mxu0 0
    %4580 = vmatpush1.bf16.msra.mxu0 %v4551
    %4581 = vmatprep.subr.bf16.mxu0 0
    %4582 = vmatpush1.bf16.msra.mxu0 %v4550
    %4583 = vmatprep.subr.bf16.mxu0 0
    %4584 = vmatpush1.bf16.msra.mxu0 %v4549
    %4585 = vmatprep.subr.bf16.mxu0 0
    %4586 = vmatpush1.bf16.msra.mxu0 %v4548
    %4587 = vmatprep.subr.bf16.mxu0 0
    %4588 = vmatpush1.bf16.msra.mxu0 %v4547
    %4589 = vmatprep.subr.bf16.mxu0 0
    %4590 = vmatpush1.bf16.msra.mxu0 %v4546
    %4591 = vmatprep.subr.bf16.mxu0 0
    %4592 = vmatpush1.bf16.msra.mxu0 %v4545
    %4593 = vmatprep.subr.bf16.mxu0 0
    %4594 = vmatpush2.bf16.msra.mxu0 %v4560
    %4595 = vmatprep.subr.bf16.mxu0 0
    %4596 = vmatpush2.bf16.msra.mxu0 %v4559
    %4597 = vmatprep.subr.bf16.mxu0 0
    %4598 = vmatpush2.bf16.msra.mxu0 %v4558
    %4599 = vmatprep.subr.bf16.mxu0 0
    %4600 = vmatpush2.bf16.msra.mxu0 %v4557
    %4601 = vmatprep.subr.bf16.mxu0 0
    %4602 = vmatpush2.bf16.msra.mxu0 %v4556
    %4603 = vmatprep.subr.bf16.mxu0 0
    %4604 = vmatpush2.bf16.msra.mxu0 %v4555
    %4605 = vmatprep.subr.bf16.mxu0 0
    %4606 = vmatpush2.bf16.msra.mxu0 %v4554
    %4607 = vmatprep.subr.bf16.mxu0 0
    %4608 = vmatpush2.bf16.msra.mxu0 %v4553
    %4609 = vmatprep.mubr.bf16.mxu0 %v4447
    %4610 = vmatmul.mubr.bf16.gmra.mxu0 %v4446
    %v4611 = vpop.f32.mrf.mxu0
    %v4612 = vadd.f32 0.0, %v4611
    %v4613 = vpop.f32.mrf.mxu0
    %v4614 = vpop.f32.mrf.mxu0
    %v4615 = vadd.f32 0.0, %v4614
    %v4616 = vpop.f32.mrf.mxu0
    %4617 = vdwg.mxu0
    %v4618 = vadd.f32 %v4401, %v4612
    %v4619 = vadd.f32 %v4402, %v4615
    %v4620 = vsub.f32 0.0, %v4618
    %v4621 = vsub.f32 0.0, %v4619
    %v4622 = vmul.f32 %v4620, 1.442695
    %v4623 = vpow.pop %v4622
    %v4624 = vmul.f32 %v4621, 1.442695
    %v4625 = vpow.pop %v4624
    %v4626 = vadd.f32 %v4623, 1.0
    %v4627 = vadd.f32 %v4625, 1.0
    %v4628 = vrcp.pop %v4626
    %v4629 = vmul.f32 1.0, %v4628
    %v4630 = vrcp.pop %v4627
    %v4631 = vmul.f32 1.0, %v4630
    %4632 = vst.msk [vmem:[#allocation2] sm:$0xff] %vm95, %v4629
    %4633 = vst.msk [vmem:[#allocation2 + $0x8] sm:$0xff] %vm95, %v4631
    // Predicated region
    $region98: #{conv_autoencoder_forward.1} parent=1 // pred_check
      _
    $region99: #{conv_autoencoder_forward.1} parent=1 // pred_check_branch
      %4635 = sbr.rel (0) target = $region101
    $region100: #{conv_autoencoder_forward.1} parent=1 // pred_region
      %s4637 = ssub.s32 256, 256
      %4638 = vsyncadd [#allocation3], %s4637
      %s4639 = sshll.u32 [#allocation2], 4
      %s4640 = int_to_ptr.vmem [resolvable:$true] %s4639
      %4645 = dma.vmem_to_hbm [thread:$0]  %s4640, 256, %s24, [#allocation3], 128, 128, 8
    $region101: #{conv_autoencoder_forward.1} parent=1 // pred_fallthru
      _
    // Predicated region
    $region102: #{conv_autoencoder_forward.1} parent=1 // pred_check
      _
    $region103: #{conv_autoencoder_forward.1} parent=1 // pred_check_branch
      %4647 = sbr.rel (0) target = $region105
    $region104: #{conv_autoencoder_forward.1} parent=1 // pred_region
      %4648 = dma.done [#allocation3], 256
    $region105: #{conv_autoencoder_forward.1} parent=1 // pred_fallthru
      _
    %4649 = vsyncpa [#allocation3], 1

</llo_original>
